<compile_context>
chip_gen: v7x
topology: tpu7x:2x2x1
jax: 0.10.0
libtpu: 0.0.40
codegen_flags: <defaults>
</compile_context>

<pallas_src>
import functools

import jax
import jax.numpy as jnp
from jax.experimental import pallas as pl
from jax.experimental.pallas import tpu as pltpu


# ----------------------------------------------------------------------------
# Shared math helpers (plain jnp ops -> usable inside Pallas kernels and in the
# pure-JAX reference).
# ----------------------------------------------------------------------------

_LN_EPS = 1e-5
_SQRT_2_OVER_PI = 0.7978845608028654


def _layernorm(v, g, b, d_real):
    """LayerNorm over the last axis; `d_real` is the un-padded feature count.

    Works on zero-padded inputs: sums only see the real lanes, and padded gamma/beta
    are zero so padded output lanes stay exactly zero."""
    s1 = jnp.sum(v, axis=-1, keepdims=True)
    s2 = jnp.sum(v * v, axis=-1, keepdims=True)
    mu = s1 * (1.0 / d_real)
    var = s2 * (1.0 / d_real) - mu * mu
    return (v - mu) * jax.lax.rsqrt(var + _LN_EPS) * g + b


def _gelu_tanh(v):
    return 0.5 * v * (1.0 + jnp.tanh(_SQRT_2_OVER_PI * (v + 0.044715 * v * v * v)))


def _round_up(x, m):
    return ((x + m - 1) // m) * m


def _pick_tile(total, candidates):
    """Largest candidate tile that evenly divides `total` (else the full dim)."""
    for c in candidates:
        if c <= total and total % c == 0:
            return c
    return total


@functools.lru_cache(maxsize=None)
def _kernel_vmem_limit():
    """Explicit VMEM budget for the fused kernels, sized per chip."""
    limit = 48 * 1024 * 1024                       # safe fallback on every chip
    try:
        cap = int(pltpu.get_tpu_info().vmem_capacity_bytes)
        # ~54 MiB on v7x (64 MiB physical), capped at 100 MiB on v5e/v6e (128 MiB).
        limit = min(100 * 1024 * 1024, max(limit, int(cap * 0.85)))
    except Exception:
        pass
    return limit


# ----------------------------------------------------------------------------
# PatchEmbed: stride == kernel Conv2d == per-patch linear projection.
# ----------------------------------------------------------------------------

def _patch_embed_kernel(x_ref, w_ref, b_ref, o_ref):
    # x_ref: (tm, K) bf16 patches, w_ref: (K, tn) bf16, b_ref: (1, tn) f32,
    # o_ref: (tm, tn) bf16.  f32 accumulation on the MXU.
    acc = jnp.dot(x_ref[...], w_ref[...], preferred_element_type=jnp.float32)
    o_ref[...] = (acc + b_ref[...]).astype(o_ref.dtype)


def patch_embed(x, pe, patch_size):
    """x: (B, C, H, W) f32.  pe: prepared {'w': (K, D_pad) bf16, 'b': (1, D_pad) f32}.

    Returns the 128-padded (B, n_patches, D_pad) embedding in bf16 (padding is carried
    through the transformer, padded lanes are exactly zero)."""
    B, C, H, W = x.shape
    P = patch_size
    Hp, Wp = H // P, W // P
    n_patches = Hp * Wp
    K = C * P * P
    w, b = pe["w"], pe["b"]
    D_pad = w.shape[1]
    M = B * n_patches

    # Patch extraction glue in (C, kh, kw) order (matches Conv2d weight layout);
    # bf16 cast fused with the transpose; allow_input_fusion lets XLA fuse the
    # rearrangement into the Pallas input DMA.
    xp = x.reshape(B, C, Hp, P, Wp, P)
    xp = jnp.transpose(xp, (0, 2, 4, 1, 3, 5))            # (B, Hp, Wp, C, P, P)
    xp = xp.reshape(M, K).astype(jnp.bfloat16)            # batch folded into M

    tm = _pick_tile(M, (1024, 512, 256, 128, 64, 32, 16, 8))
    # Single N tile whenever the full (K, D_pad) weight fits comfortably in VMEM ->
    # weight DMA'd once, truly resident, and output stores maximally lane-wide.
    if K * D_pad * 2 <= 4 * 1024 * 1024:
        tn = D_pad
    else:
        tn = _pick_tile(D_pad, (512, 256, 128))
    w_mode = pl.Buffered(1) if tn == D_pad else None       # resident -> single buffer

    out = pl.pallas_call(
        _patch_embed_kernel,
        out_shape=jax.ShapeDtypeStruct((M, D_pad), jnp.bfloat16),
        grid=(M // tm, D_pad // tn),
        in_specs=[
            pl.BlockSpec((tm, K), lambda i, j: (i, 0)),
            pl.BlockSpec((K, tn), lambda i, j: (0, j), pipeline_mode=w_mode),
            pl.BlockSpec((1, tn), lambda i, j: (0, j), pipeline_mode=w_mode),
        ],
        out_specs=pl.BlockSpec((tm, tn), lambda i, j: (i, j)),
        compiler_params=pltpu.CompilerParams(
            dimension_semantics=("parallel", "parallel"),
            vmem_limit_bytes=32 * 1024 * 1024,
            allow_input_fusion=[True, False, False],
        ),
    )(xp, w, b)

    return out.reshape(B, n_patches, D_pad)


# ----------------------------------------------------------------------------
# TransformerBlock: fused (LN -> MHA -> residual -> LN -> FFN -> residual),
# one batch element per grid step (whole (N, D_pad) slab in VMEM).
# ----------------------------------------------------------------------------

_BLOCK_KEYS = ("ln1_g", "ln1_b", "w_in", "b_in", "w_out", "b_out",
               "ln2_g", "ln2_b", "w1", "b1", "w2", "b2")


def _transformer_block_kernel(x_ref, ln1_g_ref, ln1_b_ref,
                              w_in_ref, b_in_ref, w_out_ref, b_out_ref,
                              ln2_g_ref, ln2_b_ref,
                              w1_ref, b1_ref, w2_ref, b2_ref,
                              o_ref, *, dim, heads, hd, hd_p):
    x = x_ref[...].astype(jnp.float32)                     # (N, D_pad), f32 elementwise
    n_tok = x.shape[0]
    d_att = heads * hd_p
    scale = 1.0 / (hd ** 0.5)                              # real head dim

    # --- multi-head self-attention (head-batched) ---
    h = _layernorm(x, ln1_g_ref[...], ln1_b_ref[...], dim)
    qkv = jnp.dot(h.astype(jnp.bfloat16), w_in_ref[...],
                  preferred_element_type=jnp.float32) + b_in_ref[...]
    # (N, d_att) -> (heads, N, hd_p); padded head lanes are exactly zero.
    q3 = jnp.swapaxes((qkv[:, 0 * d_att:1 * d_att] * scale)
                      .reshape(n_tok, heads, hd_p), 0, 1)
    k3 = jnp.swapaxes(qkv[:, 1 * d_att:2 * d_att].reshape(n_tok, heads, hd_p), 0, 1)
    v3 = jnp.swapaxes(qkv[:, 2 * d_att:3 * d_att].reshape(n_tok, heads, hd_p), 0, 1)

    s = jnp.einsum("hqd,hkd->hqk", q3.astype(jnp.bfloat16), k3.astype(jnp.bfloat16),
                   preferred_element_type=jnp.float32)     # (heads, N, N)
    s = s - jnp.max(s, axis=-1, keepdims=True)
    e = jnp.exp(s)
    p = e * pl.reciprocal(jnp.sum(e, axis=-1, keepdims=True), approx=True)
    o3 = jnp.einsum("hqk,hkd->hqd", p.astype(jnp.bfloat16), v3.astype(jnp.bfloat16),
                    preferred_element_type=jnp.float32)    # (heads, N, hd_p)
    attn = jnp.swapaxes(o3, 0, 1).reshape(n_tok, d_att)

    # concat-over-heads folded into a single K = d_att output projection.
    x = x + (jnp.dot(attn.astype(jnp.bfloat16), w_out_ref[...],
                     preferred_element_type=jnp.float32) + b_out_ref[...])

    # --- FFN ---
    h2 = _layernorm(x, ln2_g_ref[...], ln2_b_ref[...], dim)
    f = jnp.dot(h2.astype(jnp.bfloat16), w1_ref[...],
                preferred_element_type=jnp.float32) + b1_ref[...]
    f = _gelu_tanh(f)
    f = jnp.dot(f.astype(jnp.bfloat16), w2_ref[...],
                preferred_element_type=jnp.float32) + b2_ref[...]
    o_ref[...] = (x + f).astype(o_ref.dtype)


def transformer_block(x, p, dims):
    B, N, D_pad = x.shape
    kernel = functools.partial(_transformer_block_kernel, dim=dims["dim"],
                               heads=dims["heads"], hd=dims["hd"], hd_p=dims["hd_p"])
    weight_specs = [pl.BlockSpec(p[k].shape, lambda b: (0, 0),
                                 pipeline_mode=pl.Buffered(1))   # resident weights
                    for k in _BLOCK_KEYS]
    return pl.pallas_call(
        kernel,
        out_shape=jax.ShapeDtypeStruct((B, N, D_pad), jnp.bfloat16),
        grid=(B,),
        in_specs=[pl.BlockSpec((None, N, D_pad), lambda b: (b, 0, 0))] + weight_specs,
        out_specs=pl.BlockSpec((None, N, D_pad), lambda b: (b, 0, 0)),
        compiler_params=pltpu.CompilerParams(
            dimension_semantics=("parallel",),
            vmem_limit_bytes=_kernel_vmem_limit()),
    )(x, *(p[k] for k in _BLOCK_KEYS))


# ----------------------------------------------------------------------------
# Final LayerNorm + to_out Linear (fused).
# ----------------------------------------------------------------------------

def _final_head_kernel(x_ref, g_ref, b_ref, w_ref, bias_ref, o_ref, *, dim):
    h = _layernorm(x_ref[...].astype(jnp.float32), g_ref[...], b_ref[...], dim)
    o_ref[...] = (jnp.dot(h.astype(jnp.bfloat16), w_ref[...],
                          preferred_element_type=jnp.float32)
                  + bias_ref[...]).astype(o_ref.dtype)


def final_head(x, p, dims):
    B, N, D_pad = x.shape
    out_pad = p["w"].shape[1]
    kernel = functools.partial(_final_head_kernel, dim=dims["dim"])
    wspecs = [pl.BlockSpec(p[k].shape, lambda b: (0, 0), pipeline_mode=pl.Buffered(1))
              for k in ("ln_g", "ln_b", "w", "b")]
    return pl.pallas_call(
        kernel,
        out_shape=jax.ShapeDtypeStruct((B, N, out_pad), jnp.float32),
        grid=(B,),
        in_specs=[pl.BlockSpec((None, N, D_pad), lambda b: (b, 0, 0))] + wspecs,
        out_specs=pl.BlockSpec((None, N, out_pad), lambda b: (b, 0, 0)),
        compiler_params=pltpu.CompilerParams(
            dimension_semantics=("parallel",),
            vmem_limit_bytes=_kernel_vmem_limit()),
    )(x, p["ln_g"], p["ln_b"], p["w"], p["b"])


# ----------------------------------------------------------------------------
# Glue (plain JAX) and full forward.
# ----------------------------------------------------------------------------

def unpatchify(x, patch, channels, img):
    B, N, _ = x.shape
    h = w = int(round(N ** 0.5))
    x = x.reshape(B, h, w, patch, patch, channels)
    x = jnp.transpose(x, (0, 5, 1, 3, 2, 4))               # 'nhwpqc->nchpwq'
    return x.reshape(B, channels, img, img)


def make_forward(*, img, patch, channels, dims):
    out_dim = dims["out_dim"]

    def forward(params, x):
        t = patch_embed(x, params["patch"], patch)          # (B, N, D_pad) bf16
        for blk in params["blocks"]:
            t = transformer_block(t, blk, dims)             # bf16 inter-layer activations
        y = final_head(t, params["final"], dims)            # (B, N, out_pad) f32
        y = y[..., :out_dim]                                 # truncate only here
        return unpatchify(y, patch, channels, img)

    return jax.jit(forward)


# ----------------------------------------------------------------------------
# Parameters: raw (PyTorch layouts) and one-time prepared kernel layouts.
# ----------------------------------------------------------------------------

def init_raw_params(key, *, patch, channels, dim, depth):
    out_dim = patch * patch * channels
    ks = jax.random.split(key, depth + 6)

    def nrm(k, shape, s=0.02):
        return jax.random.normal(k, shape, jnp.float32) * s

    raw = {
        "conv_w": nrm(ks[0], (dim, channels, patch, patch)),
        "conv_b": nrm(ks[1], (dim,)),
        "blocks": [],
        "ln_g": 1.0 + nrm(ks[2], (dim,), 0.1),
        "ln_b": nrm(ks[3], (dim,)),
        "out_w": nrm(ks[4], (out_dim, dim)),
        "out_b": nrm(ks[5], (out_dim,)),
    }
    for i in range(depth):
        bk = jax.random.split(ks[6 + i], 12)
        raw["blocks"].append({
            "ln1_g": 1.0 + nrm(bk[0], (dim,), 0.1), "ln1_b": nrm(bk[1], (dim,)),
            "w_in": nrm(bk[2], (3 * dim, dim)), "b_in": nrm(bk[3], (3 * dim,)),
            "w_out": nrm(bk[4], (dim, dim)), "b_out": nrm(bk[5], (dim,)),
            "ln2_g": 1.0 + nrm(bk[6], (dim,), 0.1), "ln2_b": nrm(bk[7], (dim,)),
            "w1": nrm(bk[8], (4 * dim, dim)), "b1": nrm(bk[9], (4 * dim,)),
            "w2": nrm(bk[10], (dim, 4 * dim)), "b2": nrm(bk[11], (dim,)),
        })
    return raw


def prepare_params(raw, *, patch, channels, heads, lane=128):
    """One-time layout conversion: Linear weights pre-transposed to (in, out), cast to
    bf16, and zero-padded so the 128-padded embed dim (and per-head padded head dim)
    is carried through every kernel.  LN params / biases stay f32, padded with zeros."""
    dim = raw["conv_w"].shape[0]
    K = channels * patch * patch
    d_pad = _round_up(dim, lane)
    hd = dim // heads
    hd_p = -(-d_pad // heads)                               # per-head padded width
    d_att = hd_p * heads
    h_pad = _round_up(4 * dim, lane)
    out_dim = raw["out_w"].shape[0]
    out_pad = _round_up(out_dim, lane)

    def padw(w, rows, cols):                                # bf16 matmul weight
        r, c = w.shape
        return jnp.pad(w, ((0, rows - r), (0, cols - c))).astype(jnp.bfloat16)

    def padv(v, n):                                         # f32 bias / LN row
        return jnp.pad(v, (0, n - v.shape[0])).reshape(1, n).astype(jnp.float32)

    def pad_head_cols(w_t):                                 # (dim, heads*hd) -> (dim, d_att)
        w3 = jnp.pad(w_t.reshape(dim, heads, hd), ((0, 0), (0, 0), (0, hd_p - hd)))
        return w3.reshape(dim, d_att)

    def pad_head_vec(v):                                    # (heads*hd,) -> (d_att,)
        v2 = jnp.pad(v.reshape(heads, hd), ((0, 0), (0, hd_p - hd)))
        return v2.reshape(d_att)

    def pad_head_rows(w_t):                                 # (heads*hd, dim) -> (d_att, dim)
        w3 = jnp.pad(w_t.reshape(heads, hd, dim), ((0, 0), (0, hd_p - hd), (0, 0)))
        return w3.reshape(d_att, dim)

    w_pe = raw["conv_w"].reshape(dim, K).T                  # conv as per-patch matmul
    params = {
        "patch": {"w": padw(w_pe, K, d_pad), "b": padv(raw["conv_b"], d_pad)},
        "blocks": [],
        "final": None,
    }

    for blk in raw["blocks"]:
        w_in_t = blk["w_in"].T                              # (dim, 3*dim)
        wq, wk, wv = w_in_t[:, :dim], w_in_t[:, dim:2 * dim], w_in_t[:, 2 * dim:]
        w_in = jnp.concatenate(
            [padw(pad_head_cols(w), d_pad, d_att) for w in (wq, wk, wv)], axis=1)
        bq, bk_, bv = blk["b_in"][:dim], blk["b_in"][dim:2 * dim], blk["b_in"][2 * dim:]
        b_in = jnp.concatenate([pad_head_vec(b) for b in (bq, bk_, bv)]
                               ).reshape(1, 3 * d_att).astype(jnp.float32)
        params["blocks"].append({
            "ln1_g": padv(blk["ln1_g"], d_pad), "ln1_b": padv(blk["ln1_b"], d_pad),
            "w_in": w_in, "b_in": b_in,
            "w_out": padw(pad_head_rows(blk["w_out"].T), d_att, d_pad),
            "b_out": padv(blk["b_out"], d_pad),
            "ln2_g": padv(blk["ln2_g"], d_pad), "ln2_b": padv(blk["ln2_b"], d_pad),
            "w1": padw(blk["w1"].T, d_pad, h_pad), "b1": padv(blk["b1"], h_pad),
            "w2": padw(blk["w2"].T, h_pad, d_pad), "b2": padv(blk["b2"], d_pad),
        })

    params["final"] = {
        "ln_g": padv(raw["ln_g"], d_pad), "ln_b": padv(raw["ln_b"], d_pad),
        "w": padw(raw["out_w"].T, d_pad, out_pad), "b": padv(raw["out_b"], out_pad),
    }
    dims = dict(dim=dim, d_pad=d_pad, heads=heads, hd=hd, hd_p=hd_p,
                d_att=d_att, out_dim=out_dim, out_pad=out_pad)
    return params, dims


# ----------------------------------------------------------------------------
# Pure-JAX reference (no Pallas) mirroring the PyTorch module.
# ----------------------------------------------------------------------------

def reference_forward(raw, x, *, img, patch, channels, heads):
    P, C = patch, channels
    dim = raw["conv_w"].shape[0]
    B = x.shape[0]

    y = jax.lax.conv_general_dilated(
        x, raw["conv_w"], window_strides=(P, P), padding="VALID",
        dimension_numbers=("NCHW", "OIHW", "NCHW"))
    y = y + raw["conv_b"].reshape(1, dim, 1, 1)
    t = y.reshape(B, dim, -1).transpose(0, 2, 1)            # (B, N, D)
    N = t.shape[1]
    hd = dim // heads

    for blk in raw["blocks"]:
        h = _layernorm(t, blk["ln1_g"], blk["ln1_b"], dim)
        qkv = h @ blk["w_in"].T + blk["b_in"]
        q, k, v = jnp.split(qkv, 3, axis=-1)
        q = q.reshape(B, N, heads, hd).transpose(0, 2, 1, 3)
        k = k.reshape(B, N, heads, hd).transpose(0, 2, 1, 3)
        v = v.reshape(B, N, heads, hd).transpose(0, 2, 1, 3)
        s = jnp.einsum("bhqd,bhkd->bhqk", q, k) / (hd ** 0.5)
        p = jax.nn.softmax(s, axis=-1)
        o = jnp.einsum("bhqk,bhkd->bhqd", p, v)
        o = o.transpose(0, 2, 1, 3).reshape(B, N, dim)
        t = t + o @ blk["w_out"].T + blk["b_out"]
        h2 = _layernorm(t, blk["ln2_g"], blk["ln2_b"], dim)
        f = _gelu_tanh(h2 @ blk["w1"].T + blk["b1"])
        t = t + f @ blk["w2"].T + blk["b2"]

    t = _layernorm(t, raw["ln_g"], raw["ln_b"], dim)
    t = t @ raw["out_w"].T + raw["out_b"]
    return unpatchify(t, P, C, img)


if __name__ == "__main__":
    IMG, P, C, DIM, DEPTH, HEADS, B = 16, 4, 4, 32, 2, 4, 2

    key = jax.random.PRNGKey(0)
    k_par, k_x = jax.random.split(key)
    raw = init_raw_params(k_par, patch=P, channels=C, dim=DIM, depth=DEPTH)
    params, dims = prepare_params(raw, patch=P, channels=C, heads=HEADS)
    x = jax.random.normal(k_x, (B, C, IMG, IMG), jnp.float32)

    fwd = make_forward(img=IMG, patch=P, channels=C, dims=dims)
    out = jax.block_until_ready(fwd(params, x))
    assert out.shape == (B, C, IMG, IMG), out.shape

    # -- check 1: PatchEmbed kernel vs lax conv reference (bf16-level tolerance,
    #    intentional: patches/weights are bf16 MXU operands) --
    pe_out = jax.block_until_ready(
        jax.jit(lambda xx: patch_embed(xx, params["patch"], P))(x))
    conv = jax.lax.conv_general_dilated(
        x, raw["conv_w"], window_strides=(P, P), padding="VALID",
        dimension_numbers=("NCHW", "OIHW", "NCHW"))
    pe_ref = (conv + raw["conv_b"].reshape(1, DIM, 1, 1)).reshape(B, DIM, -1).transpose(0, 2, 1)
    pe_err = float(jnp.max(jnp.abs(pe_out[..., :DIM].astype(jnp.float32) - pe_ref)))
    assert pe_err < 2e-2, f"patch_embed mismatch: {pe_err}"

    # -- check 2: end-to-end vs pure-JAX f32 reference forward --
    ref = jax.block_until_ready(
        reference_forward(raw, x, img=IMG, patch=P, channels=C, heads=HEADS))
    err = float(jnp.max(jnp.abs(out - ref)))
    assert err < 3e-2, f"end-to-end mismatch: {err}"

    print("KERNEL_OK")
</pallas_src>

<mosaic_0001>
module attributes {stable_mosaic.version = 11 : i64} {
  func.func @_patch_embed_kernel(%arg0: i32, %arg1: i32, %arg2: memref<32x64xbf16, #tpu.memory_space<vmem>>, %arg3: memref<64x128xbf16, #tpu.memory_space<vmem>>, %arg4: memref<1x128xf32, #tpu.memory_space<vmem>>, %arg5: memref<32x128xbf16, #tpu.memory_space<vmem>>) attributes {dimension_semantics = [#tpu.dimension_semantics<parallel>, #tpu.dimension_semantics<parallel>], iteration_bounds = array<i64: 1, 1>, scalar_prefetch = 0 : i64, scratch_operands = 0 : i64, tpu.core_type = #tpu.core_type<tc>, window_params = [{transform_indices = @transform_0, window_bounds = array<i64: 32, 64>}, {pipeline_mode = #tpu.pipeline_mode<synchronous>, transform_indices = @transform_1, window_bounds = array<i64: 64, 128>}, {pipeline_mode = #tpu.pipeline_mode<synchronous>, transform_indices = @transform_2, window_bounds = array<i64: 1, 128>}, {transform_indices = @transform_3, window_bounds = array<i64: 32, 128>}]} {
    %c0 = arith.constant 0 : index
    %c0_0 = arith.constant 0 : index
    %0 = vector.load %arg2[%c0, %c0_0] : memref<32x64xbf16, #tpu.memory_space<vmem>>, vector<32x64xbf16>
    %c0_1 = arith.constant 0 : index
    %c0_2 = arith.constant 0 : index
    %1 = vector.load %arg3[%c0_1, %c0_2] : memref<64x128xbf16, #tpu.memory_space<vmem>>, vector<64x128xbf16>
    %cst = arith.constant dense<0.000000e+00> : vector<32x128xf32>
    %2 = tpu.matmul %0, %1, %cst {dimension_numbers = #tpu.dot_dimension_numbers<[1], [0], [0], [1], [0, 0, 1, 1], [], []>} : vector<32x64xbf16>, vector<64x128xbf16>, vector<32x128xf32> -> vector<32x128xf32>
    %c0_3 = arith.constant 0 : index
    %c0_4 = arith.constant 0 : index
    %3 = vector.load %arg4[%c0_3, %c0_4] : memref<1x128xf32, #tpu.memory_space<vmem>>, vector<1x128xf32>
    %4 = vector.broadcast %3 : vector<1x128xf32> to vector<32x128xf32>
    %5 = arith.addf %2, %4 : vector<32x128xf32>
    %6 = arith.truncf %5 : vector<32x128xf32> to vector<32x128xbf16>
    %c0_5 = arith.constant 0 : index
    %c0_6 = arith.constant 0 : index
    %7 = vector.load %arg5[%c0_5, %c0_6] : memref<32x128xbf16, #tpu.memory_space<vmem>>, vector<32x128xbf16>
    tpu.vector_store %arg5[%c0_5, %c0_6], %6 {strides = array<i32>} : memref<32x128xbf16, #tpu.memory_space<vmem>>, vector<32x128xbf16>,
    return
  }
  func.func @transform_0(%arg0: i32, %arg1: i32) -> (i32, i32) {
    %c0_i32 = arith.constant 0 : i32
    %c0_i32_0 = arith.constant 0 : i32
    return %arg0, %c0_i32 : i32, i32
  }
  func.func @transform_1(%arg0: i32, %arg1: i32) -> (i32, i32) {
    %c0_i32 = arith.constant 0 : i32
    %c0_i32_0 = arith.constant 0 : i32
    return %c0_i32, %arg1 : i32, i32
  }
  func.func @transform_2(%arg0: i32, %arg1: i32) -> (i32, i32) {
    %c0_i32 = arith.constant 0 : i32
    %c0_i32_0 = arith.constant 0 : i32
    return %c0_i32, %arg1 : i32, i32
  }
  func.func @transform_3(%arg0: i32, %arg1: i32) -> (i32, i32) {
    %c0_i32 = arith.constant 0 : i32
    return %arg0, %arg1 : i32, i32
  }
}

module attributes {stable_mosaic.version = 11 : i64} {
  func.func @_transformer_block_kernel(%arg0: i32, %arg1: memref<1x16x128xbf16, #tpu.memory_space<vmem>>, %arg2: memref<1x128xf32, #tpu.memory_space<vmem>>, %arg3: memref<1x128xf32, #tpu.memory_space<vmem>>, %arg4: memref<128x384xbf16, #tpu.memory_space<vmem>>, %arg5: memref<1x384xf32, #tpu.memory_space<vmem>>, %arg6: memref<128x128xbf16, #tpu.memory_space<vmem>>, %arg7: memref<1x128xf32, #tpu.memory_space<vmem>>, %arg8: memref<1x128xf32, #tpu.memory_space<vmem>>, %arg9: memref<1x128xf32, #tpu.memory_space<vmem>>, %arg10: memref<128x128xbf16, #tpu.memory_space<vmem>>, %arg11: memref<1x128xf32, #tpu.memory_space<vmem>>, %arg12: memref<128x128xbf16, #tpu.memory_space<vmem>>, %arg13: memref<1x128xf32, #tpu.memory_space<vmem>>, %arg14: memref<1x16x128xbf16, #tpu.memory_space<vmem>>) attributes {dimension_semantics = [#tpu.dimension_semantics<parallel>], iteration_bounds = array<i64: 2>, scalar_prefetch = 0 : i64, scratch_operands = 0 : i64, tpu.core_type = #tpu.core_type<tc>, window_params = [{transform_indices = @transform_0, window_bounds = array<i64: 1, 16, 128>}, {pipeline_mode = #tpu.pipeline_mode<synchronous>, transform_indices = @transform_1, window_bounds = array<i64: 1, 128>}, {pipeline_mode = #tpu.pipeline_mode<synchronous>, transform_indices = @transform_2, window_bounds = array<i64: 1, 128>}, {pipeline_mode = #tpu.pipeline_mode<synchronous>, transform_indices = @transform_3, window_bounds = array<i64: 128, 384>}, {pipeline_mode = #tpu.pipeline_mode<synchronous>, transform_indices = @transform_4, window_bounds = array<i64: 1, 384>}, {pipeline_mode = #tpu.pipeline_mode<synchronous>, transform_indices = @transform_5, window_bounds = array<i64: 128, 128>}, {pipeline_mode = #tpu.pipeline_mode<synchronous>, transform_indices = @transform_6, window_bounds = array<i64: 1, 128>}, {pipeline_mode = #tpu.pipeline_mode<synchronous>, transform_indices = @transform_7, window_bounds = array<i64: 1, 128>}, {pipeline_mode = #tpu.pipeline_mode<synchronous>, transform_indices = @transform_8, window_bounds = array<i64: 1, 128>}, {pipeline_mode = #tpu.pipeline_mode<synchronous>, transform_indices = @transform_9, window_bounds = array<i64: 128, 128>}, {pipeline_mode = #tpu.pipeline_mode<synchronous>, transform_indices = @transform_10, window_bounds = array<i64: 1, 128>}, {pipeline_mode = #tpu.pipeline_mode<synchronous>, transform_indices = @transform_11, window_bounds = array<i64: 128, 128>}, {pipeline_mode = #tpu.pipeline_mode<synchronous>, transform_indices = @transform_12, window_bounds = array<i64: 1, 128>}, {transform_indices = @transform_13, window_bounds = array<i64: 1, 16, 128>}]} {
    %c0 = arith.constant 0 : index
    %c0_0 = arith.constant 0 : index
    %c0_1 = arith.constant 0 : index
    %0 = vector.load %arg1[%c0, %c0_0, %c0_1] : memref<1x16x128xbf16, #tpu.memory_space<vmem>>, vector<1x16x128xbf16>
    %1 = vector.shape_cast %0 : vector<1x16x128xbf16> to vector<16x128xbf16>
    %2 = arith.extf %1 : vector<16x128xbf16> to vector<16x128xf32>
    %c0_2 = arith.constant 0 : index
    %c0_3 = arith.constant 0 : index
    %3 = vector.load %arg2[%c0_2, %c0_3] : memref<1x128xf32, #tpu.memory_space<vmem>>, vector<1x128xf32>
    %c0_4 = arith.constant 0 : index
    %c0_5 = arith.constant 0 : index
    %4 = vector.load %arg3[%c0_4, %c0_5] : memref<1x128xf32, #tpu.memory_space<vmem>>, vector<1x128xf32>
    %cst = arith.constant dense<0.000000e+00> : vector<16xf32>
    %5 = vector.multi_reduction <add>, %2, %cst [1] : vector<16x128xf32> to vector<16xf32>
    %6 = vector.shape_cast %5 : vector<16xf32> to vector<16x1xf32>
    %7 = arith.mulf %2, %2 : vector<16x128xf32>
    %cst_6 = arith.constant dense<0.000000e+00> : vector<16xf32>
    %8 = vector.multi_reduction <add>, %7, %cst_6 [1] : vector<16x128xf32> to vector<16xf32>
    %9 = vector.shape_cast %8 : vector<16xf32> to vector<16x1xf32>
    %cst_7 = arith.constant 3.125000e-02 : f32
    %10 = vector.broadcast %cst_7 : f32 to vector<16x1xf32>
    %11 = arith.mulf %6, %10 : vector<16x1xf32>
    %cst_8 = arith.constant 3.125000e-02 : f32
    %12 = vector.broadcast %cst_8 : f32 to vector<16x1xf32>
    %13 = arith.mulf %9, %12 : vector<16x1xf32>
    %14 = arith.mulf %11, %11 : vector<16x1xf32>
    %15 = arith.subf %13, %14 : vector<16x1xf32>
    %16 = vector.broadcast %11 : vector<16x1xf32> to vector<16x128xf32>
    %17 = arith.subf %2, %16 : vector<16x128xf32>
    %cst_9 = arith.constant 9.99999974E-6 : f32
    %18 = vector.broadcast %cst_9 : f32 to vector<16x1xf32>
    %19 = arith.addf %15, %18 : vector<16x1xf32>
    %20 = math.rsqrt %19 : vector<16x1xf32>
    %21 = vector.broadcast %20 : vector<16x1xf32> to vector<16x128xf32>
    %22 = arith.mulf %17, %21 : vector<16x128xf32>
    %23 = vector.broadcast %3 : vector<1x128xf32> to vector<16x128xf32>
    %24 = arith.mulf %22, %23 : vector<16x128xf32>
    %25 = vector.broadcast %4 : vector<1x128xf32> to vector<16x128xf32>
    %26 = arith.addf %24, %25 : vector<16x128xf32>
    %27 = arith.truncf %26 : vector<16x128xf32> to vector<16x128xbf16>
    %c0_10 = arith.constant 0 : index
    %c0_11 = arith.constant 0 : index
    %28 = vector.load %arg4[%c0_10, %c0_11] : memref<128x384xbf16, #tpu.memory_space<vmem>>, vector<128x384xbf16>
    %cst_12 = arith.constant dense<0.000000e+00> : vector<16x384xf32>
    %29 = tpu.matmul %27, %28, %cst_12 {dimension_numbers = #tpu.dot_dimension_numbers<[1], [0], [0], [1], [0, 0, 1, 1], [], []>} : vector<16x128xbf16>, vector<128x384xbf16>, vector<16x384xf32> -> vector<16x384xf32>
    %c0_13 = arith.constant 0 : index
    %c0_14 = arith.constant 0 : index
    %30 = vector.load %arg5[%c0_13, %c0_14] : memref<1x384xf32, #tpu.memory_space<vmem>>, vector<1x384xf32>
    %31 = vector.broadcast %30 : vector<1x384xf32> to vector<16x384xf32>
    %32 = arith.addf %29, %31 : vector<16x384xf32>
    %33 = vector.extract_strided_slice %32 {offsets = [0, 0], sizes = [16, 128], strides = [1, 1]} : vector<16x384xf32> to vector<16x128xf32>
    %cst_15 = arith.constant 0.353553385 : f32
    %34 = vector.broadcast %cst_15 : f32 to vector<16x128xf32>
    %35 = arith.mulf %33, %34 : vector<16x128xf32>
    %36 = vector.shape_cast %35 : vector<16x128xf32> to vector<16x4x32xf32>
    %37 = tpu.transpose %36, [1, 0, 2] : vector<16x4x32xf32> -> vector<4x16x32xf32>
    %38 = vector.extract_strided_slice %32 {offsets = [0, 128], sizes = [16, 128], strides = [1, 1]} : vector<16x384xf32> to vector<16x128xf32>
    %39 = vector.shape_cast %38 : vector<16x128xf32> to vector<16x4x32xf32>
    %40 = tpu.transpose %39, [1, 0, 2] : vector<16x4x32xf32> -> vector<4x16x32xf32>
    %41 = vector.extract_strided_slice %32 {offsets = [0, 256], sizes = [16, 128], strides = [1, 1]} : vector<16x384xf32> to vector<16x128xf32>
    %42 = vector.shape_cast %41 : vector<16x128xf32> to vector<16x4x32xf32>
    %43 = tpu.transpose %42, [1, 0, 2] : vector<16x4x32xf32> -> vector<4x16x32xf32>
    %44 = arith.truncf %37 : vector<4x16x32xf32> to vector<4x16x32xbf16>
    %45 = arith.truncf %40 : vector<4x16x32xf32> to vector<4x16x32xbf16>
    "tpu.trace_start"() <{level = 10 : i32, message = "hqd,hkd->hqk"}> : () -> ()
    %cst_16 = arith.constant dense<0.000000e+00> : vector<4x16x16xf32>
    %46 = tpu.matmul %44, %45, %cst_16 {dimension_numbers = #tpu.dot_dimension_numbers<[2], [2], [1], [1], [0, 0, 0, 1, 1, 1], [0], [0]>} : vector<4x16x32xbf16>, vector<4x16x32xbf16>, vector<4x16x16xf32> -> vector<4x16x16xf32>
    "tpu.trace_stop"() : () -> ()
    %cst_17 = arith.constant dense<0xFF800000> : vector<4x16xf32>
    %47 = vector.multi_reduction <maximumf>, %46, %cst_17 [2] : vector<4x16x16xf32> to vector<4x16xf32>
    %48 = vector.shape_cast %47 : vector<4x16xf32> to vector<4x16x1xf32>
    %49 = vector.broadcast %48 : vector<4x16x1xf32> to vector<4x16x16xf32>
    %50 = arith.subf %46, %49 : vector<4x16x16xf32>
    %51 = math.exp %50 : vector<4x16x16xf32>
    %cst_18 = arith.constant dense<0.000000e+00> : vector<4x16xf32>
    %52 = vector.multi_reduction <add>, %51, %cst_18 [2] : vector<4x16x16xf32> to vector<4x16xf32>
    %53 = vector.shape_cast %52 : vector<4x16xf32> to vector<4x16x1xf32>
    %54 = tpu.reciprocal %53 {approx = true} : vector<4x16x1xf32> -> vector<4x16x1xf32>
    %55 = vector.broadcast %54 : vector<4x16x1xf32> to vector<4x16x16xf32>
    %56 = arith.mulf %51, %55 : vector<4x16x16xf32>
    %57 = arith.truncf %56 : vector<4x16x16xf32> to vector<4x16x16xbf16>
    %58 = arith.truncf %43 : vector<4x16x32xf32> to vector<4x16x32xbf16>
    "tpu.trace_start"() <{level = 10 : i32, message = "hqk,hkd->hqd"}> : () -> ()
    %cst_19 = arith.constant dense<0.000000e+00> : vector<4x16x32xf32>
    %59 = tpu.matmul %57, %58, %cst_19 {dimension_numbers = #tpu.dot_dimension_numbers<[2], [1], [1], [2], [0, 0, 0, 1, 1, 2], [0], [0]>} : vector<4x16x16xbf16>, vector<4x16x32xbf16>, vector<4x16x32xf32> -> vector<4x16x32xf32>
    "tpu.trace_stop"() : () -> ()
    %60 = tpu.transpose %59, [1, 0, 2] : vector<4x16x32xf32> -> vector<16x4x32xf32>
    %61 = vector.shape_cast %60 : vector<16x4x32xf32> to vector<16x128xf32>
    %62 = arith.truncf %61 : vector<16x128xf32> to vector<16x128xbf16>
    %c0_20 = arith.constant 0 : index
    %c0_21 = arith.constant 0 : index
    %63 = vector.load %arg6[%c0_20, %c0_21] : memref<128x128xbf16, #tpu.memory_space<vmem>>, vector<128x128xbf16>
    %cst_22 = arith.constant dense<0.000000e+00> : vector<16x128xf32>
    %64 = tpu.matmul %62, %63, %cst_22 {dimension_numbers = #tpu.dot_dimension_numbers<[1], [0], [0], [1], [0, 0, 1, 1], [], []>} : vector<16x128xbf16>, vector<128x128xbf16>, vector<16x128xf32> -> vector<16x128xf32>
    %c0_23 = arith.constant 0 : index
    %c0_24 = arith.constant 0 : index
    %65 = vector.load %arg7[%c0_23, %c0_24] : memref<1x128xf32, #tpu.memory_space<vmem>>, vector<1x128xf32>
    %66 = vector.broadcast %65 : vector<1x128xf32> to vector<16x128xf32>
    %67 = arith.addf %64, %66 : vector<16x128xf32>
    %68 = arith.addf %2, %67 : vector<16x128xf32>
    %c0_25 = arith.constant 0 : index
    %c0_26 = arith.constant 0 : index
    %69 = vector.load %arg8[%c0_25, %c0_26] : memref<1x128xf32, #tpu.memory_space<vmem>>, vector<1x128xf32>
    %c0_27 = arith.constant 0 : index
    %c0_28 = arith.constant 0 : index
    %70 = vector.load %arg9[%c0_27, %c0_28] : memref<1x128xf32, #tpu.memory_space<vmem>>, vector<1x128xf32>
    %cst_29 = arith.constant dense<0.000000e+00> : vector<16xf32>
    %71 = vector.multi_reduction <add>, %68, %cst_29 [1] : vector<16x128xf32> to vector<16xf32>
    %72 = vector.shape_cast %71 : vector<16xf32> to vector<16x1xf32>
    %73 = arith.mulf %68, %68 : vector<16x128xf32>
    %cst_30 = arith.constant dense<0.000000e+00> : vector<16xf32>
    %74 = vector.multi_reduction <add>, %73, %cst_30 [1] : vector<16x128xf32> to vector<16xf32>
    %75 = vector.shape_cast %74 : vector<16xf32> to vector<16x1xf32>
    %cst_31 = arith.constant 3.125000e-02 : f32
    %76 = vector.broadcast %cst_31 : f32 to vector<16x1xf32>
    %77 = arith.mulf %72, %76 : vector<16x1xf32>
    %cst_32 = arith.constant 3.125000e-02 : f32
    %78 = vector.broadcast %cst_32 : f32 to vector<16x1xf32>
    %79 = arith.mulf %75, %78 : vector<16x1xf32>
    %80 = arith.mulf %77, %77 : vector<16x1xf32>
    %81 = arith.subf %79, %80 : vector<16x1xf32>
    %82 = vector.broadcast %77 : vector<16x1xf32> to vector<16x128xf32>
    %83 = arith.subf %68, %82 : vector<16x128xf32>
    %cst_33 = arith.constant 9.99999974E-6 : f32
    %84 = vector.broadcast %cst_33 : f32 to vector<16x1xf32>
    %85 = arith.addf %81, %84 : vector<16x1xf32>
    %86 = math.rsqrt %85 : vector<16x1xf32>
    %87 = vector.broadcast %86 : vector<16x1xf32> to vector<16x128xf32>
    %88 = arith.mulf %83, %87 : vector<16x128xf32>
    %89 = vector.broadcast %69 : vector<1x128xf32> to vector<16x128xf32>
    %90 = arith.mulf %88, %89 : vector<16x128xf32>
    %91 = vector.broadcast %70 : vector<1x128xf32> to vector<16x128xf32>
    %92 = arith.addf %90, %91 : vector<16x128xf32>
    %93 = arith.truncf %92 : vector<16x128xf32> to vector<16x128xbf16>
    %c0_34 = arith.constant 0 : index
    %c0_35 = arith.constant 0 : index
    %94 = vector.load %arg10[%c0_34, %c0_35] : memref<128x128xbf16, #tpu.memory_space<vmem>>, vector<128x128xbf16>
    %cst_36 = arith.constant dense<0.000000e+00> : vector<16x128xf32>
    %95 = tpu.matmul %93, %94, %cst_36 {dimension_numbers = #tpu.dot_dimension_numbers<[1], [0], [0], [1], [0, 0, 1, 1], [], []>} : vector<16x128xbf16>, vector<128x128xbf16>, vector<16x128xf32> -> vector<16x128xf32>
    %c0_37 = arith.constant 0 : index
    %c0_38 = arith.constant 0 : index
    %96 = vector.load %arg11[%c0_37, %c0_38] : memref<1x128xf32, #tpu.memory_space<vmem>>, vector<1x128xf32>
    %97 = vector.broadcast %96 : vector<1x128xf32> to vector<16x128xf32>
    %98 = arith.addf %95, %97 : vector<16x128xf32>
    %cst_39 = arith.constant 5.000000e-01 : f32
    %99 = vector.broadcast %cst_39 : f32 to vector<16x128xf32>
    %100 = arith.mulf %99, %98 : vector<16x128xf32>
    %cst_40 = arith.constant 4.471500e-02 : f32
    %101 = vector.broadcast %cst_40 : f32 to vector<16x128xf32>
    %102 = arith.mulf %101, %98 : vector<16x128xf32>
    %103 = arith.mulf %102, %98 : vector<16x128xf32>
    %104 = arith.mulf %103, %98 : vector<16x128xf32>
    %105 = arith.addf %98, %104 : vector<16x128xf32>
    %cst_41 = arith.constant 0.797884583 : f32
    %106 = vector.broadcast %cst_41 : f32 to vector<16x128xf32>
    %107 = arith.mulf %106, %105 : vector<16x128xf32>
    %108 = math.tanh %107 : vector<16x128xf32>
    %cst_42 = arith.constant 1.000000e+00 : f32
    %109 = vector.broadcast %cst_42 : f32 to vector<16x128xf32>
    %110 = arith.addf %109, %108 : vector<16x128xf32>
    %111 = arith.mulf %100, %110 : vector<16x128xf32>
    %112 = arith.truncf %111 : vector<16x128xf32> to vector<16x128xbf16>
    %c0_43 = arith.constant 0 : index
    %c0_44 = arith.constant 0 : index
    %113 = vector.load %arg12[%c0_43, %c0_44] : memref<128x128xbf16, #tpu.memory_space<vmem>>, vector<128x128xbf16>
    %cst_45 = arith.constant dense<0.000000e+00> : vector<16x128xf32>
    %114 = tpu.matmul %112, %113, %cst_45 {dimension_numbers = #tpu.dot_dimension_numbers<[1], [0], [0], [1], [0, 0, 1, 1], [], []>} : vector<16x128xbf16>, vector<128x128xbf16>, vector<16x128xf32> -> vector<16x128xf32>
    %c0_46 = arith.constant 0 : index
    %c0_47 = arith.constant 0 : index
    %115 = vector.load %arg13[%c0_46, %c0_47] : memref<1x128xf32, #tpu.memory_space<vmem>>, vector<1x128xf32>
    %116 = vector.broadcast %115 : vector<1x128xf32> to vector<16x128xf32>
    %117 = arith.addf %114, %116 : vector<16x128xf32>
    %118 = arith.addf %68, %117 : vector<16x128xf32>
    %119 = arith.truncf %118 : vector<16x128xf32> to vector<16x128xbf16>
    %c0_48 = arith.constant 0 : index
    %c0_49 = arith.constant 0 : index
    %c0_50 = arith.constant 0 : index
    %120 = vector.load %arg14[%c0_48, %c0_49, %c0_50] : memref<1x16x128xbf16, #tpu.memory_space<vmem>>, vector<1x16x128xbf16>
    %121 = vector.shape_cast %120 : vector<1x16x128xbf16> to vector<16x128xbf16>
    %122 = vector.shape_cast %119 : vector<16x128xbf16> to vector<1x16x128xbf16>
    tpu.vector_store %arg14[%c0_48, %c0_49, %c0_50], %122 {strides = array<i32>} : memref<1x16x128xbf16, #tpu.memory_space<vmem>>, vector<1x16x128xbf16>,
    return
  }
  func.func @transform_0(%arg0: i32) -> (i32, i32, i32) {
    %c0_i32 = arith.constant 0 : i32
    %c0_i32_0 = arith.constant 0 : i32
    %c0_i32_1 = arith.constant 0 : i32
    return %arg0, %c0_i32, %c0_i32_0 : i32, i32, i32
  }
  func.func @transform_1(%arg0: i32) -> (i32, i32) {
    %c0_i32 = arith.constant 0 : i32
    %c0_i32_0 = arith.constant 0 : i32
    %c0_i32_1 = arith.constant 0 : i32
    return %c0_i32, %c0_i32_0 : i32, i32
  }
  func.func @transform_2(%arg0: i32) -> (i32, i32) {
    %c0_i32 = arith.constant 0 : i32
    %c0_i32_0 = arith.constant 0 : i32
    %c0_i32_1 = arith.constant 0 : i32
    return %c0_i32, %c0_i32_0 : i32, i32
  }
  func.func @transform_3(%arg0: i32) -> (i32, i32) {
    %c0_i32 = arith.constant 0 : i32
    %c0_i32_0 = arith.constant 0 : i32
    %c0_i32_1 = arith.constant 0 : i32
    return %c0_i32, %c0_i32_0 : i32, i32
  }
  func.func @transform_4(%arg0: i32) -> (i32, i32) {
    %c0_i32 = arith.constant 0 : i32
    %c0_i32_0 = arith.constant 0 : i32
    %c0_i32_1 = arith.constant 0 : i32
    return %c0_i32, %c0_i32_0 : i32, i32
  }
  func.func @transform_5(%arg0: i32) -> (i32, i32) {
    %c0_i32 = arith.constant 0 : i32
    %c0_i32_0 = arith.constant 0 : i32
    %c0_i32_1 = arith.constant 0 : i32
    return %c0_i32, %c0_i32_0 : i32, i32
  }
  func.func @transform_6(%arg0: i32) -> (i32, i32) {
    %c0_i32 = arith.constant 0 : i32
    %c0_i32_0 = arith.constant 0 : i32
    %c0_i32_1 = arith.constant 0 : i32
    return %c0_i32, %c0_i32_0 : i32, i32
  }
  func.func @transform_7(%arg0: i32) -> (i32, i32) {
    %c0_i32 = arith.constant 0 : i32
    %c0_i32_0 = arith.constant 0 : i32
    %c0_i32_1 = arith.constant 0 : i32
    return %c0_i32, %c0_i32_0 : i32, i32
  }
  func.func @transform_8(%arg0: i32) -> (i32, i32) {
    %c0_i32 = arith.constant 0 : i32
    %c0_i32_0 = arith.constant 0 : i32
    %c0_i32_1 = arith.constant 0 : i32
    return %c0_i32, %c0_i32_0 : i32, i32
  }
  func.func @transform_9(%arg0: i32) -> (i32, i32) {
    %c0_i32 = arith.constant 0 : i32
    %c0_i32_0 = arith.constant 0 : i32
    %c0_i32_1 = arith.constant 0 : i32
    return %c0_i32, %c0_i32_0 : i32, i32
  }
  func.func @transform_10(%arg0: i32) -> (i32, i32) {
    %c0_i32 = arith.constant 0 : i32
    %c0_i32_0 = arith.constant 0 : i32
    %c0_i32_1 = arith.constant 0 : i32
    return %c0_i32, %c0_i32_0 : i32, i32
  }
  func.func @transform_11(%arg0: i32) -> (i32, i32) {
    %c0_i32 = arith.constant 0 : i32
    %c0_i32_0 = arith.constant 0 : i32
    %c0_i32_1 = arith.constant 0 : i32
    return %c0_i32, %c0_i32_0 : i32, i32
  }
  func.func @transform_12(%arg0: i32) -> (i32, i32) {
    %c0_i32 = arith.constant 0 : i32
    %c0_i32_0 = arith.constant 0 : i32
    %c0_i32_1 = arith.constant 0 : i32
    return %c0_i32, %c0_i32_0 : i32, i32
  }
  func.func @transform_13(%arg0: i32) -> (i32, i32, i32) {
    %c0_i32 = arith.constant 0 : i32
    %c0_i32_0 = arith.constant 0 : i32
    %c0_i32_1 = arith.constant 0 : i32
    return %arg0, %c0_i32, %c0_i32_0 : i32, i32, i32
  }
}

module attributes {stable_mosaic.version = 11 : i64} {
  func.func @_final_head_kernel(%arg0: i32, %arg1: memref<1x16x128xbf16, #tpu.memory_space<vmem>>, %arg2: memref<1x128xf32, #tpu.memory_space<vmem>>, %arg3: memref<1x128xf32, #tpu.memory_space<vmem>>, %arg4: memref<128x128xbf16, #tpu.memory_space<vmem>>, %arg5: memref<1x128xf32, #tpu.memory_space<vmem>>, %arg6: memref<1x16x128xf32, #tpu.memory_space<vmem>>) attributes {dimension_semantics = [#tpu.dimension_semantics<parallel>], iteration_bounds = array<i64: 2>, scalar_prefetch = 0 : i64, scratch_operands = 0 : i64, tpu.core_type = #tpu.core_type<tc>, window_params = [{transform_indices = @transform_0, window_bounds = array<i64: 1, 16, 128>}, {pipeline_mode = #tpu.pipeline_mode<synchronous>, transform_indices = @transform_1, window_bounds = array<i64: 1, 128>}, {pipeline_mode = #tpu.pipeline_mode<synchronous>, transform_indices = @transform_2, window_bounds = array<i64: 1, 128>}, {pipeline_mode = #tpu.pipeline_mode<synchronous>, transform_indices = @transform_3, window_bounds = array<i64: 128, 128>}, {pipeline_mode = #tpu.pipeline_mode<synchronous>, transform_indices = @transform_4, window_bounds = array<i64: 1, 128>}, {transform_indices = @transform_5, window_bounds = array<i64: 1, 16, 128>}]} {
    %c0 = arith.constant 0 : index
    %c0_0 = arith.constant 0 : index
    %c0_1 = arith.constant 0 : index
    %0 = vector.load %arg1[%c0, %c0_0, %c0_1] : memref<1x16x128xbf16, #tpu.memory_space<vmem>>, vector<1x16x128xbf16>
    %1 = vector.shape_cast %0 : vector<1x16x128xbf16> to vector<16x128xbf16>
    %2 = arith.extf %1 : vector<16x128xbf16> to vector<16x128xf32>
    %c0_2 = arith.constant 0 : index
    %c0_3 = arith.constant 0 : index
    %3 = vector.load %arg2[%c0_2, %c0_3] : memref<1x128xf32, #tpu.memory_space<vmem>>, vector<1x128xf32>
    %c0_4 = arith.constant 0 : index
    %c0_5 = arith.constant 0 : index
    %4 = vector.load %arg3[%c0_4, %c0_5] : memref<1x128xf32, #tpu.memory_space<vmem>>, vector<1x128xf32>
    %cst = arith.constant dense<0.000000e+00> : vector<16xf32>
    %5 = vector.multi_reduction <add>, %2, %cst [1] : vector<16x128xf32> to vector<16xf32>
    %6 = vector.shape_cast %5 : vector<16xf32> to vector<16x1xf32>
    %7 = arith.mulf %2, %2 : vector<16x128xf32>
    %cst_6 = arith.constant dense<0.000000e+00> : vector<16xf32>
    %8 = vector.multi_reduction <add>, %7, %cst_6 [1] : vector<16x128xf32> to vector<16xf32>
    %9 = vector.shape_cast %8 : vector<16xf32> to vector<16x1xf32>
    %cst_7 = arith.constant 3.125000e-02 : f32
    %10 = vector.broadcast %cst_7 : f32 to vector<16x1xf32>
    %11 = arith.mulf %6, %10 : vector<16x1xf32>
    %cst_8 = arith.constant 3.125000e-02 : f32
    %12 = vector.broadcast %cst_8 : f32 to vector<16x1xf32>
    %13 = arith.mulf %9, %12 : vector<16x1xf32>
    %14 = arith.mulf %11, %11 : vector<16x1xf32>
    %15 = arith.subf %13, %14 : vector<16x1xf32>
    %16 = vector.broadcast %11 : vector<16x1xf32> to vector<16x128xf32>
    %17 = arith.subf %2, %16 : vector<16x128xf32>
    %cst_9 = arith.constant 9.99999974E-6 : f32
    %18 = vector.broadcast %cst_9 : f32 to vector<16x1xf32>
    %19 = arith.addf %15, %18 : vector<16x1xf32>
    %20 = math.rsqrt %19 : vector<16x1xf32>
    %21 = vector.broadcast %20 : vector<16x1xf32> to vector<16x128xf32>
    %22 = arith.mulf %17, %21 : vector<16x128xf32>
    %23 = vector.broadcast %3 : vector<1x128xf32> to vector<16x128xf32>
    %24 = arith.mulf %22, %23 : vector<16x128xf32>
    %25 = vector.broadcast %4 : vector<1x128xf32> to vector<16x128xf32>
    %26 = arith.addf %24, %25 : vector<16x128xf32>
    %27 = arith.truncf %26 : vector<16x128xf32> to vector<16x128xbf16>
    %c0_10 = arith.constant 0 : index
    %c0_11 = arith.constant 0 : index
    %28 = vector.load %arg4[%c0_10, %c0_11] : memref<128x128xbf16, #tpu.memory_space<vmem>>, vector<128x128xbf16>
    %cst_12 = arith.constant dense<0.000000e+00> : vector<16x128xf32>
    %29 = tpu.matmul %27, %28, %cst_12 {dimension_numbers = #tpu.dot_dimension_numbers<[1], [0], [0], [1], [0, 0, 1, 1], [], []>} : vector<16x128xbf16>, vector<128x128xbf16>, vector<16x128xf32> -> vector<16x128xf32>
    %c0_13 = arith.constant 0 : index
    %c0_14 = arith.constant 0 : index
    %30 = vector.load %arg5[%c0_13, %c0_14] : memref<1x128xf32, #tpu.memory_space<vmem>>, vector<1x128xf32>
    %31 = vector.broadcast %30 : vector<1x128xf32> to vector<16x128xf32>
    %32 = arith.addf %29, %31 : vector<16x128xf32>
    %c0_15 = arith.constant 0 : index
    %c0_16 = arith.constant 0 : index
    %c0_17 = arith.constant 0 : index
    %33 = vector.load %arg6[%c0_15, %c0_16, %c0_17] : memref<1x16x128xf32, #tpu.memory_space<vmem>>, vector<1x16x128xf32>
    %34 = vector.shape_cast %33 : vector<1x16x128xf32> to vector<16x128xf32>
    %35 = vector.shape_cast %32 : vector<16x128xf32> to vector<1x16x128xf32>
    tpu.vector_store %arg6[%c0_15, %c0_16, %c0_17], %35 {strides = array<i32>} : memref<1x16x128xf32, #tpu.memory_space<vmem>>, vector<1x16x128xf32>,
    return
  }
  func.func @transform_0(%arg0: i32) -> (i32, i32, i32) {
    %c0_i32 = arith.constant 0 : i32
    %c0_i32_0 = arith.constant 0 : i32
    %c0_i32_1 = arith.constant 0 : i32
    return %arg0, %c0_i32, %c0_i32_0 : i32, i32, i32
  }
  func.func @transform_1(%arg0: i32) -> (i32, i32) {
    %c0_i32 = arith.constant 0 : i32
    %c0_i32_0 = arith.constant 0 : i32
    %c0_i32_1 = arith.constant 0 : i32
    return %c0_i32, %c0_i32_0 : i32, i32
  }
  func.func @transform_2(%arg0: i32) -> (i32, i32) {
    %c0_i32 = arith.constant 0 : i32
    %c0_i32_0 = arith.constant 0 : i32
    %c0_i32_1 = arith.constant 0 : i32
    return %c0_i32, %c0_i32_0 : i32, i32
  }
  func.func @transform_3(%arg0: i32) -> (i32, i32) {
    %c0_i32 = arith.constant 0 : i32
    %c0_i32_0 = arith.constant 0 : i32
    %c0_i32_1 = arith.constant 0 : i32
    return %c0_i32, %c0_i32_0 : i32, i32
  }
  func.func @transform_4(%arg0: i32) -> (i32, i32) {
    %c0_i32 = arith.constant 0 : i32
    %c0_i32_0 = arith.constant 0 : i32
    %c0_i32_1 = arith.constant 0 : i32
    return %c0_i32, %c0_i32_0 : i32, i32
  }
  func.func @transform_5(%arg0: i32) -> (i32, i32, i32) {
    %c0_i32 = arith.constant 0 : i32
    %c0_i32_0 = arith.constant 0 : i32
    %c0_i32_1 = arith.constant 0 : i32
    return %arg0, %c0_i32, %c0_i32_0 : i32, i32, i32
  }
}

</mosaic_0001>

<llo_original>
// kernel: forward.4
$region0: #{forward.4}
  #allocation0 [shape = 'u32[]', space=smem, size = 0x4, offset = 0x4, fixed_abs, tag = 'smem constant byte address 0x4 - core index']
  #allocation1 [shape = 'u32[144,128]{1,0:T(1,128)}', space=vmem, size = 0x12000, scoped, tag = 'internal scratch']
  %s0 = inlined_call_operand.vmem [shape: bf16[32,64], index: 0, kind: input, shape index: {}]
  %s1 = inlined_call_operand.vmem [shape: bf16[64,128], index: 1, kind: input, shape index: {}]
  %s2 = inlined_call_operand.vmem [shape: f32[1,128], index: 2, kind: input, shape index: {}]
  %s3 = inlined_call_operand.vmem [shape: bf16[32,128], index: 3, kind: output, shape index: {}]
  %s4 = sld [smem:[#allocation0]]
  $region22: #{forward.4} parent=0
    _
  %s6 = ssub.s32 1, %s4
  %s7 = scalar_select 0, %s6, %s4
  // Predicated region
  $region2: #{forward.4} parent=0 // pred_check
    _
  $region3: #{forward.4} parent=0 // pred_check_branch
    %9 = sbr.rel (0) target = $region5
  $region4: #{forward.4} parent=0 // pred_region
    _
  $region5: #{forward.4} parent=0 // pred_fallthru
    _
  // Predicated region
  $region6: #{forward.4} parent=0 // pred_check
    _
  $region7: #{forward.4} parent=0 // pred_check_branch
    %11 = sbr.rel (0) target = $region9
  $region8: #{forward.4} parent=0 // pred_region
    _
  $region9: #{forward.4} parent=0 // pred_fallthru
    _
  // Predicated region
  $region10: #{forward.4} parent=0 // pred_check
    _
  $region11: #{forward.4} parent=0 // pred_check_branch
    %13 = sbr.rel (0) target = $region13
  $region12: #{forward.4} parent=0 // pred_region
    _
  $region13: #{forward.4} parent=0 // pred_fallthru
    _
  %v15 = vld [vmem:[%s0] sm:$0xf]
  %v16 = vld [vmem:[%s0 + $0x4] sm:$0xf]
  %v17 = vld [vmem:[%s0 + $0x8] sm:$0xf]
  %v18 = vld [vmem:[%s0 + $0xc] sm:$0xf]
  %v19 = vld [vmem:[%s1] sm:$0xf]
  %v20 = vld [vmem:[%s1 + $0x4] sm:$0xf]
  %v21 = vld [vmem:[%s1 + $0x8] sm:$0xf]
  %v22 = vld [vmem:[%s1 + $0xc] sm:$0xf]
  %v23 = vld [vmem:[%s1 + $0x10] sm:$0xf]
  %v24 = vld [vmem:[%s1 + $0x14] sm:$0xf]
  %v25 = vld [vmem:[%s1 + $0x18] sm:$0xf]
  %v26 = vld [vmem:[%s1 + $0x1c] sm:$0xf]
  %v27 = vld [vmem:[%s2] sm:$0x1]
  %v29 = vlaneseq
  %v30 = vshrl.u32 %v29, 7
  %v31 = vsub.s32 0, %v30
  %v32 = vrot.slane %v27, %v31
  %v38 = vunpack.c.l.b16 %v15
  %v39 = vunpack.c.l.b16 %v16
  %v40 = vunpack.c.l.b16 %v17
  %v41 = vunpack.c.l.b16 %v18
  %v42 = vpack.c.b16 %v39, %v38
  %v43 = vpack.c.b16 %v41, %v40
  %v52 = vunpack.c.l.b16 %v19
  %v53 = vunpack.c.l.b16 %v20
  %v54 = vunpack.c.l.b16 %v21
  %v55 = vunpack.c.l.b16 %v22
  %v56 = vunpack.c.l.b16 %v23
  %v57 = vunpack.c.l.b16 %v24
  %v58 = vunpack.c.l.b16 %v25
  %v59 = vunpack.c.l.b16 %v26
  %v60 = vpack.c.b16 %v53, %v52
  %v61 = vpack.c.b16 %v55, %v54
  %v62 = vpack.c.b16 %v57, %v56
  %v63 = vpack.c.b16 %v59, %v58
  %vm68 = vcmask 523264
  %v70 = vsel %vm68, %v42, 0
  %v73 = vsel %vm68, %v43, 0
  %75 = vmatprep.subr.bf16.mxu0 0
  %76 = vmatpush1.bf16.msra.mxu0 %v60
  %77 = vmatprep.subr.bf16.mxu0 0
  %78 = vmatpush1.bf16.msra.mxu0 %v61
  %79 = vmatprep.subr.bf16.mxu0 0
  %80 = vmatpush1.bf16.msra.mxu0 %v62
  %81 = vmatprep.subr.bf16.mxu0 0
  %82 = vmatpush1.bf16.msra.mxu0 %v63
  %83 = vmatprep.subr.bf16.mxu0 0
  %84 = vmatpush1.bf16.msra.mxu0 0
  %85 = vmatprep.subr.bf16.mxu0 0
  %86 = vmatpush1.bf16.msra.mxu0 0
  %87 = vmatprep.subr.bf16.mxu0 0
  %88 = vmatpush1.bf16.msra.mxu0 0
  %89 = vmatprep.subr.bf16.mxu0 0
  %90 = vmatpush1.bf16.msra.mxu0 0
  %91 = vmatprep.subr.bf16.mxu0 0
  %92 = vmatpush1.bf16.msra.mxu0 0
  %93 = vmatprep.subr.bf16.mxu0 0
  %94 = vmatpush1.bf16.msra.mxu0 0
  %95 = vmatprep.subr.bf16.mxu0 0
  %96 = vmatpush1.bf16.msra.mxu0 0
  %97 = vmatprep.subr.bf16.mxu0 0
  %98 = vmatpush1.bf16.msra.mxu0 0
  %99 = vmatprep.subr.bf16.mxu0 0
  %100 = vmatpush1.bf16.msra.mxu0 0
  %101 = vmatprep.subr.bf16.mxu0 0
  %102 = vmatpush1.bf16.msra.mxu0 0
  %103 = vmatprep.subr.bf16.mxu0 0
  %104 = vmatpush1.bf16.msra.mxu0 0
  %105 = vmatprep.subr.bf16.mxu0 0
  %106 = vmatpush1.bf16.msra.mxu0 0
  %107 = vmatprep.mubr.bf16.mxu0 0
  %108 = vmatmul.mubr.bf16.gmra.mrb[0].mxu0 %v70
  %v109 = vpop.f32.mrb[0].mxu0
  %v110 = vadd.f32 %v32, %v109
  %v111 = vpop.f32.mrb[0].mxu0
  %v112 = vpop.f32.mrb[0].mxu0
  %v113 = vadd.f32 %v32, %v112
  %v114 = vpop.f32.mrb[0].mxu0
  %115 = vmatprep.mubr.bf16.mxu0 0
  %116 = vmatmul.mubr.bf16.gmra.mrb[0].mxu0 %v73
  %v117 = vpop.f32.mrb[0].mxu0
  %v118 = vadd.f32 %v32, %v117
  %v119 = vpop.f32.mrb[0].mxu0
  %v120 = vpop.f32.mrb[0].mxu0
  %v121 = vadd.f32 %v32, %v120
  %v122 = vpop.f32.mrb[0].mxu0
  %123 = vdwg.mxu0
  %v124 = vpack.c.bf16 %v113, %v110
  %v125 = vpack.c.bf16 %v121, %v118
  %v128 = vunpack.c.l.b16 %v124
  %v129 = vunpack.c.h.b16 %v124
  %v130 = vunpack.c.l.b16 %v125
  %v131 = vunpack.c.h.b16 %v125
  %v132 = vpack.c.b16 %v128, %v128
  %v133 = vpack.c.b16 %v129, %v129
  %v134 = vpack.c.b16 %v130, %v130
  %v135 = vpack.c.b16 %v131, %v131
  %140 = vst [vmem:[%s3] sm:$0xf] %v132
  %141 = vst [vmem:[%s3 + $0x4] sm:$0xf] %v133
  %142 = vst [vmem:[%s3 + $0x8] sm:$0xf] %v134
  %143 = vst [vmem:[%s3 + $0xc] sm:$0xf] %v135
  // Predicated region
  $region14: #{forward.4} parent=0 // pred_check
    _
  $region15: #{forward.4} parent=0 // pred_check_branch
    %145 = sbr.rel (0) target = $region17
  $region16: #{forward.4} parent=0 // pred_region
    _
  $region17: #{forward.4} parent=0 // pred_fallthru
    _
  // Predicated region
  $region18: #{forward.4} parent=0 // pred_check
    _
  $region19: #{forward.4} parent=0 // pred_check_branch
    %147 = sbr.rel (0) target = $region21
  $region20: #{forward.4} parent=0 // pred_region
    _
  $region21: #{forward.4} parent=0 // pred_fallthru
    _

// kernel: forward.7
$region0: #{forward.7}
  #allocation0 [shape = 'u32[]', space=smem, size = 0x4, offset = 0x4, fixed_abs, tag = 'smem constant byte address 0x4 - core index']
  #allocation1 [shape = 'u32[144,128]{1,0:T(1,128)}', space=vmem, size = 0x12000, scoped, tag = 'internal scratch']
  %s0 = inlined_call_operand.vmem [shape: bf16[2,16,128], index: 0, kind: input, shape index: {}]
  %s1 = inlined_call_operand.vmem [shape: f32[1,128], index: 1, kind: input, shape index: {}]
  %s2 = inlined_call_operand.vmem [shape: f32[1,128], index: 2, kind: input, shape index: {}]
  %s3 = inlined_call_operand.vmem [shape: bf16[128,128], index: 3, kind: input, shape index: {}]
  %s4 = inlined_call_operand.vmem [shape: f32[1,128], index: 4, kind: input, shape index: {}]
  %s5 = inlined_call_operand.vmem [shape: f32[2,16,128], index: 5, kind: output, shape index: {}]
  %s6 = sld [smem:[#allocation0]]
  $region53: #{forward.7} parent=0
    _
  %s8 = ssub.s32 1, %s6
  %s9 = scalar_select 0, %s8, %s6
  loop: start=0, step=1, limit=4
  $region2: #{forward.7} parent=0 // loop_pre_header
    _
  $region3: #{forward.7} parent=0 // loop_header
    %s11 = sphi 0, %s15
    %p12 = scmp.ge.s32.totalorder %s11, 4
    %s21 = sphi 0, %s23
    %s24 = sphi 0, %s21
    %s25 = sphi 0, %s24
    %s41 = sphi 0, %s25
    %s45 = sphi 0, %s45
    %s47 = sphi 0, %s45
    %s48 = sphi 0, %s47
    %s62 = sphi 0, %s48
    %s66 = sphi 0, %s66
    %s68 = sphi 0, %s66
    %s69 = sphi 0, %s68
    %s83 = sphi 0, %s69
    %s87 = sphi 0, %s87
    %s89 = sphi 0, %s87
    %s90 = sphi 0, %s89
    %s104 = sphi 0, %s90
    %s108 = sphi 0, %s108
    %s110 = sphi 0, %s108
    %s111 = sphi 0, %s110
    %s125 = sphi 0, %s111
    %s131 = sphi 0, %s133
    %s134 = sphi 0, %s131
    %s135 = sphi 0, %s134
    %s151 = sphi 0, %s135
  $region4: #{forward.7} parent=0 // loop_header_branch
    %14 = sbr.rel (%p12) target = $region8
  $region5: #{forward.7} parent=0 // loop_body
    %s16 = ssub.s32 %s11, 1
    %s17 = ssub.s32 %s11, 2
    %s18 = sadd.s32 %s11, 1
    %s19 = ssub.s32 %s11, %s18
    %p20 = scmp.eq.s32.totalorder %s19, 0
    %s22 = sadd.s32 %s21, 1
    %s23 = scalar_select %p20, %s21, %s22
    %p26 = pneg %p20
    %p27 = scmp.eq.s32.totalorder %s11, 1
    %p28 = por %p26, %p27
    %p29 = scmp.ne.s32.totalorder %s21, %s24
    %p30 = scmp.eq.s32.totalorder %s11, 0
    %p31 = por %p29, %p30
    %p32 = scmp.ne.s32.totalorder %s21, %s24
    %p33 = scmp.eq.s32.totalorder %s16, 1
    %p34 = por %p32, %p33
    %p35 = scmp.ne.s32.totalorder %s24, %s25
    %p36 = scmp.eq.s32.totalorder %s16, 0
    %p37 = por %p35, %p36
    %p38 = scmp.ne.s32.totalorder %s24, %s25
    %p39 = scmp.eq.s32.totalorder %s17, 1
    %p40 = por %p38, %p39
    %p42 = scmp.ne.s32.totalorder %s25, %s41
    %p43 = scmp.eq.s32.totalorder %s17, 0
    %p44 = por %p42, %p43
    %s46 = sadd.s32 %s45, 1
    %p49 = scmp.eq.s32.totalorder %s11, 1
    %p50 = scmp.ne.s32.totalorder %s45, %s47
    %p51 = scmp.eq.s32.totalorder %s11, 0
    %p52 = por %p50, %p51
    %p53 = scmp.ne.s32.totalorder %s45, %s47
    %p54 = scmp.eq.s32.totalorder %s16, 1
    %p55 = por %p53, %p54
    %p56 = scmp.ne.s32.totalorder %s47, %s48
    %p57 = scmp.eq.s32.totalorder %s16, 0
    %p58 = por %p56, %p57
    %p59 = scmp.ne.s32.totalorder %s47, %s48
    %p60 = scmp.eq.s32.totalorder %s17, 1
    %p61 = por %p59, %p60
    %p63 = scmp.ne.s32.totalorder %s48, %s62
    %p64 = scmp.eq.s32.totalorder %s17, 0
    %p65 = por %p63, %p64
    %s67 = sadd.s32 %s66, 1
    %p70 = scmp.eq.s32.totalorder %s11, 1
    %p71 = scmp.ne.s32.totalorder %s66, %s68
    %p72 = scmp.eq.s32.totalorder %s11, 0
    %p73 = por %p71, %p72
    %p74 = scmp.ne.s32.totalorder %s66, %s68
    %p75 = scmp.eq.s32.totalorder %s16, 1
    %p76 = por %p74, %p75
    %p77 = scmp.ne.s32.totalorder %s68, %s69
    %p78 = scmp.eq.s32.totalorder %s16, 0
    %p79 = por %p77, %p78
    %p80 = scmp.ne.s32.totalorder %s68, %s69
    %p81 = scmp.eq.s32.totalorder %s17, 1
    %p82 = por %p80, %p81
    %p84 = scmp.ne.s32.totalorder %s69, %s83
    %p85 = scmp.eq.s32.totalorder %s17, 0
    %p86 = por %p84, %p85
    %s88 = sadd.s32 %s87, 1
    %p91 = scmp.eq.s32.totalorder %s11, 1
    %p92 = scmp.ne.s32.totalorder %s87, %s89
    %p93 = scmp.eq.s32.totalorder %s11, 0
    %p94 = por %p92, %p93
    %p95 = scmp.ne.s32.totalorder %s87, %s89
    %p96 = scmp.eq.s32.totalorder %s16, 1
    %p97 = por %p95, %p96
    %p98 = scmp.ne.s32.totalorder %s89, %s90
    %p99 = scmp.eq.s32.totalorder %s16, 0
    %p100 = por %p98, %p99
    %p101 = scmp.ne.s32.totalorder %s89, %s90
    %p102 = scmp.eq.s32.totalorder %s17, 1
    %p103 = por %p101, %p102
    %p105 = scmp.ne.s32.totalorder %s90, %s104
    %p106 = scmp.eq.s32.totalorder %s17, 0
    %p107 = por %p105, %p106
    %s109 = sadd.s32 %s108, 1
    %p112 = scmp.eq.s32.totalorder %s11, 1
    %p113 = scmp.ne.s32.totalorder %s108, %s110
    %p114 = scmp.eq.s32.totalorder %s11, 0
    %p115 = por %p113, %p114
    %p116 = scmp.ne.s32.totalorder %s108, %s110
    %p117 = scmp.eq.s32.totalorder %s16, 1
    %p118 = por %p116, %p117
    %p119 = scmp.ne.s32.totalorder %s110, %s111
    %p120 = scmp.eq.s32.totalorder %s16, 0
    %p121 = por %p119, %p120
    %p122 = scmp.ne.s32.totalorder %s110, %s111
    %p123 = scmp.eq.s32.totalorder %s17, 1
    %p124 = por %p122, %p123
    %p126 = scmp.ne.s32.totalorder %s111, %s125
    %p127 = scmp.eq.s32.totalorder %s17, 0
    %p128 = por %p126, %p127
    %s129 = ssub.s32 %s11, %s18
    %p130 = scmp.eq.s32.totalorder %s129, 0
    %s132 = sadd.s32 %s131, 1
    %s133 = scalar_select %p130, %s131, %s132
    %p136 = pneg %p130
    %p137 = scmp.eq.s32.totalorder %s11, 1
    %p138 = por %p136, %p137
    %p139 = scmp.ne.s32.totalorder %s131, %s134
    %p140 = scmp.eq.s32.totalorder %s11, 0
    %p141 = por %p139, %p140
    %p142 = scmp.ne.s32.totalorder %s131, %s134
    %p143 = scmp.eq.s32.totalorder %s16, 1
    %p144 = por %p142, %p143
    %p145 = scmp.ne.s32.totalorder %s134, %s135
    %p146 = scmp.eq.s32.totalorder %s16, 0
    %p147 = por %p145, %p146
    %p148 = scmp.ne.s32.totalorder %s134, %s135
    %p149 = scmp.eq.s32.totalorder %s17, 1
    %p150 = por %p148, %p149
    %p152 = scmp.ne.s32.totalorder %s135, %s151
    %p153 = scmp.eq.s32.totalorder %s17, 0
    %p154 = por %p152, %p153
    %p155 = scmp.le.s32.totalorder 1, %s11
    %p156 = scmp.lt.s32.totalorder %s11, 3
    %p157 = pnand %p155, %p156
    %p158 = pneg %p157
    // Predicated region
    $region9: #{forward.7} parent=5 // pred_check
      _
    $region10: #{forward.7} parent=5 // pred_check_branch
      %160 = sbr.rel (%p157) target = $region12
    $region11: #{forward.7} parent=5 // pred_region
      %s161 = ssub.s32 %s11, 1
      // Predicated region
      $region13: #{forward.7} parent=11 // pred_check
        %p162 = pneg %p58
      $region14: #{forward.7} parent=11 // pred_check_branch
        %164 = sbr.rel (%p162) target = $region16
      $region15: #{forward.7} parent=11 // pred_region
        _
      $region16: #{forward.7} parent=11 // pred_fallthru
        _
      // Predicated region
      $region17: #{forward.7} parent=11 // pred_check
        %p165 = pneg %p79
      $region18: #{forward.7} parent=11 // pred_check_branch
        %167 = sbr.rel (%p165) target = $region20
      $region19: #{forward.7} parent=11 // pred_region
        _
      $region20: #{forward.7} parent=11 // pred_fallthru
        _
      // Predicated region
      $region21: #{forward.7} parent=11 // pred_check
        %p168 = pneg %p100
      $region22: #{forward.7} parent=11 // pred_check_branch
        %170 = sbr.rel (%p168) target = $region24
      $region23: #{forward.7} parent=11 // pred_region
        _
      $region24: #{forward.7} parent=11 // pred_fallthru
        _
      // Predicated region
      $region25: #{forward.7} parent=11 // pred_check
        %p171 = pneg %p121
      $region26: #{forward.7} parent=11 // pred_check_branch
        %173 = sbr.rel (%p171) target = $region28
      $region27: #{forward.7} parent=11 // pred_region
        _
      $region28: #{forward.7} parent=11 // pred_fallthru
        _
    $region12: #{forward.7} parent=5 // pred_fallthru
      _
    %p174 = scmp.lt.s32.totalorder %s11, 2
    // Predicated region
    $region29: #{forward.7} parent=5 // pred_check
      %p175 = pneg %p174
    $region30: #{forward.7} parent=5 // pred_check_branch
      %177 = sbr.rel (%p175) target = $region32
    $region31: #{forward.7} parent=5 // pred_region
      // Predicated region
      $region33: #{forward.7} parent=31 // pred_check
        %p178 = pneg %p31
      $region34: #{forward.7} parent=31 // pred_check_branch
        %180 = sbr.rel (%p178) target = $region36
      $region35: #{forward.7} parent=31 // pred_region
        %p181 = scmp.lt.s32.totalorder %s11, 1
        %s182 = scalar_select %p181, %s11, 1
        %s183 = smul.addr %s182, 2
        %s184 = smul.addr %s183, 4
        %s185 = scalar_lea.vmem %s0, %s184
      $region36: #{forward.7} parent=31 // pred_fallthru
        _
    $region32: #{forward.7} parent=5 // pred_fallthru
      _
    %p186 = scmp.le.s32.totalorder 1, %s11
    %p187 = scmp.lt.s32.totalorder %s11, 3
    %p188 = pnand %p186, %p187
    %p189 = pneg %p188
    // Predicated region
    $region37: #{forward.7} parent=5 // pred_check
      _
    $region38: #{forward.7} parent=5 // pred_check_branch
      %191 = sbr.rel (%p188) target = $region40
    $region39: #{forward.7} parent=5 // pred_region
      %s192 = ssub.s32 %s11, 1
      %p193 = scmp.lt.s32.totalorder %s16, 1
      %s194 = scalar_select %p193, %s16, 1
      %s195 = smul.addr %s194, 2
      %s196 = smul.addr %s195, 4
      %s197 = scalar_lea.vmem %s0, %s196
      %p198 = pneg %p37
      %p199 = pneg %p34
      %p200 = pneg %p58
      %p201 = pneg %p55
      %p202 = pneg %p79
      %p203 = pneg %p76
      %p204 = pneg %p100
      %p205 = pneg %p97
      %p206 = pneg %p121
      %p207 = pneg %p118
      %p208 = pneg %p147
      %p209 = pneg %p144
      %p210 = scmp.lt.s32.totalorder %s16, 1
      %s211 = scalar_select %p210, %s16, 1
      %s212 = smul.addr %s211, 2
      %s213 = smul.addr %s212, 8
      %s214 = scalar_lea.vmem %s5, %s213
      %p215 = scmp.lt.s32.totalorder %s16, 1
      %s216 = scalar_select %p215, %s16, 1
      %s217 = smul.addr %s216, 2
      %s218 = smul.addr %s217, 4
      %s219 = scalar_lea.vmem %s0, %s218
      %p220 = scmp.lt.s32.totalorder %s16, 1
      %s221 = scalar_select %p220, %s16, 1
      %s222 = smul.addr %s221, 2
      %s223 = smul.addr %s222, 8
      %s224 = scalar_lea.vmem %s5, %s223
      %v226 = vld [vmem:[%s219] sm:$0xf]
      %v227 = vld [vmem:[%s219 + $0x4] sm:$0xf]
      %v228 = vunpack.c.l.bf16 %v226
      %v229 = vunpack.c.l.bf16 %v227
      %v230 = vld [vmem:[%s1] sm:$0x1]
      %v231 = vld [vmem:[%s2] sm:$0x1]
      %232 = vadd.xlane.f32.xlu0 %v228
      %v233 = vpop.xlane.xlu0 %232
      %234 = vadd.xlane.f32.xlu0 %v229
      %v235 = vpop.xlane.xlu0 %234
      %v236 = vmul.f32 %v228, %v228
      %v237 = vmul.f32 %v229, %v229
      %238 = vadd.xlane.f32.xlu0 %v236
      %v239 = vpop.xlane.xlu0 %238
      %240 = vadd.xlane.f32.xlu0 %v237
      %v241 = vpop.xlane.xlu0 %240
      %v242 = vmul.f32 %v233, 0.03125
      %v243 = vmul.f32 %v235, 0.03125
      %v244 = vmul.f32 %v239, 0.03125
      %v245 = vmul.f32 %v241, 0.03125
      %v246 = vmul.f32 %v242, %v242
      %v247 = vmul.f32 %v243, %v243
      %v248 = vsub.f32 %v244, %v246
      %v249 = vsub.f32 %v245, %v247
      %v250 = vsub.f32 %v228, %v242
      %v251 = vsub.f32 %v229, %v243
      %v252 = vadd.f32 %v248, 1e-05
      %v253 = vadd.f32 %v249, 1e-05
      %v254 = vrsqrt.pop %v252
      %v255 = vrsqrt.pop %v253
      %v256 = vmul.f32 %v250, %v254
      %v257 = vmul.f32 %v251, %v255
      %v259 = vlaneseq
      %v260 = vshrl.u32 %v259, 7
      %v261 = vsub.s32 0, %v260
      %v262 = vrot.slane %v230, %v261
      %v264 = vmul.f32 %v256, %v262
      %v265 = vmul.f32 %v257, %v262
      %v267 = vlaneseq
      %v268 = vshrl.u32 %v267, 7
      %v269 = vsub.s32 0, %v268
      %v270 = vrot.slane %v231, %v269
      %v272 = vadd.f32 %v264, %v270
      %v273 = vadd.f32 %v265, %v270
      %v274 = vpack.c.bf16 %v273, %v272
      %v275 = vld [vmem:[%s3] sm:$0xf]
      %v276 = vld [vmem:[%s3 + $0x4] sm:$0xf]
      %v277 = vld [vmem:[%s3 + $0x8] sm:$0xf]
      %v278 = vld [vmem:[%s3 + $0xc] sm:$0xf]
      %v279 = vld [vmem:[%s3 + $0x10] sm:$0xf]
      %v280 = vld [vmem:[%s3 + $0x14] sm:$0xf]
      %v281 = vld [vmem:[%s3 + $0x18] sm:$0xf]
      %v282 = vld [vmem:[%s3 + $0x1c] sm:$0xf]
      %v283 = vld [vmem:[%s3 + $0x20] sm:$0xf]
      %v284 = vld [vmem:[%s3 + $0x24] sm:$0xf]
      %v285 = vld [vmem:[%s3 + $0x28] sm:$0xf]
      %v286 = vld [vmem:[%s3 + $0x2c] sm:$0xf]
      %v287 = vld [vmem:[%s3 + $0x30] sm:$0xf]
      %v288 = vld [vmem:[%s3 + $0x34] sm:$0xf]
      %v289 = vld [vmem:[%s3 + $0x38] sm:$0xf]
      %v290 = vld [vmem:[%s3 + $0x3c] sm:$0xf]
      %v291 = vld [vmem:[%s4] sm:$0x1]
      %v293 = vlaneseq
      %v294 = vshrl.u32 %v293, 7
      %v295 = vsub.s32 0, %v294
      %v296 = vrot.slane %v291, %v295
      %v314 = vunpack.c.l.b16 %v275
      %v315 = vunpack.c.l.b16 %v276
      %v316 = vunpack.c.l.b16 %v277
      %v317 = vunpack.c.l.b16 %v278
      %v318 = vunpack.c.l.b16 %v279
      %v319 = vunpack.c.l.b16 %v280
      %v320 = vunpack.c.l.b16 %v281
      %v321 = vunpack.c.l.b16 %v282
      %v322 = vunpack.c.l.b16 %v283
      %v323 = vunpack.c.l.b16 %v284
      %v324 = vunpack.c.l.b16 %v285
      %v325 = vunpack.c.l.b16 %v286
      %v326 = vunpack.c.l.b16 %v287
      %v327 = vunpack.c.l.b16 %v288
      %v328 = vunpack.c.l.b16 %v289
      %v329 = vunpack.c.l.b16 %v290
      %v330 = vpack.c.b16 %v315, %v314
      %v331 = vpack.c.b16 %v317, %v316
      %v332 = vpack.c.b16 %v319, %v318
      %v333 = vpack.c.b16 %v321, %v320
      %v334 = vpack.c.b16 %v323, %v322
      %v335 = vpack.c.b16 %v325, %v324
      %v336 = vpack.c.b16 %v327, %v326
      %v337 = vpack.c.b16 %v329, %v328
      %346 = vmatprep.subr.bf16.mxu0 0
      %347 = vmatpush1.bf16.msra.mxu0 %v330
      %348 = vmatprep.subr.bf16.mxu0 0
      %349 = vmatpush1.bf16.msra.mxu0 %v331
      %350 = vmatprep.subr.bf16.mxu0 0
      %351 = vmatpush1.bf16.msra.mxu0 %v332
      %352 = vmatprep.subr.bf16.mxu0 0
      %353 = vmatpush1.bf16.msra.mxu0 %v333
      %354 = vmatprep.subr.bf16.mxu0 0
      %355 = vmatpush1.bf16.msra.mxu0 %v334
      %356 = vmatprep.subr.bf16.mxu0 0
      %357 = vmatpush1.bf16.msra.mxu0 %v335
      %358 = vmatprep.subr.bf16.mxu0 0
      %359 = vmatpush1.bf16.msra.mxu0 %v336
      %360 = vmatprep.subr.bf16.mxu0 0
      %361 = vmatpush1.bf16.msra.mxu0 %v337
      %362 = vmatprep.subr.bf16.mxu0 0
      %363 = vmatpush1.bf16.msra.mxu0 0
      %364 = vmatprep.subr.bf16.mxu0 0
      %365 = vmatpush1.bf16.msra.mxu0 0
      %366 = vmatprep.subr.bf16.mxu0 0
      %367 = vmatpush1.bf16.msra.mxu0 0
      %368 = vmatprep.subr.bf16.mxu0 0
      %369 = vmatpush1.bf16.msra.mxu0 0
      %370 = vmatprep.subr.bf16.mxu0 0
      %371 = vmatpush1.bf16.msra.mxu0 0
      %372 = vmatprep.subr.bf16.mxu0 0
      %373 = vmatpush1.bf16.msra.mxu0 0
      %374 = vmatprep.subr.bf16.mxu0 0
      %375 = vmatpush1.bf16.msra.mxu0 0
      %376 = vmatprep.subr.bf16.mxu0 0
      %377 = vmatpush1.bf16.msra.mxu0 0
      %378 = vmatprep.mubr.bf16.mxu0 0
      %379 = vmatmul.mubr.bf16.gmra.mrb[0].mxu0 %v274
      %v380 = vpop.f32.mrb[0].mxu0
      %v381 = vadd.f32 %v296, %v380
      %v382 = vpop.f32.mrb[0].mxu0
      %v383 = vpop.f32.mrb[0].mxu0
      %v384 = vadd.f32 %v296, %v383
      %v385 = vpop.f32.mrb[0].mxu0
      %386 = vdwg.mxu0
      %387 = vst [vmem:[%s224] sm:$0xff] %v381
      %388 = vst [vmem:[%s224 + $0x8] sm:$0xff] %v384
      %p389 = scmp.lt.s32.totalorder %s16, 1
      %s390 = scalar_select %p389, %s16, 1
      %s391 = smul.addr %s390, 2
      %s392 = smul.addr %s391, 8
      %s393 = scalar_lea.vmem %s5, %s392
      // Predicated region
      $region41: #{forward.7} parent=39 // pred_check
        %p394 = pneg %p144
      $region42: #{forward.7} parent=39 // pred_check_branch
        %396 = sbr.rel (%p394) target = $region44
      $region43: #{forward.7} parent=39 // pred_region
        _
      $region44: #{forward.7} parent=39 // pred_fallthru
        _
    $region40: #{forward.7} parent=5 // pred_fallthru
      _
    %p397 = scmp.le.s32.totalorder 2, %s11
    // Predicated region
    $region45: #{forward.7} parent=5 // pred_check
      %p398 = pneg %p397
    $region46: #{forward.7} parent=5 // pred_check_branch
      %400 = sbr.rel (%p398) target = $region48
    $region47: #{forward.7} parent=5 // pred_region
      %s401 = ssub.s32 %s11, 2
      // Predicated region
      $region49: #{forward.7} parent=47 // pred_check
        %p402 = pneg %p150
      $region50: #{forward.7} parent=47 // pred_check_branch
        %404 = sbr.rel (%p402) target = $region52
      $region51: #{forward.7} parent=47 // pred_region
        %p405 = scmp.lt.s32.totalorder %s17, 1
        %s406 = scalar_select %p405, %s17, 1
        %s407 = smul.addr %s406, 2
        %s408 = smul.addr %s407, 8
        %s409 = scalar_lea.vmem %s5, %s408
      $region52: #{forward.7} parent=47 // pred_fallthru
        _
    $region48: #{forward.7} parent=5 // pred_fallthru
      _
  $region6: #{forward.7} parent=0 // loop_footer
    %s15 = sadd.s32 1, %s11
  $region7: #{forward.7} parent=0 // loop_footer_branch
    %10 = sbr.rel target = $region3
  $region8: #{forward.7} parent=0 // loop_exit
    _

// kernel: forward.5
$region0: #{forward.5}
  #allocation0 [shape = 'u32[]', space=smem, size = 0x4, offset = 0x4, fixed_abs, tag = 'smem constant byte address 0x4 - core index']
  #allocation1 [shape = 'u32[144,128]{1,0:T(1,128)}', space=vmem, size = 0x12000, scoped, tag = 'internal scratch']
  %s0 = inlined_call_operand.vmem [shape: bf16[2,16,128], index: 0, kind: input, shape index: {}]
  %s1 = inlined_call_operand.vmem [shape: f32[1,128], index: 1, kind: input, shape index: {}]
  %s2 = inlined_call_operand.vmem [shape: f32[1,128], index: 2, kind: input, shape index: {}]
  %s3 = inlined_call_operand.vmem [shape: bf16[128,384], index: 3, kind: input, shape index: {}]
  %s4 = inlined_call_operand.vmem [shape: f32[1,384], index: 4, kind: input, shape index: {}]
  %s5 = inlined_call_operand.vmem [shape: bf16[128,128], index: 5, kind: input, shape index: {}]
  %s6 = inlined_call_operand.vmem [shape: f32[1,128], index: 6, kind: input, shape index: {}]
  %s7 = inlined_call_operand.vmem [shape: f32[1,128], index: 7, kind: input, shape index: {}]
  %s8 = inlined_call_operand.vmem [shape: f32[1,128], index: 8, kind: input, shape index: {}]
  %s9 = inlined_call_operand.vmem [shape: bf16[128,128], index: 9, kind: input, shape index: {}]
  %s10 = inlined_call_operand.vmem [shape: f32[1,128], index: 10, kind: input, shape index: {}]
  %s11 = inlined_call_operand.vmem [shape: bf16[128,128], index: 11, kind: input, shape index: {}]
  %s12 = inlined_call_operand.vmem [shape: f32[1,128], index: 12, kind: input, shape index: {}]
  %s13 = inlined_call_operand.vmem [shape: bf16[2,16,128], index: 13, kind: output, shape index: {}]
  %s14 = sld [smem:[#allocation0]]
  $region85: #{forward.5} parent=0
    _
  %s16 = ssub.s32 1, %s14
  %s17 = scalar_select 0, %s16, %s14
  loop: start=0, step=1, limit=4
  $region2: #{forward.5} parent=0 // loop_pre_header
    _
  $region3: #{forward.5} parent=0 // loop_header
    %s19 = sphi 0, %s23
    %p20 = scmp.ge.s32.totalorder %s19, 4
    %s29 = sphi 0, %s31
    %s32 = sphi 0, %s29
    %s33 = sphi 0, %s32
    %s49 = sphi 0, %s33
    %s53 = sphi 0, %s53
    %s55 = sphi 0, %s53
    %s56 = sphi 0, %s55
    %s70 = sphi 0, %s56
    %s74 = sphi 0, %s74
    %s76 = sphi 0, %s74
    %s77 = sphi 0, %s76
    %s91 = sphi 0, %s77
    %s95 = sphi 0, %s95
    %s97 = sphi 0, %s95
    %s98 = sphi 0, %s97
    %s112 = sphi 0, %s98
    %s116 = sphi 0, %s116
    %s118 = sphi 0, %s116
    %s119 = sphi 0, %s118
    %s133 = sphi 0, %s119
    %s137 = sphi 0, %s137
    %s139 = sphi 0, %s137
    %s140 = sphi 0, %s139
    %s154 = sphi 0, %s140
    %s158 = sphi 0, %s158
    %s160 = sphi 0, %s158
    %s161 = sphi 0, %s160
    %s175 = sphi 0, %s161
    %s179 = sphi 0, %s179
    %s181 = sphi 0, %s179
    %s182 = sphi 0, %s181
    %s196 = sphi 0, %s182
    %s200 = sphi 0, %s200
    %s202 = sphi 0, %s200
    %s203 = sphi 0, %s202
    %s217 = sphi 0, %s203
    %s221 = sphi 0, %s221
    %s223 = sphi 0, %s221
    %s224 = sphi 0, %s223
    %s238 = sphi 0, %s224
    %s242 = sphi 0, %s242
    %s244 = sphi 0, %s242
    %s245 = sphi 0, %s244
    %s259 = sphi 0, %s245
    %s263 = sphi 0, %s263
    %s265 = sphi 0, %s263
    %s266 = sphi 0, %s265
    %s280 = sphi 0, %s266
    %s284 = sphi 0, %s284
    %s286 = sphi 0, %s284
    %s287 = sphi 0, %s286
    %s301 = sphi 0, %s287
    %s307 = sphi 0, %s309
    %s310 = sphi 0, %s307
    %s311 = sphi 0, %s310
    %s327 = sphi 0, %s311
  $region4: #{forward.5} parent=0 // loop_header_branch
    %22 = sbr.rel (%p20) target = $region8
  $region5: #{forward.5} parent=0 // loop_body
    %s24 = ssub.s32 %s19, 1
    %s25 = ssub.s32 %s19, 2
    %s26 = sadd.s32 %s19, 1
    %s27 = ssub.s32 %s19, %s26
    %p28 = scmp.eq.s32.totalorder %s27, 0
    %s30 = sadd.s32 %s29, 1
    %s31 = scalar_select %p28, %s29, %s30
    %p34 = pneg %p28
    %p35 = scmp.eq.s32.totalorder %s19, 1
    %p36 = por %p34, %p35
    %p37 = scmp.ne.s32.totalorder %s29, %s32
    %p38 = scmp.eq.s32.totalorder %s19, 0
    %p39 = por %p37, %p38
    %p40 = scmp.ne.s32.totalorder %s29, %s32
    %p41 = scmp.eq.s32.totalorder %s24, 1
    %p42 = por %p40, %p41
    %p43 = scmp.ne.s32.totalorder %s32, %s33
    %p44 = scmp.eq.s32.totalorder %s24, 0
    %p45 = por %p43, %p44
    %p46 = scmp.ne.s32.totalorder %s32, %s33
    %p47 = scmp.eq.s32.totalorder %s25, 1
    %p48 = por %p46, %p47
    %p50 = scmp.ne.s32.totalorder %s33, %s49
    %p51 = scmp.eq.s32.totalorder %s25, 0
    %p52 = por %p50, %p51
    %s54 = sadd.s32 %s53, 1
    %p57 = scmp.eq.s32.totalorder %s19, 1
    %p58 = scmp.ne.s32.totalorder %s53, %s55
    %p59 = scmp.eq.s32.totalorder %s19, 0
    %p60 = por %p58, %p59
    %p61 = scmp.ne.s32.totalorder %s53, %s55
    %p62 = scmp.eq.s32.totalorder %s24, 1
    %p63 = por %p61, %p62
    %p64 = scmp.ne.s32.totalorder %s55, %s56
    %p65 = scmp.eq.s32.totalorder %s24, 0
    %p66 = por %p64, %p65
    %p67 = scmp.ne.s32.totalorder %s55, %s56
    %p68 = scmp.eq.s32.totalorder %s25, 1
    %p69 = por %p67, %p68
    %p71 = scmp.ne.s32.totalorder %s56, %s70
    %p72 = scmp.eq.s32.totalorder %s25, 0
    %p73 = por %p71, %p72
    %s75 = sadd.s32 %s74, 1
    %p78 = scmp.eq.s32.totalorder %s19, 1
    %p79 = scmp.ne.s32.totalorder %s74, %s76
    %p80 = scmp.eq.s32.totalorder %s19, 0
    %p81 = por %p79, %p80
    %p82 = scmp.ne.s32.totalorder %s74, %s76
    %p83 = scmp.eq.s32.totalorder %s24, 1
    %p84 = por %p82, %p83
    %p85 = scmp.ne.s32.totalorder %s76, %s77
    %p86 = scmp.eq.s32.totalorder %s24, 0
    %p87 = por %p85, %p86
    %p88 = scmp.ne.s32.totalorder %s76, %s77
    %p89 = scmp.eq.s32.totalorder %s25, 1
    %p90 = por %p88, %p89
    %p92 = scmp.ne.s32.totalorder %s77, %s91
    %p93 = scmp.eq.s32.totalorder %s25, 0
    %p94 = por %p92, %p93
    %s96 = sadd.s32 %s95, 1
    %p99 = scmp.eq.s32.totalorder %s19, 1
    %p100 = scmp.ne.s32.totalorder %s95, %s97
    %p101 = scmp.eq.s32.totalorder %s19, 0
    %p102 = por %p100, %p101
    %p103 = scmp.ne.s32.totalorder %s95, %s97
    %p104 = scmp.eq.s32.totalorder %s24, 1
    %p105 = por %p103, %p104
    %p106 = scmp.ne.s32.totalorder %s97, %s98
    %p107 = scmp.eq.s32.totalorder %s24, 0
    %p108 = por %p106, %p107
    %p109 = scmp.ne.s32.totalorder %s97, %s98
    %p110 = scmp.eq.s32.totalorder %s25, 1
    %p111 = por %p109, %p110
    %p113 = scmp.ne.s32.totalorder %s98, %s112
    %p114 = scmp.eq.s32.totalorder %s25, 0
    %p115 = por %p113, %p114
    %s117 = sadd.s32 %s116, 1
    %p120 = scmp.eq.s32.totalorder %s19, 1
    %p121 = scmp.ne.s32.totalorder %s116, %s118
    %p122 = scmp.eq.s32.totalorder %s19, 0
    %p123 = por %p121, %p122
    %p124 = scmp.ne.s32.totalorder %s116, %s118
    %p125 = scmp.eq.s32.totalorder %s24, 1
    %p126 = por %p124, %p125
    %p127 = scmp.ne.s32.totalorder %s118, %s119
    %p128 = scmp.eq.s32.totalorder %s24, 0
    %p129 = por %p127, %p128
    %p130 = scmp.ne.s32.totalorder %s118, %s119
    %p131 = scmp.eq.s32.totalorder %s25, 1
    %p132 = por %p130, %p131
    %p134 = scmp.ne.s32.totalorder %s119, %s133
    %p135 = scmp.eq.s32.totalorder %s25, 0
    %p136 = por %p134, %p135
    %s138 = sadd.s32 %s137, 1
    %p141 = scmp.eq.s32.totalorder %s19, 1
    %p142 = scmp.ne.s32.totalorder %s137, %s139
    %p143 = scmp.eq.s32.totalorder %s19, 0
    %p144 = por %p142, %p143
    %p145 = scmp.ne.s32.totalorder %s137, %s139
    %p146 = scmp.eq.s32.totalorder %s24, 1
    %p147 = por %p145, %p146
    %p148 = scmp.ne.s32.totalorder %s139, %s140
    %p149 = scmp.eq.s32.totalorder %s24, 0
    %p150 = por %p148, %p149
    %p151 = scmp.ne.s32.totalorder %s139, %s140
    %p152 = scmp.eq.s32.totalorder %s25, 1
    %p153 = por %p151, %p152
    %p155 = scmp.ne.s32.totalorder %s140, %s154
    %p156 = scmp.eq.s32.totalorder %s25, 0
    %p157 = por %p155, %p156
    %s159 = sadd.s32 %s158, 1
    %p162 = scmp.eq.s32.totalorder %s19, 1
    %p163 = scmp.ne.s32.totalorder %s158, %s160
    %p164 = scmp.eq.s32.totalorder %s19, 0
    %p165 = por %p163, %p164
    %p166 = scmp.ne.s32.totalorder %s158, %s160
    %p167 = scmp.eq.s32.totalorder %s24, 1
    %p168 = por %p166, %p167
    %p169 = scmp.ne.s32.totalorder %s160, %s161
    %p170 = scmp.eq.s32.totalorder %s24, 0
    %p171 = por %p169, %p170
    %p172 = scmp.ne.s32.totalorder %s160, %s161
    %p173 = scmp.eq.s32.totalorder %s25, 1
    %p174 = por %p172, %p173
    %p176 = scmp.ne.s32.totalorder %s161, %s175
    %p177 = scmp.eq.s32.totalorder %s25, 0
    %p178 = por %p176, %p177
    %s180 = sadd.s32 %s179, 1
    %p183 = scmp.eq.s32.totalorder %s19, 1
    %p184 = scmp.ne.s32.totalorder %s179, %s181
    %p185 = scmp.eq.s32.totalorder %s19, 0
    %p186 = por %p184, %p185
    %p187 = scmp.ne.s32.totalorder %s179, %s181
    %p188 = scmp.eq.s32.totalorder %s24, 1
    %p189 = por %p187, %p188
    %p190 = scmp.ne.s32.totalorder %s181, %s182
    %p191 = scmp.eq.s32.totalorder %s24, 0
    %p192 = por %p190, %p191
    %p193 = scmp.ne.s32.totalorder %s181, %s182
    %p194 = scmp.eq.s32.totalorder %s25, 1
    %p195 = por %p193, %p194
    %p197 = scmp.ne.s32.totalorder %s182, %s196
    %p198 = scmp.eq.s32.totalorder %s25, 0
    %p199 = por %p197, %p198
    %s201 = sadd.s32 %s200, 1
    %p204 = scmp.eq.s32.totalorder %s19, 1
    %p205 = scmp.ne.s32.totalorder %s200, %s202
    %p206 = scmp.eq.s32.totalorder %s19, 0
    %p207 = por %p205, %p206
    %p208 = scmp.ne.s32.totalorder %s200, %s202
    %p209 = scmp.eq.s32.totalorder %s24, 1
    %p210 = por %p208, %p209
    %p211 = scmp.ne.s32.totalorder %s202, %s203
    %p212 = scmp.eq.s32.totalorder %s24, 0
    %p213 = por %p211, %p212
    %p214 = scmp.ne.s32.totalorder %s202, %s203
    %p215 = scmp.eq.s32.totalorder %s25, 1
    %p216 = por %p214, %p215
    %p218 = scmp.ne.s32.totalorder %s203, %s217
    %p219 = scmp.eq.s32.totalorder %s25, 0
    %p220 = por %p218, %p219
    %s222 = sadd.s32 %s221, 1
    %p225 = scmp.eq.s32.totalorder %s19, 1
    %p226 = scmp.ne.s32.totalorder %s221, %s223
    %p227 = scmp.eq.s32.totalorder %s19, 0
    %p228 = por %p226, %p227
    %p229 = scmp.ne.s32.totalorder %s221, %s223
    %p230 = scmp.eq.s32.totalorder %s24, 1
    %p231 = por %p229, %p230
    %p232 = scmp.ne.s32.totalorder %s223, %s224
    %p233 = scmp.eq.s32.totalorder %s24, 0
    %p234 = por %p232, %p233
    %p235 = scmp.ne.s32.totalorder %s223, %s224
    %p236 = scmp.eq.s32.totalorder %s25, 1
    %p237 = por %p235, %p236
    %p239 = scmp.ne.s32.totalorder %s224, %s238
    %p240 = scmp.eq.s32.totalorder %s25, 0
    %p241 = por %p239, %p240
    %s243 = sadd.s32 %s242, 1
    %p246 = scmp.eq.s32.totalorder %s19, 1
    %p247 = scmp.ne.s32.totalorder %s242, %s244
    %p248 = scmp.eq.s32.totalorder %s19, 0
    %p249 = por %p247, %p248
    %p250 = scmp.ne.s32.totalorder %s242, %s244
    %p251 = scmp.eq.s32.totalorder %s24, 1
    %p252 = por %p250, %p251
    %p253 = scmp.ne.s32.totalorder %s244, %s245
    %p254 = scmp.eq.s32.totalorder %s24, 0
    %p255 = por %p253, %p254
    %p256 = scmp.ne.s32.totalorder %s244, %s245
    %p257 = scmp.eq.s32.totalorder %s25, 1
    %p258 = por %p256, %p257
    %p260 = scmp.ne.s32.totalorder %s245, %s259
    %p261 = scmp.eq.s32.totalorder %s25, 0
    %p262 = por %p260, %p261
    %s264 = sadd.s32 %s263, 1
    %p267 = scmp.eq.s32.totalorder %s19, 1
    %p268 = scmp.ne.s32.totalorder %s263, %s265
    %p269 = scmp.eq.s32.totalorder %s19, 0
    %p270 = por %p268, %p269
    %p271 = scmp.ne.s32.totalorder %s263, %s265
    %p272 = scmp.eq.s32.totalorder %s24, 1
    %p273 = por %p271, %p272
    %p274 = scmp.ne.s32.totalorder %s265, %s266
    %p275 = scmp.eq.s32.totalorder %s24, 0
    %p276 = por %p274, %p275
    %p277 = scmp.ne.s32.totalorder %s265, %s266
    %p278 = scmp.eq.s32.totalorder %s25, 1
    %p279 = por %p277, %p278
    %p281 = scmp.ne.s32.totalorder %s266, %s280
    %p282 = scmp.eq.s32.totalorder %s25, 0
    %p283 = por %p281, %p282
    %s285 = sadd.s32 %s284, 1
    %p288 = scmp.eq.s32.totalorder %s19, 1
    %p289 = scmp.ne.s32.totalorder %s284, %s286
    %p290 = scmp.eq.s32.totalorder %s19, 0
    %p291 = por %p289, %p290
    %p292 = scmp.ne.s32.totalorder %s284, %s286
    %p293 = scmp.eq.s32.totalorder %s24, 1
    %p294 = por %p292, %p293
    %p295 = scmp.ne.s32.totalorder %s286, %s287
    %p296 = scmp.eq.s32.totalorder %s24, 0
    %p297 = por %p295, %p296
    %p298 = scmp.ne.s32.totalorder %s286, %s287
    %p299 = scmp.eq.s32.totalorder %s25, 1
    %p300 = por %p298, %p299
    %p302 = scmp.ne.s32.totalorder %s287, %s301
    %p303 = scmp.eq.s32.totalorder %s25, 0
    %p304 = por %p302, %p303
    %s305 = ssub.s32 %s19, %s26
    %p306 = scmp.eq.s32.totalorder %s305, 0
    %s308 = sadd.s32 %s307, 1
    %s309 = scalar_select %p306, %s307, %s308
    %p312 = pneg %p306
    %p313 = scmp.eq.s32.totalorder %s19, 1
    %p314 = por %p312, %p313
    %p315 = scmp.ne.s32.totalorder %s307, %s310
    %p316 = scmp.eq.s32.totalorder %s19, 0
    %p317 = por %p315, %p316
    %p318 = scmp.ne.s32.totalorder %s307, %s310
    %p319 = scmp.eq.s32.totalorder %s24, 1
    %p320 = por %p318, %p319
    %p321 = scmp.ne.s32.totalorder %s310, %s311
    %p322 = scmp.eq.s32.totalorder %s24, 0
    %p323 = por %p321, %p322
    %p324 = scmp.ne.s32.totalorder %s310, %s311
    %p325 = scmp.eq.s32.totalorder %s25, 1
    %p326 = por %p324, %p325
    %p328 = scmp.ne.s32.totalorder %s311, %s327
    %p329 = scmp.eq.s32.totalorder %s25, 0
    %p330 = por %p328, %p329
    %p331 = scmp.le.s32.totalorder 1, %s19
    %p332 = scmp.lt.s32.totalorder %s19, 3
    %p333 = pnand %p331, %p332
    %p334 = pneg %p333
    // Predicated region
    $region9: #{forward.5} parent=5 // pred_check
      _
    $region10: #{forward.5} parent=5 // pred_check_branch
      %336 = sbr.rel (%p333) target = $region12
    $region11: #{forward.5} parent=5 // pred_region
      %s337 = ssub.s32 %s19, 1
      // Predicated region
      $region13: #{forward.5} parent=11 // pred_check
        %p338 = pneg %p66
      $region14: #{forward.5} parent=11 // pred_check_branch
        %340 = sbr.rel (%p338) target = $region16
      $region15: #{forward.5} parent=11 // pred_region
        _
      $region16: #{forward.5} parent=11 // pred_fallthru
        _
      // Predicated region
      $region17: #{forward.5} parent=11 // pred_check
        %p341 = pneg %p87
      $region18: #{forward.5} parent=11 // pred_check_branch
        %343 = sbr.rel (%p341) target = $region20
      $region19: #{forward.5} parent=11 // pred_region
        _
      $region20: #{forward.5} parent=11 // pred_fallthru
        _
      // Predicated region
      $region21: #{forward.5} parent=11 // pred_check
        %p344 = pneg %p108
      $region22: #{forward.5} parent=11 // pred_check_branch
        %346 = sbr.rel (%p344) target = $region24
      $region23: #{forward.5} parent=11 // pred_region
        _
      $region24: #{forward.5} parent=11 // pred_fallthru
        _
      // Predicated region
      $region25: #{forward.5} parent=11 // pred_check
        %p347 = pneg %p129
      $region26: #{forward.5} parent=11 // pred_check_branch
        %349 = sbr.rel (%p347) target = $region28
      $region27: #{forward.5} parent=11 // pred_region
        _
      $region28: #{forward.5} parent=11 // pred_fallthru
        _
      // Predicated region
      $region29: #{forward.5} parent=11 // pred_check
        %p350 = pneg %p150
      $region30: #{forward.5} parent=11 // pred_check_branch
        %352 = sbr.rel (%p350) target = $region32
      $region31: #{forward.5} parent=11 // pred_region
        _
      $region32: #{forward.5} parent=11 // pred_fallthru
        _
      // Predicated region
      $region33: #{forward.5} parent=11 // pred_check
        %p353 = pneg %p171
      $region34: #{forward.5} parent=11 // pred_check_branch
        %355 = sbr.rel (%p353) target = $region36
      $region35: #{forward.5} parent=11 // pred_region
        _
      $region36: #{forward.5} parent=11 // pred_fallthru
        _
      // Predicated region
      $region37: #{forward.5} parent=11 // pred_check
        %p356 = pneg %p192
      $region38: #{forward.5} parent=11 // pred_check_branch
        %358 = sbr.rel (%p356) target = $region40
      $region39: #{forward.5} parent=11 // pred_region
        _
      $region40: #{forward.5} parent=11 // pred_fallthru
        _
      // Predicated region
      $region41: #{forward.5} parent=11 // pred_check
        %p359 = pneg %p213
      $region42: #{forward.5} parent=11 // pred_check_branch
        %361 = sbr.rel (%p359) target = $region44
      $region43: #{forward.5} parent=11 // pred_region
        _
      $region44: #{forward.5} parent=11 // pred_fallthru
        _
      // Predicated region
      $region45: #{forward.5} parent=11 // pred_check
        %p362 = pneg %p234
      $region46: #{forward.5} parent=11 // pred_check_branch
        %364 = sbr.rel (%p362) target = $region48
      $region47: #{forward.5} parent=11 // pred_region
        _
      $region48: #{forward.5} parent=11 // pred_fallthru
        _
      // Predicated region
      $region49: #{forward.5} parent=11 // pred_check
        %p365 = pneg %p255
      $region50: #{forward.5} parent=11 // pred_check_branch
        %367 = sbr.rel (%p365) target = $region52
      $region51: #{forward.5} parent=11 // pred_region
        _
      $region52: #{forward.5} parent=11 // pred_fallthru
        _
      // Predicated region
      $region53: #{forward.5} parent=11 // pred_check
        %p368 = pneg %p276
      $region54: #{forward.5} parent=11 // pred_check_branch
        %370 = sbr.rel (%p368) target = $region56
      $region55: #{forward.5} parent=11 // pred_region
        _
      $region56: #{forward.5} parent=11 // pred_fallthru
        _
      // Predicated region
      $region57: #{forward.5} parent=11 // pred_check
        %p371 = pneg %p297
      $region58: #{forward.5} parent=11 // pred_check_branch
        %373 = sbr.rel (%p371) target = $region60
      $region59: #{forward.5} parent=11 // pred_region
        _
      $region60: #{forward.5} parent=11 // pred_fallthru
        _
    $region12: #{forward.5} parent=5 // pred_fallthru
      _
    %p374 = scmp.lt.s32.totalorder %s19, 2
    // Predicated region
    $region61: #{forward.5} parent=5 // pred_check
      %p375 = pneg %p374
    $region62: #{forward.5} parent=5 // pred_check_branch
      %377 = sbr.rel (%p375) target = $region64
    $region63: #{forward.5} parent=5 // pred_region
      // Predicated region
      $region65: #{forward.5} parent=63 // pred_check
        %p378 = pneg %p39
      $region66: #{forward.5} parent=63 // pred_check_branch
        %380 = sbr.rel (%p378) target = $region68
      $region67: #{forward.5} parent=63 // pred_region
        %p381 = scmp.lt.s32.totalorder %s19, 1
        %s382 = scalar_select %p381, %s19, 1
        %s383 = smul.addr %s382, 2
        %s384 = smul.addr %s383, 4
        %s385 = scalar_lea.vmem %s0, %s384
      $region68: #{forward.5} parent=63 // pred_fallthru
        _
    $region64: #{forward.5} parent=5 // pred_fallthru
      _
    %p386 = scmp.le.s32.totalorder 1, %s19
    %p387 = scmp.lt.s32.totalorder %s19, 3
    %p388 = pnand %p386, %p387
    %p389 = pneg %p388
    // Predicated region
    $region69: #{forward.5} parent=5 // pred_check
      _
    $region70: #{forward.5} parent=5 // pred_check_branch
      %391 = sbr.rel (%p388) target = $region72
    $region71: #{forward.5} parent=5 // pred_region
      %s392 = ssub.s32 %s19, 1
      %p393 = scmp.lt.s32.totalorder %s24, 1
      %s394 = scalar_select %p393, %s24, 1
      %s395 = smul.addr %s394, 2
      %s396 = smul.addr %s395, 4
      %s397 = scalar_lea.vmem %s0, %s396
      %p398 = pneg %p45
      %p399 = pneg %p42
      %p400 = pneg %p66
      %p401 = pneg %p63
      %p402 = pneg %p87
      %p403 = pneg %p84
      %p404 = pneg %p108
      %p405 = pneg %p105
      %p406 = pneg %p129
      %p407 = pneg %p126
      %p408 = pneg %p150
      %p409 = pneg %p147
      %p410 = pneg %p171
      %p411 = pneg %p168
      %p412 = pneg %p192
      %p413 = pneg %p189
      %p414 = pneg %p213
      %p415 = pneg %p210
      %p416 = pneg %p234
      %p417 = pneg %p231
      %p418 = pneg %p255
      %p419 = pneg %p252
      %p420 = pneg %p276
      %p421 = pneg %p273
      %p422 = pneg %p297
      %p423 = pneg %p294
      %p424 = pneg %p323
      %p425 = pneg %p320
      %p426 = scmp.lt.s32.totalorder %s24, 1
      %s427 = scalar_select %p426, %s24, 1
      %s428 = smul.addr %s427, 2
      %s429 = smul.addr %s428, 4
      %s430 = scalar_lea.vmem %s13, %s429
      %p431 = scmp.lt.s32.totalorder %s24, 1
      %s432 = scalar_select %p431, %s24, 1
      %s433 = smul.addr %s432, 2
      %s434 = smul.addr %s433, 4
      %s435 = scalar_lea.vmem %s0, %s434
      %p436 = scmp.lt.s32.totalorder %s24, 1
      %s437 = scalar_select %p436, %s24, 1
      %s438 = smul.addr %s437, 2
      %s439 = smul.addr %s438, 4
      %s440 = scalar_lea.vmem %s13, %s439
      %v442 = vld [vmem:[%s435] sm:$0xf]
      %v443 = vld [vmem:[%s435 + $0x4] sm:$0xf]
      %v444 = vunpack.c.l.bf16 %v442
      %v445 = vunpack.c.l.bf16 %v443
      %v446 = vld [vmem:[%s1] sm:$0x1]
      %v447 = vld [vmem:[%s2] sm:$0x1]
      %448 = vadd.xlane.f32.xlu0 %v444
      %v449 = vpop.xlane.xlu0 %448
      %450 = vadd.xlane.f32.xlu0 %v445
      %v451 = vpop.xlane.xlu0 %450
      %v452 = vmul.f32 %v444, %v444
      %v453 = vmul.f32 %v445, %v445
      %454 = vadd.xlane.f32.xlu0 %v452
      %v455 = vpop.xlane.xlu0 %454
      %456 = vadd.xlane.f32.xlu0 %v453
      %v457 = vpop.xlane.xlu0 %456
      %v458 = vmul.f32 %v449, 0.03125
      %v459 = vmul.f32 %v451, 0.03125
      %v460 = vmul.f32 %v455, 0.03125
      %v461 = vmul.f32 %v457, 0.03125
      %v462 = vmul.f32 %v458, %v458
      %v463 = vmul.f32 %v459, %v459
      %v464 = vsub.f32 %v460, %v462
      %v465 = vsub.f32 %v461, %v463
      %v466 = vsub.f32 %v444, %v458
      %v467 = vsub.f32 %v445, %v459
      %v468 = vadd.f32 %v464, 1e-05
      %v469 = vadd.f32 %v465, 1e-05
      %v470 = vrsqrt.pop %v468
      %v471 = vrsqrt.pop %v469
      %v472 = vmul.f32 %v466, %v470
      %v473 = vmul.f32 %v467, %v471
      %v475 = vlaneseq
      %v476 = vshrl.u32 %v475, 7
      %v477 = vsub.s32 0, %v476
      %v478 = vrot.slane %v446, %v477
      %v480 = vmul.f32 %v472, %v478
      %v481 = vmul.f32 %v473, %v478
      %v483 = vlaneseq
      %v484 = vshrl.u32 %v483, 7
      %v485 = vsub.s32 0, %v484
      %v486 = vrot.slane %v447, %v485
      %v488 = vadd.f32 %v480, %v486
      %v489 = vadd.f32 %v481, %v486
      %v490 = vpack.c.bf16 %v489, %v488
      %v491 = vld [vmem:[%s3] sm:$0xff]
      %v492 = vld [vmem:[%s3 + $0x8] sm:$0xf]
      %v493 = vld [vmem:[%s3 + $0xc] sm:$0xff]
      %v494 = vld [vmem:[%s3 + $0x14] sm:$0xf]
      %v495 = vld [vmem:[%s3 + $0x18] sm:$0xff]
      %v496 = vld [vmem:[%s3 + $0x20] sm:$0xf]
      %v497 = vld [vmem:[%s3 + $0x24] sm:$0xff]
      %v498 = vld [vmem:[%s3 + $0x2c] sm:$0xf]
      %v499 = vld [vmem:[%s3 + $0x30] sm:$0xff]
      %v500 = vld [vmem:[%s3 + $0x38] sm:$0xf]
      %v501 = vld [vmem:[%s3 + $0x3c] sm:$0xff]
      %v502 = vld [vmem:[%s3 + $0x44] sm:$0xf]
      %v503 = vld [vmem:[%s3 + $0x48] sm:$0xff]
      %v504 = vld [vmem:[%s3 + $0x50] sm:$0xf]
      %v505 = vld [vmem:[%s3 + $0x54] sm:$0xff]
      %v506 = vld [vmem:[%s3 + $0x5c] sm:$0xf]
      %v507 = vld [vmem:[%s3 + $0x60] sm:$0xff]
      %v508 = vld [vmem:[%s3 + $0x68] sm:$0xf]
      %v509 = vld [vmem:[%s3 + $0x6c] sm:$0xff]
      %v510 = vld [vmem:[%s3 + $0x74] sm:$0xf]
      %v511 = vld [vmem:[%s3 + $0x78] sm:$0xff]
      %v512 = vld [vmem:[%s3 + $0x80] sm:$0xf]
      %v513 = vld [vmem:[%s3 + $0x84] sm:$0xff]
      %v514 = vld [vmem:[%s3 + $0x8c] sm:$0xf]
      %v515 = vld [vmem:[%s3 + $0x90] sm:$0xff]
      %v516 = vld [vmem:[%s3 + $0x98] sm:$0xf]
      %v517 = vld [vmem:[%s3 + $0x9c] sm:$0xff]
      %v518 = vld [vmem:[%s3 + $0xa4] sm:$0xf]
      %v519 = vld [vmem:[%s3 + $0xa8] sm:$0xff]
      %v520 = vld [vmem:[%s3 + $0xb0] sm:$0xf]
      %v521 = vld [vmem:[%s3 + $0xb4] sm:$0xff]
      %v522 = vld [vmem:[%s3 + $0xbc] sm:$0xf]
      %v523 = vld [vmem:[%s4] sm:$0x7]
      %v525 = vlaneseq
      %v526 = vshrl.u32 %v525, 7
      %v527 = vsub.s32 0, %v526
      %v528 = vrot.slane %v523, %v527
      %v529 = vlaneseq
      %v530 = vshrl.u32 %v529, 7
      %v531 = vsub.s32 1, %v530
      %v532 = vrot.slane %v523, %v531
      %v533 = vlaneseq
      %v534 = vshrl.u32 %v533, 7
      %v535 = vsub.s32 2, %v534
      %v536 = vrot.slane %v523, %v535
      %v572 = vunpack.c.l.b16 %v491
      %v573 = vunpack.c.h.b16 %v491
      %v574 = vunpack.c.l.b16 %v492
      %v575 = vunpack.c.l.b16 %v493
      %v576 = vunpack.c.h.b16 %v493
      %v577 = vunpack.c.l.b16 %v494
      %v578 = vunpack.c.l.b16 %v495
      %v579 = vunpack.c.h.b16 %v495
      %v580 = vunpack.c.l.b16 %v496
      %v581 = vunpack.c.l.b16 %v497
      %v582 = vunpack.c.h.b16 %v497
      %v583 = vunpack.c.l.b16 %v498
      %v584 = vunpack.c.l.b16 %v499
      %v585 = vunpack.c.h.b16 %v499
      %v586 = vunpack.c.l.b16 %v500
      %v587 = vunpack.c.l.b16 %v501
      %v588 = vunpack.c.h.b16 %v501
      %v589 = vunpack.c.l.b16 %v502
      %v590 = vunpack.c.l.b16 %v503
      %v591 = vunpack.c.h.b16 %v503
      %v592 = vunpack.c.l.b16 %v504
      %v593 = vunpack.c.l.b16 %v505
      %v594 = vunpack.c.h.b16 %v505
      %v595 = vunpack.c.l.b16 %v506
      %v596 = vunpack.c.l.b16 %v507
      %v597 = vunpack.c.h.b16 %v507
      %v598 = vunpack.c.l.b16 %v508
      %v599 = vunpack.c.l.b16 %v509
      %v600 = vunpack.c.h.b16 %v509
      %v601 = vunpack.c.l.b16 %v510
      %v602 = vunpack.c.l.b16 %v511
      %v603 = vunpack.c.h.b16 %v511
      %v604 = vunpack.c.l.b16 %v512
      %v605 = vunpack.c.l.b16 %v513
      %v606 = vunpack.c.h.b16 %v513
      %v607 = vunpack.c.l.b16 %v514
      %v608 = vunpack.c.l.b16 %v515
      %v609 = vunpack.c.h.b16 %v515
      %v610 = vunpack.c.l.b16 %v516
      %v611 = vunpack.c.l.b16 %v517
      %v612 = vunpack.c.h.b16 %v517
      %v613 = vunpack.c.l.b16 %v518
      %v614 = vunpack.c.l.b16 %v519
      %v615 = vunpack.c.h.b16 %v519
      %v616 = vunpack.c.l.b16 %v520
      %v617 = vunpack.c.l.b16 %v521
      %v618 = vunpack.c.h.b16 %v521
      %v619 = vunpack.c.l.b16 %v522
      %v620 = vpack.c.b16 %v575, %v572
      %v621 = vpack.c.b16 %v576, %v573
      %v622 = vpack.c.b16 %v577, %v574
      %v623 = vpack.c.b16 %v581, %v578
      %v624 = vpack.c.b16 %v582, %v579
      %v625 = vpack.c.b16 %v583, %v580
      %v626 = vpack.c.b16 %v587, %v584
      %v627 = vpack.c.b16 %v588, %v585
      %v628 = vpack.c.b16 %v589, %v586
      %v629 = vpack.c.b16 %v593, %v590
      %v630 = vpack.c.b16 %v594, %v591
      %v631 = vpack.c.b16 %v595, %v592
      %v632 = vpack.c.b16 %v599, %v596
      %v633 = vpack.c.b16 %v600, %v597
      %v634 = vpack.c.b16 %v601, %v598
      %v635 = vpack.c.b16 %v605, %v602
      %v636 = vpack.c.b16 %v606, %v603
      %v637 = vpack.c.b16 %v607, %v604
      %v638 = vpack.c.b16 %v611, %v608
      %v639 = vpack.c.b16 %v612, %v609
      %v640 = vpack.c.b16 %v613, %v610
      %v641 = vpack.c.b16 %v617, %v614
      %v642 = vpack.c.b16 %v618, %v615
      %v643 = vpack.c.b16 %v619, %v616
      %668 = vmatprep.subr.bf16.mxu0 %v621
      %669 = vmatpush1.bf16.msra.mxu0 %v620
      %670 = vmatprep.subr.bf16.mxu0 %v624
      %671 = vmatpush1.bf16.msra.mxu0 %v623
      %672 = vmatprep.subr.bf16.mxu0 %v627
      %673 = vmatpush1.bf16.msra.mxu0 %v626
      %674 = vmatprep.subr.bf16.mxu0 %v630
      %675 = vmatpush1.bf16.msra.mxu0 %v629
      %676 = vmatprep.subr.bf16.mxu0 %v633
      %677 = vmatpush1.bf16.msra.mxu0 %v632
      %678 = vmatprep.subr.bf16.mxu0 %v636
      %679 = vmatpush1.bf16.msra.mxu0 %v635
      %680 = vmatprep.subr.bf16.mxu0 %v639
      %681 = vmatpush1.bf16.msra.mxu0 %v638
      %682 = vmatprep.subr.bf16.mxu0 %v642
      %683 = vmatpush1.bf16.msra.mxu0 %v641
      %684 = vmatprep.subr.bf16.mxu0 0
      %685 = vmatpush1.bf16.msra.mxu0 0
      %686 = vmatprep.subr.bf16.mxu0 0
      %687 = vmatpush1.bf16.msra.mxu0 0
      %688 = vmatprep.subr.bf16.mxu0 0
      %689 = vmatpush1.bf16.msra.mxu0 0
      %690 = vmatprep.subr.bf16.mxu0 0
      %691 = vmatpush1.bf16.msra.mxu0 0
      %692 = vmatprep.subr.bf16.mxu0 0
      %693 = vmatpush1.bf16.msra.mxu0 0
      %694 = vmatprep.subr.bf16.mxu0 0
      %695 = vmatpush1.bf16.msra.mxu0 0
      %696 = vmatprep.subr.bf16.mxu0 0
      %697 = vmatpush1.bf16.msra.mxu0 0
      %698 = vmatprep.subr.bf16.mxu0 0
      %699 = vmatpush1.bf16.msra.mxu0 0
      %700 = vmatprep.mubr.bf16.mxu0 0
      %701 = vmatmul.mubr.bf16.gmra.mrb[0].mxu0 %v490
      %v702 = vpop.f32.mrb[0].mxu0
      %v703 = vadd.f32 %v528, %v702
      %v704 = vpop.f32.mrb[0].mxu0
      %v705 = vadd.f32 %v532, %v704
      %v706 = vpop.f32.mrb[0].mxu0
      %v707 = vadd.f32 %v528, %v706
      %v708 = vpop.f32.mrb[0].mxu0
      %v709 = vadd.f32 %v532, %v708
      %710 = vdwg.mxu0
      %711 = vmatprep.subr.bf16.mxu0 0
      %712 = vmatpush1.bf16.msra.mxu0 %v622
      %713 = vmatprep.subr.bf16.mxu0 0
      %714 = vmatpush1.bf16.msra.mxu0 %v625
      %715 = vmatprep.subr.bf16.mxu0 0
      %716 = vmatpush1.bf16.msra.mxu0 %v628
      %717 = vmatprep.subr.bf16.mxu0 0
      %718 = vmatpush1.bf16.msra.mxu0 %v631
      %719 = vmatprep.subr.bf16.mxu0 0
      %720 = vmatpush1.bf16.msra.mxu0 %v634
      %721 = vmatprep.subr.bf16.mxu0 0
      %722 = vmatpush1.bf16.msra.mxu0 %v637
      %723 = vmatprep.subr.bf16.mxu0 0
      %724 = vmatpush1.bf16.msra.mxu0 %v640
      %725 = vmatprep.subr.bf16.mxu0 0
      %726 = vmatpush1.bf16.msra.mxu0 %v643
      %727 = vmatprep.subr.bf16.mxu0 0
      %728 = vmatpush1.bf16.msra.mxu0 0
      %729 = vmatprep.subr.bf16.mxu0 0
      %730 = vmatpush1.bf16.msra.mxu0 0
      %731 = vmatprep.subr.bf16.mxu0 0
      %732 = vmatpush1.bf16.msra.mxu0 0
      %733 = vmatprep.subr.bf16.mxu0 0
      %734 = vmatpush1.bf16.msra.mxu0 0
      %735 = vmatprep.subr.bf16.mxu0 0
      %736 = vmatpush1.bf16.msra.mxu0 0
      %737 = vmatprep.subr.bf16.mxu0 0
      %738 = vmatpush1.bf16.msra.mxu0 0
      %739 = vmatprep.subr.bf16.mxu0 0
      %740 = vmatpush1.bf16.msra.mxu0 0
      %741 = vmatprep.subr.bf16.mxu0 0
      %742 = vmatpush1.bf16.msra.mxu0 0
      %743 = vmatprep.mubr.bf16.mxu0 0
      %744 = vmatmul.mubr.bf16.gmra.mrb[0].mxu0 %v490
      %v745 = vpop.f32.mrb[0].mxu0
      %v746 = vadd.f32 %v536, %v745
      %v747 = vpop.f32.mrb[0].mxu0
      %v748 = vpop.f32.mrb[0].mxu0
      %v749 = vadd.f32 %v536, %v748
      %v750 = vpop.f32.mrb[0].mxu0
      %751 = vdwg.mxu0
      %v752 = vmul.f32 %v703, 0.35355338
      %v753 = vmul.f32 %v707, 0.35355338
      %756 = vrot.lane.b32.xlu0 %v752, 96
      %v757 = vpop.permute.xlu0 %756
      %758 = vrot.lane.b32.xlu0 %v753, 96
      %v759 = vpop.permute.xlu0 %758
      %762 = vrot.lane.b32.xlu0 %v752, 64
      %v763 = vpop.permute.xlu0 %762
      %764 = vrot.lane.b32.xlu0 %v753, 64
      %v765 = vpop.permute.xlu0 %764
      %768 = vrot.lane.b32.xlu0 %v752, 32
      %v769 = vpop.permute.xlu0 %768
      %770 = vrot.lane.b32.xlu0 %v753, 32
      %v771 = vpop.permute.xlu0 %770
      %v774 = vcombine.low %v752, %v763
      %v775 = vcombine.high %v752, %v763
      %v777 = vunpack.c.l.s4 1983009808
      %v778 = vunpack.c.0.s8 %v777
      %v779 = vlaneseq
      %v780 = vshrl.u32 %v779, 7
      %v781 = vsub.s32 %v778, %v780
      %v782 = vrot.slane %v774, %v781
      %v784 = vunpack.c.l.s4 1983009808
      %v785 = vunpack.c.0.s8 %v784
      %v786 = vlaneseq
      %v787 = vshrl.u32 %v786, 7
      %v788 = vsub.s32 %v785, %v787
      %v789 = vrot.slane %v775, %v788
      %v790 = vcombine.low %v757, %v769
      %v791 = vcombine.high %v757, %v769
      %v793 = vunpack.c.l.s4 1983009808
      %v794 = vunpack.c.0.s8 %v793
      %v795 = vlaneseq
      %v796 = vshrl.u32 %v795, 7
      %v797 = vsub.s32 %v794, %v796
      %v798 = vrot.slane %v790, %v797
      %v800 = vunpack.c.l.s4 1983009808
      %v801 = vunpack.c.0.s8 %v800
      %v802 = vlaneseq
      %v803 = vshrl.u32 %v802, 7
      %v804 = vsub.s32 %v801, %v803
      %v805 = vrot.slane %v791, %v804
      %v806 = vcombine.low %v782, %v798
      %v807 = vcombine.high %v782, %v798
      %v809 = vunpack.c.l.s4 1934713408
      %v810 = vunpack.c.0.s8 %v809
      %v811 = vlaneseq
      %v812 = vshrl.u32 %v811, 7
      %v813 = vsub.s32 %v810, %v812
      %v814 = vrot.slane %v806, %v813
      %v816 = vunpack.c.l.s4 1934713408
      %v817 = vunpack.c.0.s8 %v816
      %v818 = vlaneseq
      %v819 = vshrl.u32 %v818, 7
      %v820 = vsub.s32 %v817, %v819
      %v821 = vrot.slane %v807, %v820
      %v822 = vcombine.low %v789, %v805
      %v823 = vcombine.high %v789, %v805
      %v825 = vunpack.c.l.s4 1934713408
      %v826 = vunpack.c.0.s8 %v825
      %v827 = vlaneseq
      %v828 = vshrl.u32 %v827, 7
      %v829 = vsub.s32 %v826, %v828
      %v830 = vrot.slane %v822, %v829
      %v832 = vunpack.c.l.s4 1934713408
      %v833 = vunpack.c.0.s8 %v832
      %v834 = vlaneseq
      %v835 = vshrl.u32 %v834, 7
      %v836 = vsub.s32 %v833, %v835
      %v837 = vrot.slane %v823, %v836
      %v838 = vcombine.high %v814, 0.0
      %v839 = vcombine.high %v821, 0.0
      %v840 = vcombine.high %v830, 0.0
      %v841 = vcombine.high %v837, 0.0
      %v842 = vcombine.low %v753, %v765
      %v843 = vcombine.high %v753, %v765
      %v845 = vunpack.c.l.s4 1983009808
      %v846 = vunpack.c.0.s8 %v845
      %v847 = vlaneseq
      %v848 = vshrl.u32 %v847, 7
      %v849 = vsub.s32 %v846, %v848
      %v850 = vrot.slane %v842, %v849
      %v852 = vunpack.c.l.s4 1983009808
      %v853 = vunpack.c.0.s8 %v852
      %v854 = vlaneseq
      %v855 = vshrl.u32 %v854, 7
      %v856 = vsub.s32 %v853, %v855
      %v857 = vrot.slane %v843, %v856
      %v858 = vcombine.low %v759, %v771
      %v859 = vcombine.high %v759, %v771
      %v861 = vunpack.c.l.s4 1983009808
      %v862 = vunpack.c.0.s8 %v861
      %v863 = vlaneseq
      %v864 = vshrl.u32 %v863, 7
      %v865 = vsub.s32 %v862, %v864
      %v866 = vrot.slane %v858, %v865
      %v868 = vunpack.c.l.s4 1983009808
      %v869 = vunpack.c.0.s8 %v868
      %v870 = vlaneseq
      %v871 = vshrl.u32 %v870, 7
      %v872 = vsub.s32 %v869, %v871
      %v873 = vrot.slane %v859, %v872
      %v874 = vcombine.low %v850, %v866
      %v875 = vcombine.high %v850, %v866
      %v877 = vunpack.c.l.s4 1934713408
      %v878 = vunpack.c.0.s8 %v877
      %v879 = vlaneseq
      %v880 = vshrl.u32 %v879, 7
      %v881 = vsub.s32 %v878, %v880
      %v882 = vrot.slane %v874, %v881
      %v884 = vunpack.c.l.s4 1934713408
      %v885 = vunpack.c.0.s8 %v884
      %v886 = vlaneseq
      %v887 = vshrl.u32 %v886, 7
      %v888 = vsub.s32 %v885, %v887
      %v889 = vrot.slane %v875, %v888
      %v890 = vcombine.low %v857, %v873
      %v891 = vcombine.high %v857, %v873
      %v893 = vunpack.c.l.s4 1934713408
      %v894 = vunpack.c.0.s8 %v893
      %v895 = vlaneseq
      %v896 = vshrl.u32 %v895, 7
      %v897 = vsub.s32 %v894, %v896
      %v898 = vrot.slane %v890, %v897
      %v900 = vunpack.c.l.s4 1934713408
      %v901 = vunpack.c.0.s8 %v900
      %v902 = vlaneseq
      %v903 = vshrl.u32 %v902, 7
      %v904 = vsub.s32 %v901, %v903
      %v905 = vrot.slane %v891, %v904
      %v906 = vcombine.high %v882, 0.0
      %v907 = vcombine.high %v889, 0.0
      %v908 = vcombine.high %v898, 0.0
      %v909 = vcombine.high %v905, 0.0
      %v910 = vcombine.low %v814, %v821
      %v912 = vunpack.c.l.s4 1983009808
      %v913 = vunpack.c.0.s8 %v912
      %v914 = vlaneseq
      %v915 = vshrl.u32 %v914, 7
      %v916 = vsub.s32 %v913, %v915
      %v917 = vrot.slane %v910, %v916
      %v918 = vcombine.low %v838, %v839
      %v920 = vunpack.c.l.s4 1983009808
      %v921 = vunpack.c.0.s8 %v920
      %v922 = vlaneseq
      %v923 = vshrl.u32 %v922, 7
      %v924 = vsub.s32 %v921, %v923
      %v925 = vrot.slane %v918, %v924
      %v926 = vcombine.low %v830, %v837
      %v928 = vunpack.c.l.s4 1983009808
      %v929 = vunpack.c.0.s8 %v928
      %v930 = vlaneseq
      %v931 = vshrl.u32 %v930, 7
      %v932 = vsub.s32 %v929, %v931
      %v933 = vrot.slane %v926, %v932
      %v934 = vcombine.low %v840, %v841
      %v936 = vunpack.c.l.s4 1983009808
      %v937 = vunpack.c.0.s8 %v936
      %v938 = vlaneseq
      %v939 = vshrl.u32 %v938, 7
      %v940 = vsub.s32 %v937, %v939
      %v941 = vrot.slane %v934, %v940
      %v942 = vcombine.low %v917, %v925
      %v943 = vcombine.high %v917, %v925
      %v945 = vunpack.c.l.s4 1934713408
      %v946 = vunpack.c.0.s8 %v945
      %v947 = vlaneseq
      %v948 = vshrl.u32 %v947, 7
      %v949 = vsub.s32 %v946, %v948
      %v950 = vrot.slane %v942, %v949
      %v952 = vunpack.c.l.s4 1934713408
      %v953 = vunpack.c.0.s8 %v952
      %v954 = vlaneseq
      %v955 = vshrl.u32 %v954, 7
      %v956 = vsub.s32 %v953, %v955
      %v957 = vrot.slane %v943, %v956
      %v958 = vcombine.low %v933, %v941
      %v959 = vcombine.high %v933, %v941
      %v961 = vunpack.c.l.s4 1934713408
      %v962 = vunpack.c.0.s8 %v961
      %v963 = vlaneseq
      %v964 = vshrl.u32 %v963, 7
      %v965 = vsub.s32 %v962, %v964
      %v966 = vrot.slane %v958, %v965
      %v968 = vunpack.c.l.s4 1934713408
      %v969 = vunpack.c.0.s8 %v968
      %v970 = vlaneseq
      %v971 = vshrl.u32 %v970, 7
      %v972 = vsub.s32 %v969, %v971
      %v973 = vrot.slane %v959, %v972
      %v974 = vcombine.low %v950, %v966
      %v975 = vcombine.high %v950, %v966
      %v976 = vcombine.low %v957, %v973
      %v977 = vcombine.high %v957, %v973
      %v978 = vcombine.low %v882, %v889
      %v980 = vunpack.c.l.s4 1983009808
      %v981 = vunpack.c.0.s8 %v980
      %v982 = vlaneseq
      %v983 = vshrl.u32 %v982, 7
      %v984 = vsub.s32 %v981, %v983
      %v985 = vrot.slane %v978, %v984
      %v986 = vcombine.low %v906, %v907
      %v988 = vunpack.c.l.s4 1983009808
      %v989 = vunpack.c.0.s8 %v988
      %v990 = vlaneseq
      %v991 = vshrl.u32 %v990, 7
      %v992 = vsub.s32 %v989, %v991
      %v993 = vrot.slane %v986, %v992
      %v994 = vcombine.low %v898, %v905
      %v996 = vunpack.c.l.s4 1983009808
      %v997 = vunpack.c.0.s8 %v996
      %v998 = vlaneseq
      %v999 = vshrl.u32 %v998, 7
      %v1000 = vsub.s32 %v997, %v999
      %v1001 = vrot.slane %v994, %v1000
      %v1002 = vcombine.low %v908, %v909
      %v1004 = vunpack.c.l.s4 1983009808
      %v1005 = vunpack.c.0.s8 %v1004
      %v1006 = vlaneseq
      %v1007 = vshrl.u32 %v1006, 7
      %v1008 = vsub.s32 %v1005, %v1007
      %v1009 = vrot.slane %v1002, %v1008
      %v1010 = vcombine.low %v985, %v993
      %v1011 = vcombine.high %v985, %v993
      %v1013 = vunpack.c.l.s4 1934713408
      %v1014 = vunpack.c.0.s8 %v1013
      %v1015 = vlaneseq
      %v1016 = vshrl.u32 %v1015, 7
      %v1017 = vsub.s32 %v1014, %v1016
      %v1018 = vrot.slane %v1010, %v1017
      %v1020 = vunpack.c.l.s4 1934713408
      %v1021 = vunpack.c.0.s8 %v1020
      %v1022 = vlaneseq
      %v1023 = vshrl.u32 %v1022, 7
      %v1024 = vsub.s32 %v1021, %v1023
      %v1025 = vrot.slane %v1011, %v1024
      %v1026 = vcombine.low %v1001, %v1009
      %v1027 = vcombine.high %v1001, %v1009
      %v1029 = vunpack.c.l.s4 1934713408
      %v1030 = vunpack.c.0.s8 %v1029
      %v1031 = vlaneseq
      %v1032 = vshrl.u32 %v1031, 7
      %v1033 = vsub.s32 %v1030, %v1032
      %v1034 = vrot.slane %v1026, %v1033
      %v1036 = vunpack.c.l.s4 1934713408
      %v1037 = vunpack.c.0.s8 %v1036
      %v1038 = vlaneseq
      %v1039 = vshrl.u32 %v1038, 7
      %v1040 = vsub.s32 %v1037, %v1039
      %v1041 = vrot.slane %v1027, %v1040
      %v1042 = vcombine.low %v1018, %v1034
      %v1043 = vcombine.high %v1018, %v1034
      %v1044 = vcombine.low %v1025, %v1041
      %v1045 = vcombine.high %v1025, %v1041
      %1048 = vrot.lane.b32.xlu0 %v705, 96
      %v1049 = vpop.permute.xlu0 %1048
      %1050 = vrot.lane.b32.xlu0 %v709, 96
      %v1051 = vpop.permute.xlu0 %1050
      %1054 = vrot.lane.b32.xlu0 %v705, 64
      %v1055 = vpop.permute.xlu0 %1054
      %1056 = vrot.lane.b32.xlu0 %v709, 64
      %v1057 = vpop.permute.xlu0 %1056
      %1060 = vrot.lane.b32.xlu0 %v705, 32
      %v1061 = vpop.permute.xlu0 %1060
      %1062 = vrot.lane.b32.xlu0 %v709, 32
      %v1063 = vpop.permute.xlu0 %1062
      %v1066 = vcombine.low %v705, %v1055
      %v1067 = vcombine.high %v705, %v1055
      %v1069 = vunpack.c.l.s4 1983009808
      %v1070 = vunpack.c.0.s8 %v1069
      %v1071 = vlaneseq
      %v1072 = vshrl.u32 %v1071, 7
      %v1073 = vsub.s32 %v1070, %v1072
      %v1074 = vrot.slane %v1066, %v1073
      %v1076 = vunpack.c.l.s4 1983009808
      %v1077 = vunpack.c.0.s8 %v1076
      %v1078 = vlaneseq
      %v1079 = vshrl.u32 %v1078, 7
      %v1080 = vsub.s32 %v1077, %v1079
      %v1081 = vrot.slane %v1067, %v1080
      %v1082 = vcombine.low %v1049, %v1061
      %v1083 = vcombine.high %v1049, %v1061
      %v1085 = vunpack.c.l.s4 1983009808
      %v1086 = vunpack.c.0.s8 %v1085
      %v1087 = vlaneseq
      %v1088 = vshrl.u32 %v1087, 7
      %v1089 = vsub.s32 %v1086, %v1088
      %v1090 = vrot.slane %v1082, %v1089
      %v1092 = vunpack.c.l.s4 1983009808
      %v1093 = vunpack.c.0.s8 %v1092
      %v1094 = vlaneseq
      %v1095 = vshrl.u32 %v1094, 7
      %v1096 = vsub.s32 %v1093, %v1095
      %v1097 = vrot.slane %v1083, %v1096
      %v1098 = vcombine.low %v1074, %v1090
      %v1099 = vcombine.high %v1074, %v1090
      %v1101 = vunpack.c.l.s4 1934713408
      %v1102 = vunpack.c.0.s8 %v1101
      %v1103 = vlaneseq
      %v1104 = vshrl.u32 %v1103, 7
      %v1105 = vsub.s32 %v1102, %v1104
      %v1106 = vrot.slane %v1098, %v1105
      %v1108 = vunpack.c.l.s4 1934713408
      %v1109 = vunpack.c.0.s8 %v1108
      %v1110 = vlaneseq
      %v1111 = vshrl.u32 %v1110, 7
      %v1112 = vsub.s32 %v1109, %v1111
      %v1113 = vrot.slane %v1099, %v1112
      %v1114 = vcombine.low %v1081, %v1097
      %v1115 = vcombine.high %v1081, %v1097
      %v1117 = vunpack.c.l.s4 1934713408
      %v1118 = vunpack.c.0.s8 %v1117
      %v1119 = vlaneseq
      %v1120 = vshrl.u32 %v1119, 7
      %v1121 = vsub.s32 %v1118, %v1120
      %v1122 = vrot.slane %v1114, %v1121
      %v1124 = vunpack.c.l.s4 1934713408
      %v1125 = vunpack.c.0.s8 %v1124
      %v1126 = vlaneseq
      %v1127 = vshrl.u32 %v1126, 7
      %v1128 = vsub.s32 %v1125, %v1127
      %v1129 = vrot.slane %v1115, %v1128
      %v1130 = vcombine.high %v1106, 0.0
      %v1131 = vcombine.high %v1113, 0.0
      %v1132 = vcombine.high %v1122, 0.0
      %v1133 = vcombine.high %v1129, 0.0
      %v1134 = vcombine.low %v709, %v1057
      %v1135 = vcombine.high %v709, %v1057
      %v1137 = vunpack.c.l.s4 1983009808
      %v1138 = vunpack.c.0.s8 %v1137
      %v1139 = vlaneseq
      %v1140 = vshrl.u32 %v1139, 7
      %v1141 = vsub.s32 %v1138, %v1140
      %v1142 = vrot.slane %v1134, %v1141
      %v1144 = vunpack.c.l.s4 1983009808
      %v1145 = vunpack.c.0.s8 %v1144
      %v1146 = vlaneseq
      %v1147 = vshrl.u32 %v1146, 7
      %v1148 = vsub.s32 %v1145, %v1147
      %v1149 = vrot.slane %v1135, %v1148
      %v1150 = vcombine.low %v1051, %v1063
      %v1151 = vcombine.high %v1051, %v1063
      %v1153 = vunpack.c.l.s4 1983009808
      %v1154 = vunpack.c.0.s8 %v1153
      %v1155 = vlaneseq
      %v1156 = vshrl.u32 %v1155, 7
      %v1157 = vsub.s32 %v1154, %v1156
      %v1158 = vrot.slane %v1150, %v1157
      %v1160 = vunpack.c.l.s4 1983009808
      %v1161 = vunpack.c.0.s8 %v1160
      %v1162 = vlaneseq
      %v1163 = vshrl.u32 %v1162, 7
      %v1164 = vsub.s32 %v1161, %v1163
      %v1165 = vrot.slane %v1151, %v1164
      %v1166 = vcombine.low %v1142, %v1158
      %v1167 = vcombine.high %v1142, %v1158
      %v1169 = vunpack.c.l.s4 1934713408
      %v1170 = vunpack.c.0.s8 %v1169
      %v1171 = vlaneseq
      %v1172 = vshrl.u32 %v1171, 7
      %v1173 = vsub.s32 %v1170, %v1172
      %v1174 = vrot.slane %v1166, %v1173
      %v1176 = vunpack.c.l.s4 1934713408
      %v1177 = vunpack.c.0.s8 %v1176
      %v1178 = vlaneseq
      %v1179 = vshrl.u32 %v1178, 7
      %v1180 = vsub.s32 %v1177, %v1179
      %v1181 = vrot.slane %v1167, %v1180
      %v1182 = vcombine.low %v1149, %v1165
      %v1183 = vcombine.high %v1149, %v1165
      %v1185 = vunpack.c.l.s4 1934713408
      %v1186 = vunpack.c.0.s8 %v1185
      %v1187 = vlaneseq
      %v1188 = vshrl.u32 %v1187, 7
      %v1189 = vsub.s32 %v1186, %v1188
      %v1190 = vrot.slane %v1182, %v1189
      %v1192 = vunpack.c.l.s4 1934713408
      %v1193 = vunpack.c.0.s8 %v1192
      %v1194 = vlaneseq
      %v1195 = vshrl.u32 %v1194, 7
      %v1196 = vsub.s32 %v1193, %v1195
      %v1197 = vrot.slane %v1183, %v1196
      %v1198 = vcombine.high %v1174, 0.0
      %v1199 = vcombine.high %v1181, 0.0
      %v1200 = vcombine.high %v1190, 0.0
      %v1201 = vcombine.high %v1197, 0.0
      %v1202 = vcombine.low %v1106, %v1113
      %v1204 = vunpack.c.l.s4 1983009808
      %v1205 = vunpack.c.0.s8 %v1204
      %v1206 = vlaneseq
      %v1207 = vshrl.u32 %v1206, 7
      %v1208 = vsub.s32 %v1205, %v1207
      %v1209 = vrot.slane %v1202, %v1208
      %v1210 = vcombine.low %v1130, %v1131
      %v1212 = vunpack.c.l.s4 1983009808
      %v1213 = vunpack.c.0.s8 %v1212
      %v1214 = vlaneseq
      %v1215 = vshrl.u32 %v1214, 7
      %v1216 = vsub.s32 %v1213, %v1215
      %v1217 = vrot.slane %v1210, %v1216
      %v1218 = vcombine.low %v1122, %v1129
      %v1220 = vunpack.c.l.s4 1983009808
      %v1221 = vunpack.c.0.s8 %v1220
      %v1222 = vlaneseq
      %v1223 = vshrl.u32 %v1222, 7
      %v1224 = vsub.s32 %v1221, %v1223
      %v1225 = vrot.slane %v1218, %v1224
      %v1226 = vcombine.low %v1132, %v1133
      %v1228 = vunpack.c.l.s4 1983009808
      %v1229 = vunpack.c.0.s8 %v1228
      %v1230 = vlaneseq
      %v1231 = vshrl.u32 %v1230, 7
      %v1232 = vsub.s32 %v1229, %v1231
      %v1233 = vrot.slane %v1226, %v1232
      %v1234 = vcombine.low %v1209, %v1217
      %v1235 = vcombine.high %v1209, %v1217
      %v1237 = vunpack.c.l.s4 1934713408
      %v1238 = vunpack.c.0.s8 %v1237
      %v1239 = vlaneseq
      %v1240 = vshrl.u32 %v1239, 7
      %v1241 = vsub.s32 %v1238, %v1240
      %v1242 = vrot.slane %v1234, %v1241
      %v1244 = vunpack.c.l.s4 1934713408
      %v1245 = vunpack.c.0.s8 %v1244
      %v1246 = vlaneseq
      %v1247 = vshrl.u32 %v1246, 7
      %v1248 = vsub.s32 %v1245, %v1247
      %v1249 = vrot.slane %v1235, %v1248
      %v1250 = vcombine.low %v1225, %v1233
      %v1251 = vcombine.high %v1225, %v1233
      %v1253 = vunpack.c.l.s4 1934713408
      %v1254 = vunpack.c.0.s8 %v1253
      %v1255 = vlaneseq
      %v1256 = vshrl.u32 %v1255, 7
      %v1257 = vsub.s32 %v1254, %v1256
      %v1258 = vrot.slane %v1250, %v1257
      %v1260 = vunpack.c.l.s4 1934713408
      %v1261 = vunpack.c.0.s8 %v1260
      %v1262 = vlaneseq
      %v1263 = vshrl.u32 %v1262, 7
      %v1264 = vsub.s32 %v1261, %v1263
      %v1265 = vrot.slane %v1251, %v1264
      %v1266 = vcombine.low %v1242, %v1258
      %v1267 = vcombine.high %v1242, %v1258
      %v1268 = vcombine.low %v1249, %v1265
      %v1269 = vcombine.high %v1249, %v1265
      %v1270 = vcombine.low %v1174, %v1181
      %v1272 = vunpack.c.l.s4 1983009808
      %v1273 = vunpack.c.0.s8 %v1272
      %v1274 = vlaneseq
      %v1275 = vshrl.u32 %v1274, 7
      %v1276 = vsub.s32 %v1273, %v1275
      %v1277 = vrot.slane %v1270, %v1276
      %v1278 = vcombine.low %v1198, %v1199
      %v1280 = vunpack.c.l.s4 1983009808
      %v1281 = vunpack.c.0.s8 %v1280
      %v1282 = vlaneseq
      %v1283 = vshrl.u32 %v1282, 7
      %v1284 = vsub.s32 %v1281, %v1283
      %v1285 = vrot.slane %v1278, %v1284
      %v1286 = vcombine.low %v1190, %v1197
      %v1288 = vunpack.c.l.s4 1983009808
      %v1289 = vunpack.c.0.s8 %v1288
      %v1290 = vlaneseq
      %v1291 = vshrl.u32 %v1290, 7
      %v1292 = vsub.s32 %v1289, %v1291
      %v1293 = vrot.slane %v1286, %v1292
      %v1294 = vcombine.low %v1200, %v1201
      %v1296 = vunpack.c.l.s4 1983009808
      %v1297 = vunpack.c.0.s8 %v1296
      %v1298 = vlaneseq
      %v1299 = vshrl.u32 %v1298, 7
      %v1300 = vsub.s32 %v1297, %v1299
      %v1301 = vrot.slane %v1294, %v1300
      %v1302 = vcombine.low %v1277, %v1285
      %v1303 = vcombine.high %v1277, %v1285
      %v1305 = vunpack.c.l.s4 1934713408
      %v1306 = vunpack.c.0.s8 %v1305
      %v1307 = vlaneseq
      %v1308 = vshrl.u32 %v1307, 7
      %v1309 = vsub.s32 %v1306, %v1308
      %v1310 = vrot.slane %v1302, %v1309
      %v1312 = vunpack.c.l.s4 1934713408
      %v1313 = vunpack.c.0.s8 %v1312
      %v1314 = vlaneseq
      %v1315 = vshrl.u32 %v1314, 7
      %v1316 = vsub.s32 %v1313, %v1315
      %v1317 = vrot.slane %v1303, %v1316
      %v1318 = vcombine.low %v1293, %v1301
      %v1319 = vcombine.high %v1293, %v1301
      %v1321 = vunpack.c.l.s4 1934713408
      %v1322 = vunpack.c.0.s8 %v1321
      %v1323 = vlaneseq
      %v1324 = vshrl.u32 %v1323, 7
      %v1325 = vsub.s32 %v1322, %v1324
      %v1326 = vrot.slane %v1318, %v1325
      %v1328 = vunpack.c.l.s4 1934713408
      %v1329 = vunpack.c.0.s8 %v1328
      %v1330 = vlaneseq
      %v1331 = vshrl.u32 %v1330, 7
      %v1332 = vsub.s32 %v1329, %v1331
      %v1333 = vrot.slane %v1319, %v1332
      %v1334 = vcombine.low %v1310, %v1326
      %v1335 = vcombine.high %v1310, %v1326
      %v1336 = vcombine.low %v1317, %v1333
      %v1337 = vcombine.high %v1317, %v1333
      %1340 = vrot.lane.b32.xlu0 %v746, 96
      %v1341 = vpop.permute.xlu0 %1340
      %1342 = vrot.lane.b32.xlu0 %v749, 96
      %v1343 = vpop.permute.xlu0 %1342
      %1346 = vrot.lane.b32.xlu0 %v746, 64
      %v1347 = vpop.permute.xlu0 %1346
      %1348 = vrot.lane.b32.xlu0 %v749, 64
      %v1349 = vpop.permute.xlu0 %1348
      %1352 = vrot.lane.b32.xlu0 %v746, 32
      %v1353 = vpop.permute.xlu0 %1352
      %1354 = vrot.lane.b32.xlu0 %v749, 32
      %v1355 = vpop.permute.xlu0 %1354
      %v1358 = vcombine.low %v746, %v1347
      %v1359 = vcombine.high %v746, %v1347
      %v1361 = vunpack.c.l.s4 1983009808
      %v1362 = vunpack.c.0.s8 %v1361
      %v1363 = vlaneseq
      %v1364 = vshrl.u32 %v1363, 7
      %v1365 = vsub.s32 %v1362, %v1364
      %v1366 = vrot.slane %v1358, %v1365
      %v1368 = vunpack.c.l.s4 1983009808
      %v1369 = vunpack.c.0.s8 %v1368
      %v1370 = vlaneseq
      %v1371 = vshrl.u32 %v1370, 7
      %v1372 = vsub.s32 %v1369, %v1371
      %v1373 = vrot.slane %v1359, %v1372
      %v1374 = vcombine.low %v1341, %v1353
      %v1375 = vcombine.high %v1341, %v1353
      %v1377 = vunpack.c.l.s4 1983009808
      %v1378 = vunpack.c.0.s8 %v1377
      %v1379 = vlaneseq
      %v1380 = vshrl.u32 %v1379, 7
      %v1381 = vsub.s32 %v1378, %v1380
      %v1382 = vrot.slane %v1374, %v1381
      %v1384 = vunpack.c.l.s4 1983009808
      %v1385 = vunpack.c.0.s8 %v1384
      %v1386 = vlaneseq
      %v1387 = vshrl.u32 %v1386, 7
      %v1388 = vsub.s32 %v1385, %v1387
      %v1389 = vrot.slane %v1375, %v1388
      %v1390 = vcombine.low %v1366, %v1382
      %v1391 = vcombine.high %v1366, %v1382
      %v1393 = vunpack.c.l.s4 1934713408
      %v1394 = vunpack.c.0.s8 %v1393
      %v1395 = vlaneseq
      %v1396 = vshrl.u32 %v1395, 7
      %v1397 = vsub.s32 %v1394, %v1396
      %v1398 = vrot.slane %v1390, %v1397
      %v1400 = vunpack.c.l.s4 1934713408
      %v1401 = vunpack.c.0.s8 %v1400
      %v1402 = vlaneseq
      %v1403 = vshrl.u32 %v1402, 7
      %v1404 = vsub.s32 %v1401, %v1403
      %v1405 = vrot.slane %v1391, %v1404
      %v1406 = vcombine.low %v1373, %v1389
      %v1407 = vcombine.high %v1373, %v1389
      %v1409 = vunpack.c.l.s4 1934713408
      %v1410 = vunpack.c.0.s8 %v1409
      %v1411 = vlaneseq
      %v1412 = vshrl.u32 %v1411, 7
      %v1413 = vsub.s32 %v1410, %v1412
      %v1414 = vrot.slane %v1406, %v1413
      %v1416 = vunpack.c.l.s4 1934713408
      %v1417 = vunpack.c.0.s8 %v1416
      %v1418 = vlaneseq
      %v1419 = vshrl.u32 %v1418, 7
      %v1420 = vsub.s32 %v1417, %v1419
      %v1421 = vrot.slane %v1407, %v1420
      %v1422 = vcombine.high %v1398, 0.0
      %v1423 = vcombine.high %v1405, 0.0
      %v1424 = vcombine.high %v1414, 0.0
      %v1425 = vcombine.high %v1421, 0.0
      %v1426 = vcombine.low %v749, %v1349
      %v1427 = vcombine.high %v749, %v1349
      %v1429 = vunpack.c.l.s4 1983009808
      %v1430 = vunpack.c.0.s8 %v1429
      %v1431 = vlaneseq
      %v1432 = vshrl.u32 %v1431, 7
      %v1433 = vsub.s32 %v1430, %v1432
      %v1434 = vrot.slane %v1426, %v1433
      %v1436 = vunpack.c.l.s4 1983009808
      %v1437 = vunpack.c.0.s8 %v1436
      %v1438 = vlaneseq
      %v1439 = vshrl.u32 %v1438, 7
      %v1440 = vsub.s32 %v1437, %v1439
      %v1441 = vrot.slane %v1427, %v1440
      %v1442 = vcombine.low %v1343, %v1355
      %v1443 = vcombine.high %v1343, %v1355
      %v1445 = vunpack.c.l.s4 1983009808
      %v1446 = vunpack.c.0.s8 %v1445
      %v1447 = vlaneseq
      %v1448 = vshrl.u32 %v1447, 7
      %v1449 = vsub.s32 %v1446, %v1448
      %v1450 = vrot.slane %v1442, %v1449
      %v1452 = vunpack.c.l.s4 1983009808
      %v1453 = vunpack.c.0.s8 %v1452
      %v1454 = vlaneseq
      %v1455 = vshrl.u32 %v1454, 7
      %v1456 = vsub.s32 %v1453, %v1455
      %v1457 = vrot.slane %v1443, %v1456
      %v1458 = vcombine.low %v1434, %v1450
      %v1459 = vcombine.high %v1434, %v1450
      %v1461 = vunpack.c.l.s4 1934713408
      %v1462 = vunpack.c.0.s8 %v1461
      %v1463 = vlaneseq
      %v1464 = vshrl.u32 %v1463, 7
      %v1465 = vsub.s32 %v1462, %v1464
      %v1466 = vrot.slane %v1458, %v1465
      %v1468 = vunpack.c.l.s4 1934713408
      %v1469 = vunpack.c.0.s8 %v1468
      %v1470 = vlaneseq
      %v1471 = vshrl.u32 %v1470, 7
      %v1472 = vsub.s32 %v1469, %v1471
      %v1473 = vrot.slane %v1459, %v1472
      %v1474 = vcombine.low %v1441, %v1457
      %v1475 = vcombine.high %v1441, %v1457
      %v1477 = vunpack.c.l.s4 1934713408
      %v1478 = vunpack.c.0.s8 %v1477
      %v1479 = vlaneseq
      %v1480 = vshrl.u32 %v1479, 7
      %v1481 = vsub.s32 %v1478, %v1480
      %v1482 = vrot.slane %v1474, %v1481
      %v1484 = vunpack.c.l.s4 1934713408
      %v1485 = vunpack.c.0.s8 %v1484
      %v1486 = vlaneseq
      %v1487 = vshrl.u32 %v1486, 7
      %v1488 = vsub.s32 %v1485, %v1487
      %v1489 = vrot.slane %v1475, %v1488
      %v1490 = vcombine.high %v1466, 0.0
      %v1491 = vcombine.high %v1473, 0.0
      %v1492 = vcombine.high %v1482, 0.0
      %v1493 = vcombine.high %v1489, 0.0
      %v1494 = vcombine.low %v1398, %v1405
      %v1496 = vunpack.c.l.s4 1983009808
      %v1497 = vunpack.c.0.s8 %v1496
      %v1498 = vlaneseq
      %v1499 = vshrl.u32 %v1498, 7
      %v1500 = vsub.s32 %v1497, %v1499
      %v1501 = vrot.slane %v1494, %v1500
      %v1502 = vcombine.low %v1422, %v1423
      %v1504 = vunpack.c.l.s4 1983009808
      %v1505 = vunpack.c.0.s8 %v1504
      %v1506 = vlaneseq
      %v1507 = vshrl.u32 %v1506, 7
      %v1508 = vsub.s32 %v1505, %v1507
      %v1509 = vrot.slane %v1502, %v1508
      %v1510 = vcombine.low %v1414, %v1421
      %v1512 = vunpack.c.l.s4 1983009808
      %v1513 = vunpack.c.0.s8 %v1512
      %v1514 = vlaneseq
      %v1515 = vshrl.u32 %v1514, 7
      %v1516 = vsub.s32 %v1513, %v1515
      %v1517 = vrot.slane %v1510, %v1516
      %v1518 = vcombine.low %v1424, %v1425
      %v1520 = vunpack.c.l.s4 1983009808
      %v1521 = vunpack.c.0.s8 %v1520
      %v1522 = vlaneseq
      %v1523 = vshrl.u32 %v1522, 7
      %v1524 = vsub.s32 %v1521, %v1523
      %v1525 = vrot.slane %v1518, %v1524
      %v1526 = vcombine.low %v1501, %v1509
      %v1527 = vcombine.high %v1501, %v1509
      %v1529 = vunpack.c.l.s4 1934713408
      %v1530 = vunpack.c.0.s8 %v1529
      %v1531 = vlaneseq
      %v1532 = vshrl.u32 %v1531, 7
      %v1533 = vsub.s32 %v1530, %v1532
      %v1534 = vrot.slane %v1526, %v1533
      %v1536 = vunpack.c.l.s4 1934713408
      %v1537 = vunpack.c.0.s8 %v1536
      %v1538 = vlaneseq
      %v1539 = vshrl.u32 %v1538, 7
      %v1540 = vsub.s32 %v1537, %v1539
      %v1541 = vrot.slane %v1527, %v1540
      %v1542 = vcombine.low %v1517, %v1525
      %v1543 = vcombine.high %v1517, %v1525
      %v1545 = vunpack.c.l.s4 1934713408
      %v1546 = vunpack.c.0.s8 %v1545
      %v1547 = vlaneseq
      %v1548 = vshrl.u32 %v1547, 7
      %v1549 = vsub.s32 %v1546, %v1548
      %v1550 = vrot.slane %v1542, %v1549
      %v1552 = vunpack.c.l.s4 1934713408
      %v1553 = vunpack.c.0.s8 %v1552
      %v1554 = vlaneseq
      %v1555 = vshrl.u32 %v1554, 7
      %v1556 = vsub.s32 %v1553, %v1555
      %v1557 = vrot.slane %v1543, %v1556
      %v1558 = vcombine.low %v1534, %v1550
      %v1559 = vcombine.high %v1534, %v1550
      %v1560 = vcombine.low %v1541, %v1557
      %v1561 = vcombine.high %v1541, %v1557
      %v1562 = vcombine.low %v1466, %v1473
      %v1564 = vunpack.c.l.s4 1983009808
      %v1565 = vunpack.c.0.s8 %v1564
      %v1566 = vlaneseq
      %v1567 = vshrl.u32 %v1566, 7
      %v1568 = vsub.s32 %v1565, %v1567
      %v1569 = vrot.slane %v1562, %v1568
      %v1570 = vcombine.low %v1490, %v1491
      %v1572 = vunpack.c.l.s4 1983009808
      %v1573 = vunpack.c.0.s8 %v1572
      %v1574 = vlaneseq
      %v1575 = vshrl.u32 %v1574, 7
      %v1576 = vsub.s32 %v1573, %v1575
      %v1577 = vrot.slane %v1570, %v1576
      %v1578 = vcombine.low %v1482, %v1489
      %v1580 = vunpack.c.l.s4 1983009808
      %v1581 = vunpack.c.0.s8 %v1580
      %v1582 = vlaneseq
      %v1583 = vshrl.u32 %v1582, 7
      %v1584 = vsub.s32 %v1581, %v1583
      %v1585 = vrot.slane %v1578, %v1584
      %v1586 = vcombine.low %v1492, %v1493
      %v1588 = vunpack.c.l.s4 1983009808
      %v1589 = vunpack.c.0.s8 %v1588
      %v1590 = vlaneseq
      %v1591 = vshrl.u32 %v1590, 7
      %v1592 = vsub.s32 %v1589, %v1591
      %v1593 = vrot.slane %v1586, %v1592
      %v1594 = vcombine.low %v1569, %v1577
      %v1595 = vcombine.high %v1569, %v1577
      %v1597 = vunpack.c.l.s4 1934713408
      %v1598 = vunpack.c.0.s8 %v1597
      %v1599 = vlaneseq
      %v1600 = vshrl.u32 %v1599, 7
      %v1601 = vsub.s32 %v1598, %v1600
      %v1602 = vrot.slane %v1594, %v1601
      %v1604 = vunpack.c.l.s4 1934713408
      %v1605 = vunpack.c.0.s8 %v1604
      %v1606 = vlaneseq
      %v1607 = vshrl.u32 %v1606, 7
      %v1608 = vsub.s32 %v1605, %v1607
      %v1609 = vrot.slane %v1595, %v1608
      %v1610 = vcombine.low %v1585, %v1593
      %v1611 = vcombine.high %v1585, %v1593
      %v1613 = vunpack.c.l.s4 1934713408
      %v1614 = vunpack.c.0.s8 %v1613
      %v1615 = vlaneseq
      %v1616 = vshrl.u32 %v1615, 7
      %v1617 = vsub.s32 %v1614, %v1616
      %v1618 = vrot.slane %v1610, %v1617
      %v1620 = vunpack.c.l.s4 1934713408
      %v1621 = vunpack.c.0.s8 %v1620
      %v1622 = vlaneseq
      %v1623 = vshrl.u32 %v1622, 7
      %v1624 = vsub.s32 %v1621, %v1623
      %v1625 = vrot.slane %v1611, %v1624
      %v1626 = vcombine.low %v1602, %v1618
      %v1627 = vcombine.high %v1602, %v1618
      %v1628 = vcombine.low %v1609, %v1625
      %v1629 = vcombine.high %v1609, %v1625
      %v1630 = vpack.c.bf16 %v1042, %v974
      %v1631 = vpack.c.bf16 %v1043, %v975
      %v1632 = vpack.c.bf16 %v1044, %v976
      %v1633 = vpack.c.bf16 %v1045, %v977
      %v1634 = vpack.c.bf16 %v1334, %v1266
      %v1635 = vpack.c.bf16 %v1335, %v1267
      %v1636 = vpack.c.bf16 %v1336, %v1268
      %v1637 = vpack.c.bf16 %v1337, %v1269
      %vm1638 = vcmask 261120
      %v1640 = vsel %vm1638, %v1630, 0
      %v1643 = vsel %vm1638, %v1634, 0
      %1645 = vmatprep.subr.bf16.mxu0 0
      %1646 = vmatpush1.bf16.xpose.msra.mxu0 %v1643
      %1647 = vmatprep.subr.bf16.mxu0 0
      %1648 = vmatpush1.bf16.xpose.msra.mxu0 0
      %1649 = vmatprep.subr.bf16.mxu0 0
      %1650 = vmatpush1.bf16.xpose.msra.mxu0 0
      %1651 = vmatprep.subr.bf16.mxu0 0
      %1652 = vmatpush1.bf16.xpose.msra.mxu0 0
      %1653 = vmatprep.subr.bf16.mxu0 0
      %1654 = vmatpush1.bf16.xpose.msra.mxu0 0
      %1655 = vmatprep.subr.bf16.mxu0 0
      %1656 = vmatpush1.bf16.xpose.msra.mxu0 0
      %1657 = vmatprep.subr.bf16.mxu0 0
      %1658 = vmatpush1.bf16.xpose.msra.mxu0 0
      %1659 = vmatprep.subr.bf16.mxu0 0
      %1660 = vmatpush1.bf16.xpose.msra.mxu0 0
      %1661 = vmatprep.subr.bf16.mxu0 0
      %1662 = vmatpush1.bf16.xpose.msra.mxu0 0
      %1663 = vmatprep.subr.bf16.mxu0 0
      %1664 = vmatpush1.bf16.xpose.msra.mxu0 0
      %1665 = vmatprep.subr.bf16.mxu0 0
      %1666 = vmatpush1.bf16.xpose.msra.mxu0 0
      %1667 = vmatprep.subr.bf16.mxu0 0
      %1668 = vmatpush1.bf16.xpose.msra.mxu0 0
      %1669 = vmatprep.subr.bf16.mxu0 0
      %1670 = vmatpush1.bf16.xpose.msra.mxu0 0
      %1671 = vmatprep.subr.bf16.mxu0 0
      %1672 = vmatpush1.bf16.xpose.msra.mxu0 0
      %1673 = vmatprep.subr.bf16.mxu0 0
      %1674 = vmatpush1.bf16.xpose.msra.mxu0 0
      %1675 = vmatprep.subr.bf16.mxu0 0
      %1676 = vmatpush1.bf16.xpose.msra.mxu0 0
      %1677 = vmatprep.mubr.bf16.mxu0 0
      %1678 = vmatmul.mubr.bf16.gmra.mrb[0].mxu0 %v1640
      %v1679 = vpop.f32.mrb[0].mxu0
      %v1680 = vadd.f32 0.0, %v1679
      %v1681 = vpop.f32.mrb[0].mxu0
      %v1682 = vpop.f32.mrb[0].mxu0
      %v1683 = vadd.f32 0.0, %v1682
      %v1684 = vpop.f32.mrb[0].mxu0
      %1685 = vdwg.mxu0
      %v1687 = vsel %vm1638, %v1631, 0
      %v1690 = vsel %vm1638, %v1635, 0
      %1692 = vmatprep.subr.bf16.mxu0 0
      %1693 = vmatpush1.bf16.xpose.msra.mxu0 %v1690
      %1694 = vmatprep.subr.bf16.mxu0 0
      %1695 = vmatpush1.bf16.xpose.msra.mxu0 0
      %1696 = vmatprep.subr.bf16.mxu0 0
      %1697 = vmatpush1.bf16.xpose.msra.mxu0 0
      %1698 = vmatprep.subr.bf16.mxu0 0
      %1699 = vmatpush1.bf16.xpose.msra.mxu0 0
      %1700 = vmatprep.subr.bf16.mxu0 0
      %1701 = vmatpush1.bf16.xpose.msra.mxu0 0
      %1702 = vmatprep.subr.bf16.mxu0 0
      %1703 = vmatpush1.bf16.xpose.msra.mxu0 0
      %1704 = vmatprep.subr.bf16.mxu0 0
      %1705 = vmatpush1.bf16.xpose.msra.mxu0 0
      %1706 = vmatprep.subr.bf16.mxu0 0
      %1707 = vmatpush1.bf16.xpose.msra.mxu0 0
      %1708 = vmatprep.subr.bf16.mxu0 0
      %1709 = vmatpush1.bf16.xpose.msra.mxu0 0
      %1710 = vmatprep.subr.bf16.mxu0 0
      %1711 = vmatpush1.bf16.xpose.msra.mxu0 0
      %1712 = vmatprep.subr.bf16.mxu0 0
      %1713 = vmatpush1.bf16.xpose.msra.mxu0 0
      %1714 = vmatprep.subr.bf16.mxu0 0
      %1715 = vmatpush1.bf16.xpose.msra.mxu0 0
      %1716 = vmatprep.subr.bf16.mxu0 0
      %1717 = vmatpush1.bf16.xpose.msra.mxu0 0
      %1718 = vmatprep.subr.bf16.mxu0 0
      %1719 = vmatpush1.bf16.xpose.msra.mxu0 0
      %1720 = vmatprep.subr.bf16.mxu0 0
      %1721 = vmatpush1.bf16.xpose.msra.mxu0 0
      %1722 = vmatprep.subr.bf16.mxu0 0
      %1723 = vmatpush1.bf16.xpose.msra.mxu0 0
      %1724 = vmatprep.mubr.bf16.mxu0 0
      %1725 = vmatmul.mubr.bf16.gmra.mrb[0].mxu0 %v1687
      %v1726 = vpop.f32.mrb[0].mxu0
      %v1727 = vadd.f32 0.0, %v1726
      %v1728 = vpop.f32.mrb[0].mxu0
      %v1729 = vpop.f32.mrb[0].mxu0
      %v1730 = vadd.f32 0.0, %v1729
      %v1731 = vpop.f32.mrb[0].mxu0
      %1732 = vdwg.mxu0
      %v1734 = vsel %vm1638, %v1632, 0
      %v1737 = vsel %vm1638, %v1636, 0
      %1739 = vmatprep.subr.bf16.mxu0 0
      %1740 = vmatpush1.bf16.xpose.msra.mxu0 %v1737
      %1741 = vmatprep.subr.bf16.mxu0 0
      %1742 = vmatpush1.bf16.xpose.msra.mxu0 0
      %1743 = vmatprep.subr.bf16.mxu0 0
      %1744 = vmatpush1.bf16.xpose.msra.mxu0 0
      %1745 = vmatprep.subr.bf16.mxu0 0
      %1746 = vmatpush1.bf16.xpose.msra.mxu0 0
      %1747 = vmatprep.subr.bf16.mxu0 0
      %1748 = vmatpush1.bf16.xpose.msra.mxu0 0
      %1749 = vmatprep.subr.bf16.mxu0 0
      %1750 = vmatpush1.bf16.xpose.msra.mxu0 0
      %1751 = vmatprep.subr.bf16.mxu0 0
      %1752 = vmatpush1.bf16.xpose.msra.mxu0 0
      %1753 = vmatprep.subr.bf16.mxu0 0
      %1754 = vmatpush1.bf16.xpose.msra.mxu0 0
      %1755 = vmatprep.subr.bf16.mxu0 0
      %1756 = vmatpush1.bf16.xpose.msra.mxu0 0
      %1757 = vmatprep.subr.bf16.mxu0 0
      %1758 = vmatpush1.bf16.xpose.msra.mxu0 0
      %1759 = vmatprep.subr.bf16.mxu0 0
      %1760 = vmatpush1.bf16.xpose.msra.mxu0 0
      %1761 = vmatprep.subr.bf16.mxu0 0
      %1762 = vmatpush1.bf16.xpose.msra.mxu0 0
      %1763 = vmatprep.subr.bf16.mxu0 0
      %1764 = vmatpush1.bf16.xpose.msra.mxu0 0
      %1765 = vmatprep.subr.bf16.mxu0 0
      %1766 = vmatpush1.bf16.xpose.msra.mxu0 0
      %1767 = vmatprep.subr.bf16.mxu0 0
      %1768 = vmatpush1.bf16.xpose.msra.mxu0 0
      %1769 = vmatprep.subr.bf16.mxu0 0
      %1770 = vmatpush1.bf16.xpose.msra.mxu0 0
      %1771 = vmatprep.mubr.bf16.mxu0 0
      %1772 = vmatmul.mubr.bf16.gmra.mrb[0].mxu0 %v1734
      %v1773 = vpop.f32.mrb[0].mxu0
      %v1774 = vadd.f32 0.0, %v1773
      %v1775 = vpop.f32.mrb[0].mxu0
      %v1776 = vpop.f32.mrb[0].mxu0
      %v1777 = vadd.f32 0.0, %v1776
      %v1778 = vpop.f32.mrb[0].mxu0
      %1779 = vdwg.mxu0
      %v1781 = vsel %vm1638, %v1633, 0
      %v1784 = vsel %vm1638, %v1637, 0
      %1786 = vmatprep.subr.bf16.mxu0 0
      %1787 = vmatpush1.bf16.xpose.msra.mxu0 %v1784
      %1788 = vmatprep.subr.bf16.mxu0 0
      %1789 = vmatpush1.bf16.xpose.msra.mxu0 0
      %1790 = vmatprep.subr.bf16.mxu0 0
      %1791 = vmatpush1.bf16.xpose.msra.mxu0 0
      %1792 = vmatprep.subr.bf16.mxu0 0
      %1793 = vmatpush1.bf16.xpose.msra.mxu0 0
      %1794 = vmatprep.subr.bf16.mxu0 0
      %1795 = vmatpush1.bf16.xpose.msra.mxu0 0
      %1796 = vmatprep.subr.bf16.mxu0 0
      %1797 = vmatpush1.bf16.xpose.msra.mxu0 0
      %1798 = vmatprep.subr.bf16.mxu0 0
      %1799 = vmatpush1.bf16.xpose.msra.mxu0 0
      %1800 = vmatprep.subr.bf16.mxu0 0
      %1801 = vmatpush1.bf16.xpose.msra.mxu0 0
      %1802 = vmatprep.subr.bf16.mxu0 0
      %1803 = vmatpush1.bf16.xpose.msra.mxu0 0
      %1804 = vmatprep.subr.bf16.mxu0 0
      %1805 = vmatpush1.bf16.xpose.msra.mxu0 0
      %1806 = vmatprep.subr.bf16.mxu0 0
      %1807 = vmatpush1.bf16.xpose.msra.mxu0 0
      %1808 = vmatprep.subr.bf16.mxu0 0
      %1809 = vmatpush1.bf16.xpose.msra.mxu0 0
      %1810 = vmatprep.subr.bf16.mxu0 0
      %1811 = vmatpush1.bf16.xpose.msra.mxu0 0
      %1812 = vmatprep.subr.bf16.mxu0 0
      %1813 = vmatpush1.bf16.xpose.msra.mxu0 0
      %1814 = vmatprep.subr.bf16.mxu0 0
      %1815 = vmatpush1.bf16.xpose.msra.mxu0 0
      %1816 = vmatprep.subr.bf16.mxu0 0
      %1817 = vmatpush1.bf16.xpose.msra.mxu0 0
      %1818 = vmatprep.mubr.bf16.mxu0 0
      %1819 = vmatmul.mubr.bf16.gmra.mrb[0].mxu0 %v1781
      %v1820 = vpop.f32.mrb[0].mxu0
      %v1821 = vadd.f32 0.0, %v1820
      %v1822 = vpop.f32.mrb[0].mxu0
      %v1823 = vpop.f32.mrb[0].mxu0
      %v1824 = vadd.f32 0.0, %v1823
      %v1825 = vpop.f32.mrb[0].mxu0
      %1826 = vdwg.mxu0
      %vm1827 = vcmask 130048
      %v1828 = vsel %vm1827, %v1680, -inf
      %1829 = vmax.xlane.f32.xlu0 %v1828
      %v1830 = vpop.xlane.xlu0 %1829
      %v1831 = vsel %vm1827, %v1683, -inf
      %1832 = vmax.xlane.f32.xlu0 %v1831
      %v1833 = vpop.xlane.xlu0 %1832
      %v1834 = vsel %vm1827, %v1727, -inf
      %1835 = vmax.xlane.f32.xlu0 %v1834
      %v1836 = vpop.xlane.xlu0 %1835
      %v1837 = vsel %vm1827, %v1730, -inf
      %1838 = vmax.xlane.f32.xlu0 %v1837
      %v1839 = vpop.xlane.xlu0 %1838
      %v1840 = vsel %vm1827, %v1774, -inf
      %1841 = vmax.xlane.f32.xlu0 %v1840
      %v1842 = vpop.xlane.xlu0 %1841
      %v1843 = vsel %vm1827, %v1777, -inf
      %1844 = vmax.xlane.f32.xlu0 %v1843
      %v1845 = vpop.xlane.xlu0 %1844
      %v1846 = vsel %vm1827, %v1821, -inf
      %1847 = vmax.xlane.f32.xlu0 %v1846
      %v1848 = vpop.xlane.xlu0 %1847
      %v1849 = vsel %vm1827, %v1824, -inf
      %1850 = vmax.xlane.f32.xlu0 %v1849
      %v1851 = vpop.xlane.xlu0 %1850
      %v1852 = vsub.f32 %v1680, %v1830
      %v1853 = vsub.f32 %v1683, %v1833
      %v1854 = vsub.f32 %v1727, %v1836
      %v1855 = vsub.f32 %v1730, %v1839
      %v1856 = vsub.f32 %v1774, %v1842
      %v1857 = vsub.f32 %v1777, %v1845
      %v1858 = vsub.f32 %v1821, %v1848
      %v1859 = vsub.f32 %v1824, %v1851
      %v1860 = vmul.f32 %v1852, 1.442695
      %v1861 = vpow.pop %v1860
      %v1862 = vmul.f32 %v1853, 1.442695
      %v1863 = vpow.pop %v1862
      %v1864 = vmul.f32 %v1854, 1.442695
      %v1865 = vpow.pop %v1864
      %v1866 = vmul.f32 %v1855, 1.442695
      %v1867 = vpow.pop %v1866
      %v1868 = vmul.f32 %v1856, 1.442695
      %v1869 = vpow.pop %v1868
      %v1870 = vmul.f32 %v1857, 1.442695
      %v1871 = vpow.pop %v1870
      %v1872 = vmul.f32 %v1858, 1.442695
      %v1873 = vpow.pop %v1872
      %v1874 = vmul.f32 %v1859, 1.442695
      %v1875 = vpow.pop %v1874
      %v1876 = vsel %vm1827, %v1861, 0.0
      %1877 = vadd.xlane.f32.xlu0 %v1876
      %v1878 = vpop.xlane.xlu0 %1877
      %v1879 = vsel %vm1827, %v1863, 0.0
      %1880 = vadd.xlane.f32.xlu0 %v1879
      %v1881 = vpop.xlane.xlu0 %1880
      %v1882 = vsel %vm1827, %v1865, 0.0
      %1883 = vadd.xlane.f32.xlu0 %v1882
      %v1884 = vpop.xlane.xlu0 %1883
      %v1885 = vsel %vm1827, %v1867, 0.0
      %1886 = vadd.xlane.f32.xlu0 %v1885
      %v1887 = vpop.xlane.xlu0 %1886
      %v1888 = vsel %vm1827, %v1869, 0.0
      %1889 = vadd.xlane.f32.xlu0 %v1888
      %v1890 = vpop.xlane.xlu0 %1889
      %v1891 = vsel %vm1827, %v1871, 0.0
      %1892 = vadd.xlane.f32.xlu0 %v1891
      %v1893 = vpop.xlane.xlu0 %1892
      %v1894 = vsel %vm1827, %v1873, 0.0
      %1895 = vadd.xlane.f32.xlu0 %v1894
      %v1896 = vpop.xlane.xlu0 %1895
      %v1897 = vsel %vm1827, %v1875, 0.0
      %1898 = vadd.xlane.f32.xlu0 %v1897
      %v1899 = vpop.xlane.xlu0 %1898
      %v1900 = vrcp.pop %v1878
      %v1901 = vrcp.pop %v1881
      %v1902 = vrcp.pop %v1884
      %v1903 = vrcp.pop %v1887
      %v1904 = vrcp.pop %v1890
      %v1905 = vrcp.pop %v1893
      %v1906 = vrcp.pop %v1896
      %v1907 = vrcp.pop %v1899
      %v1908 = vmul.f32 %v1861, %v1900
      %v1909 = vmul.f32 %v1863, %v1901
      %v1910 = vmul.f32 %v1865, %v1902
      %v1911 = vmul.f32 %v1867, %v1903
      %v1912 = vmul.f32 %v1869, %v1904
      %v1913 = vmul.f32 %v1871, %v1905
      %v1914 = vmul.f32 %v1873, %v1906
      %v1915 = vmul.f32 %v1875, %v1907
      %v1916 = vpack.c.bf16 %v1909, %v1908
      %v1917 = vpack.c.bf16 %v1911, %v1910
      %v1918 = vpack.c.bf16 %v1913, %v1912
      %v1919 = vpack.c.bf16 %v1915, %v1914
      %v1920 = vpack.c.bf16 %v1626, %v1558
      %v1921 = vpack.c.bf16 %v1627, %v1559
      %v1922 = vpack.c.bf16 %v1628, %v1560
      %v1923 = vpack.c.bf16 %v1629, %v1561
      %v1925 = vsel %vm1827, %v1916, 0
      %1927 = vmatprep.subr.bf16.mxu0 0
      %1928 = vmatpush1.bf16.msra.mxu0 %v1920
      %1929 = vmatprep.subr.bf16.mxu0 0
      %1930 = vmatpush1.bf16.msra.mxu0 0
      %1931 = vmatprep.subr.bf16.mxu0 0
      %1932 = vmatpush1.bf16.msra.mxu0 0
      %1933 = vmatprep.subr.bf16.mxu0 0
      %1934 = vmatpush1.bf16.msra.mxu0 0
      %1935 = vmatprep.subr.bf16.mxu0 0
      %1936 = vmatpush1.bf16.msra.mxu0 0
      %1937 = vmatprep.subr.bf16.mxu0 0
      %1938 = vmatpush1.bf16.msra.mxu0 0
      %1939 = vmatprep.subr.bf16.mxu0 0
      %1940 = vmatpush1.bf16.msra.mxu0 0
      %1941 = vmatprep.subr.bf16.mxu0 0
      %1942 = vmatpush1.bf16.msra.mxu0 0
      %1943 = vmatprep.subr.bf16.mxu0 0
      %1944 = vmatpush1.bf16.msra.mxu0 0
      %1945 = vmatprep.subr.bf16.mxu0 0
      %1946 = vmatpush1.bf16.msra.mxu0 0
      %1947 = vmatprep.subr.bf16.mxu0 0
      %1948 = vmatpush1.bf16.msra.mxu0 0
      %1949 = vmatprep.subr.bf16.mxu0 0
      %1950 = vmatpush1.bf16.msra.mxu0 0
      %1951 = vmatprep.subr.bf16.mxu0 0
      %1952 = vmatpush1.bf16.msra.mxu0 0
      %1953 = vmatprep.subr.bf16.mxu0 0
      %1954 = vmatpush1.bf16.msra.mxu0 0
      %1955 = vmatprep.subr.bf16.mxu0 0
      %1956 = vmatpush1.bf16.msra.mxu0 0
      %1957 = vmatprep.subr.bf16.mxu0 0
      %1958 = vmatpush1.bf16.msra.mxu0 0
      %1959 = vmatprep.mubr.bf16.mxu0 0
      %1960 = vmatmul.mubr.bf16.gmra.mrb[0].mxu0 %v1925
      %v1961 = vpop.f32.mrb[0].mxu0
      %v1962 = vadd.f32 0.0, %v1961
      %v1963 = vpop.f32.mrb[0].mxu0
      %v1964 = vpop.f32.mrb[0].mxu0
      %v1965 = vadd.f32 0.0, %v1964
      %v1966 = vpop.f32.mrb[0].mxu0
      %1967 = vdwg.mxu0
      %v1969 = vsel %vm1827, %v1917, 0
      %1971 = vmatprep.subr.bf16.mxu0 0
      %1972 = vmatpush1.bf16.msra.mxu0 %v1921
      %1973 = vmatprep.subr.bf16.mxu0 0
      %1974 = vmatpush1.bf16.msra.mxu0 0
      %1975 = vmatprep.subr.bf16.mxu0 0
      %1976 = vmatpush1.bf16.msra.mxu0 0
      %1977 = vmatprep.subr.bf16.mxu0 0
      %1978 = vmatpush1.bf16.msra.mxu0 0
      %1979 = vmatprep.subr.bf16.mxu0 0
      %1980 = vmatpush1.bf16.msra.mxu0 0
      %1981 = vmatprep.subr.bf16.mxu0 0
      %1982 = vmatpush1.bf16.msra.mxu0 0
      %1983 = vmatprep.subr.bf16.mxu0 0
      %1984 = vmatpush1.bf16.msra.mxu0 0
      %1985 = vmatprep.subr.bf16.mxu0 0
      %1986 = vmatpush1.bf16.msra.mxu0 0
      %1987 = vmatprep.subr.bf16.mxu0 0
      %1988 = vmatpush1.bf16.msra.mxu0 0
      %1989 = vmatprep.subr.bf16.mxu0 0
      %1990 = vmatpush1.bf16.msra.mxu0 0
      %1991 = vmatprep.subr.bf16.mxu0 0
      %1992 = vmatpush1.bf16.msra.mxu0 0
      %1993 = vmatprep.subr.bf16.mxu0 0
      %1994 = vmatpush1.bf16.msra.mxu0 0
      %1995 = vmatprep.subr.bf16.mxu0 0
      %1996 = vmatpush1.bf16.msra.mxu0 0
      %1997 = vmatprep.subr.bf16.mxu0 0
      %1998 = vmatpush1.bf16.msra.mxu0 0
      %1999 = vmatprep.subr.bf16.mxu0 0
      %2000 = vmatpush1.bf16.msra.mxu0 0
      %2001 = vmatprep.subr.bf16.mxu0 0
      %2002 = vmatpush1.bf16.msra.mxu0 0
      %2003 = vmatprep.mubr.bf16.mxu0 0
      %2004 = vmatmul.mubr.bf16.gmra.mrb[0].mxu0 %v1969
      %v2005 = vpop.f32.mrb[0].mxu0
      %v2006 = vadd.f32 0.0, %v2005
      %v2007 = vpop.f32.mrb[0].mxu0
      %v2008 = vpop.f32.mrb[0].mxu0
      %v2009 = vadd.f32 0.0, %v2008
      %v2010 = vpop.f32.mrb[0].mxu0
      %2011 = vdwg.mxu0
      %v2013 = vsel %vm1827, %v1918, 0
      %2015 = vmatprep.subr.bf16.mxu0 0
      %2016 = vmatpush1.bf16.msra.mxu0 %v1922
      %2017 = vmatprep.subr.bf16.mxu0 0
      %2018 = vmatpush1.bf16.msra.mxu0 0
      %2019 = vmatprep.subr.bf16.mxu0 0
      %2020 = vmatpush1.bf16.msra.mxu0 0
      %2021 = vmatprep.subr.bf16.mxu0 0
      %2022 = vmatpush1.bf16.msra.mxu0 0
      %2023 = vmatprep.subr.bf16.mxu0 0
      %2024 = vmatpush1.bf16.msra.mxu0 0
      %2025 = vmatprep.subr.bf16.mxu0 0
      %2026 = vmatpush1.bf16.msra.mxu0 0
      %2027 = vmatprep.subr.bf16.mxu0 0
      %2028 = vmatpush1.bf16.msra.mxu0 0
      %2029 = vmatprep.subr.bf16.mxu0 0
      %2030 = vmatpush1.bf16.msra.mxu0 0
      %2031 = vmatprep.subr.bf16.mxu0 0
      %2032 = vmatpush1.bf16.msra.mxu0 0
      %2033 = vmatprep.subr.bf16.mxu0 0
      %2034 = vmatpush1.bf16.msra.mxu0 0
      %2035 = vmatprep.subr.bf16.mxu0 0
      %2036 = vmatpush1.bf16.msra.mxu0 0
      %2037 = vmatprep.subr.bf16.mxu0 0
      %2038 = vmatpush1.bf16.msra.mxu0 0
      %2039 = vmatprep.subr.bf16.mxu0 0
      %2040 = vmatpush1.bf16.msra.mxu0 0
      %2041 = vmatprep.subr.bf16.mxu0 0
      %2042 = vmatpush1.bf16.msra.mxu0 0
      %2043 = vmatprep.subr.bf16.mxu0 0
      %2044 = vmatpush1.bf16.msra.mxu0 0
      %2045 = vmatprep.subr.bf16.mxu0 0
      %2046 = vmatpush1.bf16.msra.mxu0 0
      %2047 = vmatprep.mubr.bf16.mxu0 0
      %2048 = vmatmul.mubr.bf16.gmra.mrb[0].mxu0 %v2013
      %v2049 = vpop.f32.mrb[0].mxu0
      %v2050 = vadd.f32 0.0, %v2049
      %v2051 = vpop.f32.mrb[0].mxu0
      %v2052 = vpop.f32.mrb[0].mxu0
      %v2053 = vadd.f32 0.0, %v2052
      %v2054 = vpop.f32.mrb[0].mxu0
      %2055 = vdwg.mxu0
      %v2057 = vsel %vm1827, %v1919, 0
      %2059 = vmatprep.subr.bf16.mxu0 0
      %2060 = vmatpush1.bf16.msra.mxu0 %v1923
      %2061 = vmatprep.subr.bf16.mxu0 0
      %2062 = vmatpush1.bf16.msra.mxu0 0
      %2063 = vmatprep.subr.bf16.mxu0 0
      %2064 = vmatpush1.bf16.msra.mxu0 0
      %2065 = vmatprep.subr.bf16.mxu0 0
      %2066 = vmatpush1.bf16.msra.mxu0 0
      %2067 = vmatprep.subr.bf16.mxu0 0
      %2068 = vmatpush1.bf16.msra.mxu0 0
      %2069 = vmatprep.subr.bf16.mxu0 0
      %2070 = vmatpush1.bf16.msra.mxu0 0
      %2071 = vmatprep.subr.bf16.mxu0 0
      %2072 = vmatpush1.bf16.msra.mxu0 0
      %2073 = vmatprep.subr.bf16.mxu0 0
      %2074 = vmatpush1.bf16.msra.mxu0 0
      %2075 = vmatprep.subr.bf16.mxu0 0
      %2076 = vmatpush1.bf16.msra.mxu0 0
      %2077 = vmatprep.subr.bf16.mxu0 0
      %2078 = vmatpush1.bf16.msra.mxu0 0
      %2079 = vmatprep.subr.bf16.mxu0 0
      %2080 = vmatpush1.bf16.msra.mxu0 0
      %2081 = vmatprep.subr.bf16.mxu0 0
      %2082 = vmatpush1.bf16.msra.mxu0 0
      %2083 = vmatprep.subr.bf16.mxu0 0
      %2084 = vmatpush1.bf16.msra.mxu0 0
      %2085 = vmatprep.subr.bf16.mxu0 0
      %2086 = vmatpush1.bf16.msra.mxu0 0
      %2087 = vmatprep.subr.bf16.mxu0 0
      %2088 = vmatpush1.bf16.msra.mxu0 0
      %2089 = vmatprep.subr.bf16.mxu0 0
      %2090 = vmatpush1.bf16.msra.mxu0 0
      %2091 = vmatprep.mubr.bf16.mxu0 0
      %2092 = vmatmul.mubr.bf16.gmra.mrb[0].mxu0 %v2057
      %v2093 = vpop.f32.mrb[0].mxu0
      %v2094 = vadd.f32 0.0, %v2093
      %v2095 = vpop.f32.mrb[0].mxu0
      %v2096 = vpop.f32.mrb[0].mxu0
      %v2097 = vadd.f32 0.0, %v2096
      %v2098 = vpop.f32.mrb[0].mxu0
      %2099 = vdwg.mxu0
      %v2100 = vcombine.low %v1962, %v2050
      %v2101 = vcombine.high %v1962, %v2050
      %v2103 = vunpack.c.l.s4 1983009808
      %v2104 = vunpack.c.0.s8 %v2103
      %v2105 = vlaneseq
      %v2106 = vshrl.u32 %v2105, 7
      %v2107 = vsub.s32 %v2104, %v2106
      %v2108 = vrot.slane %v2100, %v2107
      %v2110 = vunpack.c.l.s4 1983009808
      %v2111 = vunpack.c.0.s8 %v2110
      %v2112 = vlaneseq
      %v2113 = vshrl.u32 %v2112, 7
      %v2114 = vsub.s32 %v2111, %v2113
      %v2115 = vrot.slane %v2101, %v2114
      %v2116 = vcombine.low %v2006, %v2094
      %v2117 = vcombine.high %v2006, %v2094
      %v2119 = vunpack.c.l.s4 1983009808
      %v2120 = vunpack.c.0.s8 %v2119
      %v2121 = vlaneseq
      %v2122 = vshrl.u32 %v2121, 7
      %v2123 = vsub.s32 %v2120, %v2122
      %v2124 = vrot.slane %v2116, %v2123
      %v2126 = vunpack.c.l.s4 1983009808
      %v2127 = vunpack.c.0.s8 %v2126
      %v2128 = vlaneseq
      %v2129 = vshrl.u32 %v2128, 7
      %v2130 = vsub.s32 %v2127, %v2129
      %v2131 = vrot.slane %v2117, %v2130
      %v2132 = vcombine.low %v2108, %v2124
      %v2133 = vcombine.high %v2108, %v2124
      %v2135 = vunpack.c.l.s4 1934713408
      %v2136 = vunpack.c.0.s8 %v2135
      %v2137 = vlaneseq
      %v2138 = vshrl.u32 %v2137, 7
      %v2139 = vsub.s32 %v2136, %v2138
      %v2140 = vrot.slane %v2132, %v2139
      %v2142 = vunpack.c.l.s4 1934713408
      %v2143 = vunpack.c.0.s8 %v2142
      %v2144 = vlaneseq
      %v2145 = vshrl.u32 %v2144, 7
      %v2146 = vsub.s32 %v2143, %v2145
      %v2147 = vrot.slane %v2133, %v2146
      %v2148 = vcombine.low %v2115, %v2131
      %v2149 = vcombine.high %v2115, %v2131
      %v2151 = vunpack.c.l.s4 1934713408
      %v2152 = vunpack.c.0.s8 %v2151
      %v2153 = vlaneseq
      %v2154 = vshrl.u32 %v2153, 7
      %v2155 = vsub.s32 %v2152, %v2154
      %v2156 = vrot.slane %v2148, %v2155
      %v2158 = vunpack.c.l.s4 1934713408
      %v2159 = vunpack.c.0.s8 %v2158
      %v2160 = vlaneseq
      %v2161 = vshrl.u32 %v2160, 7
      %v2162 = vsub.s32 %v2159, %v2161
      %v2163 = vrot.slane %v2149, %v2162
      %v2164 = vcombine.high %v2140, 0.0
      %v2165 = vcombine.high %v2147, 0.0
      %v2166 = vcombine.high %v2156, 0.0
      %v2167 = vcombine.high %v2163, 0.0
      %v2168 = vcombine.low %v1965, %v2053
      %v2169 = vcombine.high %v1965, %v2053
      %v2171 = vunpack.c.l.s4 1983009808
      %v2172 = vunpack.c.0.s8 %v2171
      %v2173 = vlaneseq
      %v2174 = vshrl.u32 %v2173, 7
      %v2175 = vsub.s32 %v2172, %v2174
      %v2176 = vrot.slane %v2168, %v2175
      %v2178 = vunpack.c.l.s4 1983009808
      %v2179 = vunpack.c.0.s8 %v2178
      %v2180 = vlaneseq
      %v2181 = vshrl.u32 %v2180, 7
      %v2182 = vsub.s32 %v2179, %v2181
      %v2183 = vrot.slane %v2169, %v2182
      %v2184 = vcombine.low %v2009, %v2097
      %v2185 = vcombine.high %v2009, %v2097
      %v2187 = vunpack.c.l.s4 1983009808
      %v2188 = vunpack.c.0.s8 %v2187
      %v2189 = vlaneseq
      %v2190 = vshrl.u32 %v2189, 7
      %v2191 = vsub.s32 %v2188, %v2190
      %v2192 = vrot.slane %v2184, %v2191
      %v2194 = vunpack.c.l.s4 1983009808
      %v2195 = vunpack.c.0.s8 %v2194
      %v2196 = vlaneseq
      %v2197 = vshrl.u32 %v2196, 7
      %v2198 = vsub.s32 %v2195, %v2197
      %v2199 = vrot.slane %v2185, %v2198
      %v2200 = vcombine.low %v2176, %v2192
      %v2201 = vcombine.high %v2176, %v2192
      %v2203 = vunpack.c.l.s4 1934713408
      %v2204 = vunpack.c.0.s8 %v2203
      %v2205 = vlaneseq
      %v2206 = vshrl.u32 %v2205, 7
      %v2207 = vsub.s32 %v2204, %v2206
      %v2208 = vrot.slane %v2200, %v2207
      %v2210 = vunpack.c.l.s4 1934713408
      %v2211 = vunpack.c.0.s8 %v2210
      %v2212 = vlaneseq
      %v2213 = vshrl.u32 %v2212, 7
      %v2214 = vsub.s32 %v2211, %v2213
      %v2215 = vrot.slane %v2201, %v2214
      %v2216 = vcombine.low %v2183, %v2199
      %v2217 = vcombine.high %v2183, %v2199
      %v2219 = vunpack.c.l.s4 1934713408
      %v2220 = vunpack.c.0.s8 %v2219
      %v2221 = vlaneseq
      %v2222 = vshrl.u32 %v2221, 7
      %v2223 = vsub.s32 %v2220, %v2222
      %v2224 = vrot.slane %v2216, %v2223
      %v2226 = vunpack.c.l.s4 1934713408
      %v2227 = vunpack.c.0.s8 %v2226
      %v2228 = vlaneseq
      %v2229 = vshrl.u32 %v2228, 7
      %v2230 = vsub.s32 %v2227, %v2229
      %v2231 = vrot.slane %v2217, %v2230
      %v2232 = vcombine.high %v2208, 0.0
      %v2233 = vcombine.high %v2215, 0.0
      %v2234 = vcombine.high %v2224, 0.0
      %v2235 = vcombine.high %v2231, 0.0
      %v2236 = vcombine.low %v2140, %v2147
      %v2238 = vunpack.c.l.s4 1983009808
      %v2239 = vunpack.c.0.s8 %v2238
      %v2240 = vlaneseq
      %v2241 = vshrl.u32 %v2240, 7
      %v2242 = vsub.s32 %v2239, %v2241
      %v2243 = vrot.slane %v2236, %v2242
      %v2244 = vcombine.low %v2164, %v2165
      %v2246 = vunpack.c.l.s4 1983009808
      %v2247 = vunpack.c.0.s8 %v2246
      %v2248 = vlaneseq
      %v2249 = vshrl.u32 %v2248, 7
      %v2250 = vsub.s32 %v2247, %v2249
      %v2251 = vrot.slane %v2244, %v2250
      %v2252 = vcombine.low %v2156, %v2163
      %v2254 = vunpack.c.l.s4 1983009808
      %v2255 = vunpack.c.0.s8 %v2254
      %v2256 = vlaneseq
      %v2257 = vshrl.u32 %v2256, 7
      %v2258 = vsub.s32 %v2255, %v2257
      %v2259 = vrot.slane %v2252, %v2258
      %v2260 = vcombine.low %v2166, %v2167
      %v2262 = vunpack.c.l.s4 1983009808
      %v2263 = vunpack.c.0.s8 %v2262
      %v2264 = vlaneseq
      %v2265 = vshrl.u32 %v2264, 7
      %v2266 = vsub.s32 %v2263, %v2265
      %v2267 = vrot.slane %v2260, %v2266
      %v2268 = vcombine.low %v2243, %v2251
      %v2269 = vcombine.high %v2243, %v2251
      %v2271 = vunpack.c.l.s4 1934713408
      %v2272 = vunpack.c.0.s8 %v2271
      %v2273 = vlaneseq
      %v2274 = vshrl.u32 %v2273, 7
      %v2275 = vsub.s32 %v2272, %v2274
      %v2276 = vrot.slane %v2268, %v2275
      %v2278 = vunpack.c.l.s4 1934713408
      %v2279 = vunpack.c.0.s8 %v2278
      %v2280 = vlaneseq
      %v2281 = vshrl.u32 %v2280, 7
      %v2282 = vsub.s32 %v2279, %v2281
      %v2283 = vrot.slane %v2269, %v2282
      %v2284 = vcombine.low %v2259, %v2267
      %v2285 = vcombine.high %v2259, %v2267
      %v2287 = vunpack.c.l.s4 1934713408
      %v2288 = vunpack.c.0.s8 %v2287
      %v2289 = vlaneseq
      %v2290 = vshrl.u32 %v2289, 7
      %v2291 = vsub.s32 %v2288, %v2290
      %v2292 = vrot.slane %v2284, %v2291
      %v2294 = vunpack.c.l.s4 1934713408
      %v2295 = vunpack.c.0.s8 %v2294
      %v2296 = vlaneseq
      %v2297 = vshrl.u32 %v2296, 7
      %v2298 = vsub.s32 %v2295, %v2297
      %v2299 = vrot.slane %v2285, %v2298
      %v2300 = vcombine.low %v2276, %v2292
      %v2301 = vcombine.high %v2276, %v2292
      %v2302 = vcombine.low %v2283, %v2299
      %v2303 = vcombine.high %v2283, %v2299
      %v2304 = vcombine.low %v2208, %v2215
      %v2306 = vunpack.c.l.s4 1983009808
      %v2307 = vunpack.c.0.s8 %v2306
      %v2308 = vlaneseq
      %v2309 = vshrl.u32 %v2308, 7
      %v2310 = vsub.s32 %v2307, %v2309
      %v2311 = vrot.slane %v2304, %v2310
      %v2312 = vcombine.low %v2232, %v2233
      %v2314 = vunpack.c.l.s4 1983009808
      %v2315 = vunpack.c.0.s8 %v2314
      %v2316 = vlaneseq
      %v2317 = vshrl.u32 %v2316, 7
      %v2318 = vsub.s32 %v2315, %v2317
      %v2319 = vrot.slane %v2312, %v2318
      %v2320 = vcombine.low %v2224, %v2231
      %v2322 = vunpack.c.l.s4 1983009808
      %v2323 = vunpack.c.0.s8 %v2322
      %v2324 = vlaneseq
      %v2325 = vshrl.u32 %v2324, 7
      %v2326 = vsub.s32 %v2323, %v2325
      %v2327 = vrot.slane %v2320, %v2326
      %v2328 = vcombine.low %v2234, %v2235
      %v2330 = vunpack.c.l.s4 1983009808
      %v2331 = vunpack.c.0.s8 %v2330
      %v2332 = vlaneseq
      %v2333 = vshrl.u32 %v2332, 7
      %v2334 = vsub.s32 %v2331, %v2333
      %v2335 = vrot.slane %v2328, %v2334
      %v2336 = vcombine.low %v2311, %v2319
      %v2337 = vcombine.high %v2311, %v2319
      %v2339 = vunpack.c.l.s4 1934713408
      %v2340 = vunpack.c.0.s8 %v2339
      %v2341 = vlaneseq
      %v2342 = vshrl.u32 %v2341, 7
      %v2343 = vsub.s32 %v2340, %v2342
      %v2344 = vrot.slane %v2336, %v2343
      %v2346 = vunpack.c.l.s4 1934713408
      %v2347 = vunpack.c.0.s8 %v2346
      %v2348 = vlaneseq
      %v2349 = vshrl.u32 %v2348, 7
      %v2350 = vsub.s32 %v2347, %v2349
      %v2351 = vrot.slane %v2337, %v2350
      %v2352 = vcombine.low %v2327, %v2335
      %v2353 = vcombine.high %v2327, %v2335
      %v2355 = vunpack.c.l.s4 1934713408
      %v2356 = vunpack.c.0.s8 %v2355
      %v2357 = vlaneseq
      %v2358 = vshrl.u32 %v2357, 7
      %v2359 = vsub.s32 %v2356, %v2358
      %v2360 = vrot.slane %v2352, %v2359
      %v2362 = vunpack.c.l.s4 1934713408
      %v2363 = vunpack.c.0.s8 %v2362
      %v2364 = vlaneseq
      %v2365 = vshrl.u32 %v2364, 7
      %v2366 = vsub.s32 %v2363, %v2365
      %v2367 = vrot.slane %v2353, %v2366
      %v2368 = vcombine.low %v2344, %v2360
      %v2369 = vcombine.high %v2344, %v2360
      %v2370 = vcombine.low %v2351, %v2367
      %v2371 = vcombine.high %v2351, %v2367
      %2374 = vrot.lane.b32.xlu0 %v2301, 32
      %v2375 = vpop.permute.xlu0 %2374
      %2376 = vrot.lane.b32.xlu0 %v2369, 32
      %v2377 = vpop.permute.xlu0 %2376
      %2382 = vrot.lane.b32.xlu0 %v2302, 64
      %v2383 = vpop.permute.xlu0 %2382
      %2384 = vrot.lane.b32.xlu0 %v2370, 64
      %v2385 = vpop.permute.xlu0 %2384
      %2390 = vrot.lane.b32.xlu0 %v2303, 96
      %v2391 = vpop.permute.xlu0 %2390
      %2392 = vrot.lane.b32.xlu0 %v2371, 96
      %v2393 = vpop.permute.xlu0 %2392
      %v2396 = vsel %vm1638, %v2300, %v2375
      %v2397 = vsel %vm1638, %v2368, %v2377
      %vm2398 = vcmask 523264
      %v2399 = vsel %vm2398, %v2396, %v2383
      %v2400 = vsel %vm2398, %v2397, %v2385
      %vm2401 = vcmask 785408
      %v2402 = vsel %vm2401, %v2399, %v2391
      %v2403 = vsel %vm2401, %v2400, %v2393
      %v2404 = vpack.c.bf16 %v2403, %v2402
      %v2405 = vld [vmem:[%s5] sm:$0xf]
      %v2406 = vld [vmem:[%s5 + $0x4] sm:$0xf]
      %v2407 = vld [vmem:[%s5 + $0x8] sm:$0xf]
      %v2408 = vld [vmem:[%s5 + $0xc] sm:$0xf]
      %v2409 = vld [vmem:[%s5 + $0x10] sm:$0xf]
      %v2410 = vld [vmem:[%s5 + $0x14] sm:$0xf]
      %v2411 = vld [vmem:[%s5 + $0x18] sm:$0xf]
      %v2412 = vld [vmem:[%s5 + $0x1c] sm:$0xf]
      %v2413 = vld [vmem:[%s5 + $0x20] sm:$0xf]
      %v2414 = vld [vmem:[%s5 + $0x24] sm:$0xf]
      %v2415 = vld [vmem:[%s5 + $0x28] sm:$0xf]
      %v2416 = vld [vmem:[%s5 + $0x2c] sm:$0xf]
      %v2417 = vld [vmem:[%s5 + $0x30] sm:$0xf]
      %v2418 = vld [vmem:[%s5 + $0x34] sm:$0xf]
      %v2419 = vld [vmem:[%s5 + $0x38] sm:$0xf]
      %v2420 = vld [vmem:[%s5 + $0x3c] sm:$0xf]
      %v2421 = vld [vmem:[%s6] sm:$0x1]
      %v2423 = vlaneseq
      %v2424 = vshrl.u32 %v2423, 7
      %v2425 = vsub.s32 0, %v2424
      %v2426 = vrot.slane %v2421, %v2425
      %v2444 = vunpack.c.l.b16 %v2405
      %v2445 = vunpack.c.l.b16 %v2406
      %v2446 = vunpack.c.l.b16 %v2407
      %v2447 = vunpack.c.l.b16 %v2408
      %v2448 = vunpack.c.l.b16 %v2409
      %v2449 = vunpack.c.l.b16 %v2410
      %v2450 = vunpack.c.l.b16 %v2411
      %v2451 = vunpack.c.l.b16 %v2412
      %v2452 = vunpack.c.l.b16 %v2413
      %v2453 = vunpack.c.l.b16 %v2414
      %v2454 = vunpack.c.l.b16 %v2415
      %v2455 = vunpack.c.l.b16 %v2416
      %v2456 = vunpack.c.l.b16 %v2417
      %v2457 = vunpack.c.l.b16 %v2418
      %v2458 = vunpack.c.l.b16 %v2419
      %v2459 = vunpack.c.l.b16 %v2420
      %v2460 = vpack.c.b16 %v2445, %v2444
      %v2461 = vpack.c.b16 %v2447, %v2446
      %v2462 = vpack.c.b16 %v2449, %v2448
      %v2463 = vpack.c.b16 %v2451, %v2450
      %v2464 = vpack.c.b16 %v2453, %v2452
      %v2465 = vpack.c.b16 %v2455, %v2454
      %v2466 = vpack.c.b16 %v2457, %v2456
      %v2467 = vpack.c.b16 %v2459, %v2458
      %2476 = vmatprep.subr.bf16.mxu0 0
      %2477 = vmatpush1.bf16.msra.mxu0 %v2460
      %2478 = vmatprep.subr.bf16.mxu0 0
      %2479 = vmatpush1.bf16.msra.mxu0 %v2461
      %2480 = vmatprep.subr.bf16.mxu0 0
      %2481 = vmatpush1.bf16.msra.mxu0 %v2462
      %2482 = vmatprep.subr.bf16.mxu0 0
      %2483 = vmatpush1.bf16.msra.mxu0 %v2463
      %2484 = vmatprep.subr.bf16.mxu0 0
      %2485 = vmatpush1.bf16.msra.mxu0 %v2464
      %2486 = vmatprep.subr.bf16.mxu0 0
      %2487 = vmatpush1.bf16.msra.mxu0 %v2465
      %2488 = vmatprep.subr.bf16.mxu0 0
      %2489 = vmatpush1.bf16.msra.mxu0 %v2466
      %2490 = vmatprep.subr.bf16.mxu0 0
      %2491 = vmatpush1.bf16.msra.mxu0 %v2467
      %2492 = vmatprep.subr.bf16.mxu0 0
      %2493 = vmatpush1.bf16.msra.mxu0 0
      %2494 = vmatprep.subr.bf16.mxu0 0
      %2495 = vmatpush1.bf16.msra.mxu0 0
      %2496 = vmatprep.subr.bf16.mxu0 0
      %2497 = vmatpush1.bf16.msra.mxu0 0
      %2498 = vmatprep.subr.bf16.mxu0 0
      %2499 = vmatpush1.bf16.msra.mxu0 0
      %2500 = vmatprep.subr.bf16.mxu0 0
      %2501 = vmatpush1.bf16.msra.mxu0 0
      %2502 = vmatprep.subr.bf16.mxu0 0
      %2503 = vmatpush1.bf16.msra.mxu0 0
      %2504 = vmatprep.subr.bf16.mxu0 0
      %2505 = vmatpush1.bf16.msra.mxu0 0
      %2506 = vmatprep.subr.bf16.mxu0 0
      %2507 = vmatpush1.bf16.msra.mxu0 0
      %2508 = vmatprep.mubr.bf16.mxu0 0
      %2509 = vmatmul.mubr.bf16.gmra.mrb[0].mxu0 %v2404
      %v2510 = vpop.f32.mrb[0].mxu0
      %v2511 = vadd.f32 %v2426, %v2510
      %v2512 = vpop.f32.mrb[0].mxu0
      %v2513 = vpop.f32.mrb[0].mxu0
      %v2514 = vadd.f32 %v2426, %v2513
      %v2515 = vpop.f32.mrb[0].mxu0
      %2516 = vdwg.mxu0
      %v2517 = vadd.f32 %v444, %v2511
      %v2518 = vadd.f32 %v445, %v2514
      %v2519 = vld [vmem:[%s7] sm:$0x1]
      %v2520 = vld [vmem:[%s8] sm:$0x1]
      %2521 = vadd.xlane.f32.xlu0 %v2517
      %v2522 = vpop.xlane.xlu0 %2521
      %2523 = vadd.xlane.f32.xlu0 %v2518
      %v2524 = vpop.xlane.xlu0 %2523
      %v2525 = vmul.f32 %v2517, %v2517
      %v2526 = vmul.f32 %v2518, %v2518
      %2527 = vadd.xlane.f32.xlu0 %v2525
      %v2528 = vpop.xlane.xlu0 %2527
      %2529 = vadd.xlane.f32.xlu0 %v2526
      %v2530 = vpop.xlane.xlu0 %2529
      %v2531 = vmul.f32 %v2522, 0.03125
      %v2532 = vmul.f32 %v2524, 0.03125
      %v2533 = vmul.f32 %v2528, 0.03125
      %v2534 = vmul.f32 %v2530, 0.03125
      %v2535 = vmul.f32 %v2531, %v2531
      %v2536 = vmul.f32 %v2532, %v2532
      %v2537 = vsub.f32 %v2533, %v2535
      %v2538 = vsub.f32 %v2534, %v2536
      %v2539 = vsub.f32 %v2517, %v2531
      %v2540 = vsub.f32 %v2518, %v2532
      %v2541 = vadd.f32 %v2537, 1e-05
      %v2542 = vadd.f32 %v2538, 1e-05
      %v2543 = vrsqrt.pop %v2541
      %v2544 = vrsqrt.pop %v2542
      %v2545 = vmul.f32 %v2539, %v2543
      %v2546 = vmul.f32 %v2540, %v2544
      %v2548 = vlaneseq
      %v2549 = vshrl.u32 %v2548, 7
      %v2550 = vsub.s32 0, %v2549
      %v2551 = vrot.slane %v2519, %v2550
      %v2553 = vmul.f32 %v2545, %v2551
      %v2554 = vmul.f32 %v2546, %v2551
      %v2556 = vlaneseq
      %v2557 = vshrl.u32 %v2556, 7
      %v2558 = vsub.s32 0, %v2557
      %v2559 = vrot.slane %v2520, %v2558
      %v2561 = vadd.f32 %v2553, %v2559
      %v2562 = vadd.f32 %v2554, %v2559
      %v2563 = vpack.c.bf16 %v2562, %v2561
      %v2564 = vld [vmem:[%s9] sm:$0xf]
      %v2565 = vld [vmem:[%s9 + $0x4] sm:$0xf]
      %v2566 = vld [vmem:[%s9 + $0x8] sm:$0xf]
      %v2567 = vld [vmem:[%s9 + $0xc] sm:$0xf]
      %v2568 = vld [vmem:[%s9 + $0x10] sm:$0xf]
      %v2569 = vld [vmem:[%s9 + $0x14] sm:$0xf]
      %v2570 = vld [vmem:[%s9 + $0x18] sm:$0xf]
      %v2571 = vld [vmem:[%s9 + $0x1c] sm:$0xf]
      %v2572 = vld [vmem:[%s9 + $0x20] sm:$0xf]
      %v2573 = vld [vmem:[%s9 + $0x24] sm:$0xf]
      %v2574 = vld [vmem:[%s9 + $0x28] sm:$0xf]
      %v2575 = vld [vmem:[%s9 + $0x2c] sm:$0xf]
      %v2576 = vld [vmem:[%s9 + $0x30] sm:$0xf]
      %v2577 = vld [vmem:[%s9 + $0x34] sm:$0xf]
      %v2578 = vld [vmem:[%s9 + $0x38] sm:$0xf]
      %v2579 = vld [vmem:[%s9 + $0x3c] sm:$0xf]
      %v2580 = vld [vmem:[%s10] sm:$0x1]
      %v2582 = vlaneseq
      %v2583 = vshrl.u32 %v2582, 7
      %v2584 = vsub.s32 0, %v2583
      %v2585 = vrot.slane %v2580, %v2584
      %v2603 = vunpack.c.l.b16 %v2564
      %v2604 = vunpack.c.l.b16 %v2565
      %v2605 = vunpack.c.l.b16 %v2566
      %v2606 = vunpack.c.l.b16 %v2567
      %v2607 = vunpack.c.l.b16 %v2568
      %v2608 = vunpack.c.l.b16 %v2569
      %v2609 = vunpack.c.l.b16 %v2570
      %v2610 = vunpack.c.l.b16 %v2571
      %v2611 = vunpack.c.l.b16 %v2572
      %v2612 = vunpack.c.l.b16 %v2573
      %v2613 = vunpack.c.l.b16 %v2574
      %v2614 = vunpack.c.l.b16 %v2575
      %v2615 = vunpack.c.l.b16 %v2576
      %v2616 = vunpack.c.l.b16 %v2577
      %v2617 = vunpack.c.l.b16 %v2578
      %v2618 = vunpack.c.l.b16 %v2579
      %v2619 = vpack.c.b16 %v2604, %v2603
      %v2620 = vpack.c.b16 %v2606, %v2605
      %v2621 = vpack.c.b16 %v2608, %v2607
      %v2622 = vpack.c.b16 %v2610, %v2609
      %v2623 = vpack.c.b16 %v2612, %v2611
      %v2624 = vpack.c.b16 %v2614, %v2613
      %v2625 = vpack.c.b16 %v2616, %v2615
      %v2626 = vpack.c.b16 %v2618, %v2617
      %2635 = vmatprep.subr.bf16.mxu0 0
      %2636 = vmatpush1.bf16.msra.mxu0 %v2619
      %2637 = vmatprep.subr.bf16.mxu0 0
      %2638 = vmatpush1.bf16.msra.mxu0 %v2620
      %2639 = vmatprep.subr.bf16.mxu0 0
      %2640 = vmatpush1.bf16.msra.mxu0 %v2621
      %2641 = vmatprep.subr.bf16.mxu0 0
      %2642 = vmatpush1.bf16.msra.mxu0 %v2622
      %2643 = vmatprep.subr.bf16.mxu0 0
      %2644 = vmatpush1.bf16.msra.mxu0 %v2623
      %2645 = vmatprep.subr.bf16.mxu0 0
      %2646 = vmatpush1.bf16.msra.mxu0 %v2624
      %2647 = vmatprep.subr.bf16.mxu0 0
      %2648 = vmatpush1.bf16.msra.mxu0 %v2625
      %2649 = vmatprep.subr.bf16.mxu0 0
      %2650 = vmatpush1.bf16.msra.mxu0 %v2626
      %2651 = vmatprep.subr.bf16.mxu0 0
      %2652 = vmatpush1.bf16.msra.mxu0 0
      %2653 = vmatprep.subr.bf16.mxu0 0
      %2654 = vmatpush1.bf16.msra.mxu0 0
      %2655 = vmatprep.subr.bf16.mxu0 0
      %2656 = vmatpush1.bf16.msra.mxu0 0
      %2657 = vmatprep.subr.bf16.mxu0 0
      %2658 = vmatpush1.bf16.msra.mxu0 0
      %2659 = vmatprep.subr.bf16.mxu0 0
      %2660 = vmatpush1.bf16.msra.mxu0 0
      %2661 = vmatprep.subr.bf16.mxu0 0
      %2662 = vmatpush1.bf16.msra.mxu0 0
      %2663 = vmatprep.subr.bf16.mxu0 0
      %2664 = vmatpush1.bf16.msra.mxu0 0
      %2665 = vmatprep.subr.bf16.mxu0 0
      %2666 = vmatpush1.bf16.msra.mxu0 0
      %2667 = vmatprep.mubr.bf16.mxu0 0
      %2668 = vmatmul.mubr.bf16.gmra.mrb[0].mxu0 %v2563
      %v2669 = vpop.f32.mrb[0].mxu0
      %v2670 = vadd.f32 %v2585, %v2669
      %v2671 = vpop.f32.mrb[0].mxu0
      %v2672 = vpop.f32.mrb[0].mxu0
      %v2673 = vadd.f32 %v2585, %v2672
      %v2674 = vpop.f32.mrb[0].mxu0
      %2675 = vdwg.mxu0
      %v2676 = vmul.f32 %v2670, 0.5
      %v2677 = vmul.f32 %v2673, 0.5
      %v2678 = vmul.f32 %v2670, 0.044715
      %v2679 = vmul.f32 %v2673, 0.044715
      %v2680 = vmul.f32 %v2678, %v2670
      %v2681 = vmul.f32 %v2679, %v2673
      %v2682 = vmul.f32 %v2680, %v2670
      %v2683 = vmul.f32 %v2681, %v2673
      %v2684 = vadd.f32 %v2670, %v2682
      %v2685 = vadd.f32 %v2673, %v2683
      %v2686 = vmul.f32 %v2684, 0.7978846
      %v2687 = vmul.f32 %v2685, 0.7978846
      %v2688 = vtanh.pop %v2686
      %v2689 = vtanh.pop %v2687
      %v2690 = vadd.f32 %v2688, 1.0
      %v2691 = vadd.f32 %v2689, 1.0
      %v2692 = vmul.f32 %v2676, %v2690
      %v2693 = vmul.f32 %v2677, %v2691
      %v2694 = vpack.c.bf16 %v2693, %v2692
      %v2695 = vld [vmem:[%s11] sm:$0xf]
      %v2696 = vld [vmem:[%s11 + $0x4] sm:$0xf]
      %v2697 = vld [vmem:[%s11 + $0x8] sm:$0xf]
      %v2698 = vld [vmem:[%s11 + $0xc] sm:$0xf]
      %v2699 = vld [vmem:[%s11 + $0x10] sm:$0xf]
      %v2700 = vld [vmem:[%s11 + $0x14] sm:$0xf]
      %v2701 = vld [vmem:[%s11 + $0x18] sm:$0xf]
      %v2702 = vld [vmem:[%s11 + $0x1c] sm:$0xf]
      %v2703 = vld [vmem:[%s11 + $0x20] sm:$0xf]
      %v2704 = vld [vmem:[%s11 + $0x24] sm:$0xf]
      %v2705 = vld [vmem:[%s11 + $0x28] sm:$0xf]
      %v2706 = vld [vmem:[%s11 + $0x2c] sm:$0xf]
      %v2707 = vld [vmem:[%s11 + $0x30] sm:$0xf]
      %v2708 = vld [vmem:[%s11 + $0x34] sm:$0xf]
      %v2709 = vld [vmem:[%s11 + $0x38] sm:$0xf]
      %v2710 = vld [vmem:[%s11 + $0x3c] sm:$0xf]
      %v2711 = vld [vmem:[%s12] sm:$0x1]
      %v2713 = vlaneseq
      %v2714 = vshrl.u32 %v2713, 7
      %v2715 = vsub.s32 0, %v2714
      %v2716 = vrot.slane %v2711, %v2715
      %v2734 = vunpack.c.l.b16 %v2695
      %v2735 = vunpack.c.l.b16 %v2696
      %v2736 = vunpack.c.l.b16 %v2697
      %v2737 = vunpack.c.l.b16 %v2698
      %v2738 = vunpack.c.l.b16 %v2699
      %v2739 = vunpack.c.l.b16 %v2700
      %v2740 = vunpack.c.l.b16 %v2701
      %v2741 = vunpack.c.l.b16 %v2702
      %v2742 = vunpack.c.l.b16 %v2703
      %v2743 = vunpack.c.l.b16 %v2704
      %v2744 = vunpack.c.l.b16 %v2705
      %v2745 = vunpack.c.l.b16 %v2706
      %v2746 = vunpack.c.l.b16 %v2707
      %v2747 = vunpack.c.l.b16 %v2708
      %v2748 = vunpack.c.l.b16 %v2709
      %v2749 = vunpack.c.l.b16 %v2710
      %v2750 = vpack.c.b16 %v2735, %v2734
      %v2751 = vpack.c.b16 %v2737, %v2736
      %v2752 = vpack.c.b16 %v2739, %v2738
      %v2753 = vpack.c.b16 %v2741, %v2740
      %v2754 = vpack.c.b16 %v2743, %v2742
      %v2755 = vpack.c.b16 %v2745, %v2744
      %v2756 = vpack.c.b16 %v2747, %v2746
      %v2757 = vpack.c.b16 %v2749, %v2748
      %2766 = vmatprep.subr.bf16.mxu0 0
      %2767 = vmatpush1.bf16.msra.mxu0 %v2750
      %2768 = vmatprep.subr.bf16.mxu0 0
      %2769 = vmatpush1.bf16.msra.mxu0 %v2751
      %2770 = vmatprep.subr.bf16.mxu0 0
      %2771 = vmatpush1.bf16.msra.mxu0 %v2752
      %2772 = vmatprep.subr.bf16.mxu0 0
      %2773 = vmatpush1.bf16.msra.mxu0 %v2753
      %2774 = vmatprep.subr.bf16.mxu0 0
      %2775 = vmatpush1.bf16.msra.mxu0 %v2754
      %2776 = vmatprep.subr.bf16.mxu0 0
      %2777 = vmatpush1.bf16.msra.mxu0 %v2755
      %2778 = vmatprep.subr.bf16.mxu0 0
      %2779 = vmatpush1.bf16.msra.mxu0 %v2756
      %2780 = vmatprep.subr.bf16.mxu0 0
      %2781 = vmatpush1.bf16.msra.mxu0 %v2757
      %2782 = vmatprep.subr.bf16.mxu0 0
      %2783 = vmatpush1.bf16.msra.mxu0 0
      %2784 = vmatprep.subr.bf16.mxu0 0
      %2785 = vmatpush1.bf16.msra.mxu0 0
      %2786 = vmatprep.subr.bf16.mxu0 0
      %2787 = vmatpush1.bf16.msra.mxu0 0
      %2788 = vmatprep.subr.bf16.mxu0 0
      %2789 = vmatpush1.bf16.msra.mxu0 0
      %2790 = vmatprep.subr.bf16.mxu0 0
      %2791 = vmatpush1.bf16.msra.mxu0 0
      %2792 = vmatprep.subr.bf16.mxu0 0
      %2793 = vmatpush1.bf16.msra.mxu0 0
      %2794 = vmatprep.subr.bf16.mxu0 0
      %2795 = vmatpush1.bf16.msra.mxu0 0
      %2796 = vmatprep.subr.bf16.mxu0 0
      %2797 = vmatpush1.bf16.msra.mxu0 0
      %2798 = vmatprep.mubr.bf16.mxu0 0
      %2799 = vmatmul.mubr.bf16.gmra.mrb[0].mxu0 %v2694
      %v2800 = vpop.f32.mrb[0].mxu0
      %v2801 = vadd.f32 %v2716, %v2800
      %v2802 = vpop.f32.mrb[0].mxu0
      %v2803 = vpop.f32.mrb[0].mxu0
      %v2804 = vadd.f32 %v2716, %v2803
      %v2805 = vpop.f32.mrb[0].mxu0
      %2806 = vdwg.mxu0
      %v2807 = vadd.f32 %v2517, %v2801
      %v2808 = vadd.f32 %v2518, %v2804
      %v2809 = vpack.c.bf16 %v2808, %v2807
      %v2811 = vunpack.c.l.b16 %v2809
      %v2812 = vunpack.c.h.b16 %v2809
      %v2813 = vpack.c.b16 %v2811, %v2811
      %v2814 = vpack.c.b16 %v2812, %v2812
      %2817 = vst [vmem:[%s440] sm:$0xf] %v2813
      %2818 = vst [vmem:[%s440 + $0x4] sm:$0xf] %v2814
      %p2819 = scmp.lt.s32.totalorder %s24, 1
      %s2820 = scalar_select %p2819, %s24, 1
      %s2821 = smul.addr %s2820, 2
      %s2822 = smul.addr %s2821, 4
      %s2823 = scalar_lea.vmem %s13, %s2822
      // Predicated region
      $region73: #{forward.5} parent=71 // pred_check
        %p2824 = pneg %p320
      $region74: #{forward.5} parent=71 // pred_check_branch
        %2826 = sbr.rel (%p2824) target = $region76
      $region75: #{forward.5} parent=71 // pred_region
        _
      $region76: #{forward.5} parent=71 // pred_fallthru
        _
    $region72: #{forward.5} parent=5 // pred_fallthru
      _
    %p2827 = scmp.le.s32.totalorder 2, %s19
    // Predicated region
    $region77: #{forward.5} parent=5 // pred_check
      %p2828 = pneg %p2827
    $region78: #{forward.5} parent=5 // pred_check_branch
      %2830 = sbr.rel (%p2828) target = $region80
    $region79: #{forward.5} parent=5 // pred_region
      %s2831 = ssub.s32 %s19, 2
      // Predicated region
      $region81: #{forward.5} parent=79 // pred_check
        %p2832 = pneg %p326
      $region82: #{forward.5} parent=79 // pred_check_branch
        %2834 = sbr.rel (%p2832) target = $region84
      $region83: #{forward.5} parent=79 // pred_region
        %p2835 = scmp.lt.s32.totalorder %s25, 1
        %s2836 = scalar_select %p2835, %s25, 1
        %s2837 = smul.addr %s2836, 2
        %s2838 = smul.addr %s2837, 4
        %s2839 = scalar_lea.vmem %s13, %s2838
      $region84: #{forward.5} parent=79 // pred_fallthru
        _
    $region80: #{forward.5} parent=5 // pred_fallthru
      _
  $region6: #{forward.5} parent=0 // loop_footer
    %s23 = sadd.s32 1, %s19
  $region7: #{forward.5} parent=0 // loop_footer_branch
    %18 = sbr.rel target = $region3
  $region8: #{forward.5} parent=0 // loop_exit
    _

</llo_original>
